<compile_context>
chip_gen: v6e
topology: v6e:2x2x1
jax: 0.10.0
libtpu: 0.0.40
codegen_flags: <defaults>
</compile_context>

<pallas_src>
import functools
import math

import jax
import jax.numpy as jnp
from jax import lax
from jax.experimental import pallas as pl
from jax.experimental.pallas import tpu as pltpu


# ----------------------------------------------------------------------------
# Kernel: one grid step == one batch element.
# ----------------------------------------------------------------------------
def _bert_attention_kernel(x_ref, mask_ref, wqkv_ref, bqkv_ref, wo_ref, bo_ref,
                           gamma_ref, beta_ref, out_ref,
                           *, num_heads, head_dim, ln_eps):
    x = x_ref[0]                                  # (S, H) float32
    mask = mask_ref[0]                            # (1, S) additive attention mask

    hidden = num_heads * head_dim
    scale = 1.0 / math.sqrt(head_dim)

    # Fused QKV projection: single MXU matmul, lane-dense (S, 3H) output.
    qkv = jnp.dot(x, wqkv_ref[...], preferred_element_type=jnp.float32) + bqkv_ref[...]

    # Per-head attention, statically unrolled (head slices are static lane offsets).
    ctx_heads = []
    for h in range(num_heads):
        lo = h * head_dim
        q_h = qkv[:, lo:lo + head_dim]                            # (S, d)
        k_h = qkv[:, hidden + lo:hidden + lo + head_dim]          # (S, d)
        v_h = qkv[:, 2 * hidden + lo:2 * hidden + lo + head_dim]  # (S, d)

        # scores = q k^T / sqrt(d) + mask
        s = jnp.dot(q_h, k_h.T, preferred_element_type=jnp.float32)
        s = s * scale + mask                                      # (S, S) + (1, S)

        # numerically-stable softmax (exp on EUP, exact normalization)
        s_max = jnp.max(s, axis=-1, keepdims=True)
        p = jnp.exp(s - s_max)
        p = p / jnp.sum(p, axis=-1, keepdims=True)

        ctx_heads.append(jnp.dot(p, v_h, preferred_element_type=jnp.float32))

    ctx = jnp.concatenate(ctx_heads, axis=-1)                     # (S, H)

    # Output dense + residual + LayerNorm (dropouts are identity in eval mode).
    y = jnp.dot(ctx, wo_ref[...], preferred_element_type=jnp.float32) + bo_ref[...] + x
    mean = jnp.mean(y, axis=-1, keepdims=True)
    yc = y - mean
    var = jnp.mean(yc * yc, axis=-1, keepdims=True)
    inv = lax.rsqrt(var + ln_eps)
    out_ref[0] = (yc * inv * gamma_ref[...] + beta_ref[...]).astype(out_ref.dtype)


# ----------------------------------------------------------------------------
# Wrapper
# ----------------------------------------------------------------------------
def bert_attention_forward(hidden_states, attention_mask, params, *,
                           num_heads, ln_eps=1e-12):
    """hidden_states: (B, S, H) f32.  attention_mask: (B, 1, S) additive (0 / -1e4).
    Returns the attention output (B, S, H) (== ProteinBertAttention.forward(...)[0])."""
    wqkv, bqkv, wo_t, bo, gamma, beta = params
    B, S, H = hidden_states.shape
    assert H % num_heads == 0
    head_dim = H // num_heads

    kernel = functools.partial(_bert_attention_kernel,
                               num_heads=num_heads, head_dim=head_dim, ln_eps=ln_eps)

    grid_spec = pltpu.PrefetchScalarGridSpec(
        num_scalar_prefetch=0,
        grid=(B,),
        in_specs=[
            pl.BlockSpec((1, S, H), lambda b: (b, 0, 0)),      # hidden_states[b]
            pl.BlockSpec((1, 1, S), lambda b: (b, 0, 0)),      # attention_mask[b]
            pl.BlockSpec((H, 3 * H), lambda b: (0, 0)),        # fused [Wq|Wk|Wv]^T (resident)
            pl.BlockSpec((1, 3 * H), lambda b: (0, 0)),        # fused QKV bias
            pl.BlockSpec((H, H), lambda b: (0, 0)),            # Wo^T (resident)
            pl.BlockSpec((1, H), lambda b: (0, 0)),            # bo
            pl.BlockSpec((1, H), lambda b: (0, 0)),            # LayerNorm gamma
            pl.BlockSpec((1, H), lambda b: (0, 0)),            # LayerNorm beta
        ],
        out_specs=pl.BlockSpec((1, S, H), lambda b: (b, 0, 0)),
    )

    return pl.pallas_call(
        kernel,
        grid_spec=grid_spec,
        out_shape=jax.ShapeDtypeStruct((B, S, H), jnp.float32),
        compiler_params=pltpu.CompilerParams(
            dimension_semantics=("parallel",),          # independent batches -> megacore
            vmem_limit_bytes=32 * 1024 * 1024,          # explicit, fits v7x's smaller VMEM
        ),
    )(hidden_states.astype(jnp.float32), attention_mask.astype(jnp.float32),
      wqkv, bqkv, wo_t, bo, gamma, beta)


# ----------------------------------------------------------------------------
# Deterministic parameter init (PyTorch nn.Linear layout (out, in), then
# pre-transposed / fused for the kernel's  x @ W  convention).
# ----------------------------------------------------------------------------
def init_params(key, hidden_size):
    ks = jax.random.split(key, 10)
    std = 0.02

    def lin(kw, kb, out_f, in_f):
        w = jax.random.normal(kw, (out_f, in_f), jnp.float32) * std
        b = jax.random.normal(kb, (out_f,), jnp.float32) * std
        return w, b

    wq, bq = lin(ks[0], ks[1], hidden_size, hidden_size)
    wk, bk = lin(ks[2], ks[3], hidden_size, hidden_size)
    wv, bv = lin(ks[4], ks[5], hidden_size, hidden_size)
    wo, bo = lin(ks[6], ks[7], hidden_size, hidden_size)
    gamma = 1.0 + 0.1 * jax.random.normal(ks[8], (hidden_size,), jnp.float32)
    beta = 0.1 * jax.random.normal(ks[9], (hidden_size,), jnp.float32)

    wqkv = jnp.concatenate([wq.T, wk.T, wv.T], axis=1)             # (H, 3H)
    bqkv = jnp.concatenate([bq, bk, bv]).reshape(1, -1)            # (1, 3H)
    return (wqkv, bqkv, wo.T, bo.reshape(1, -1),
            gamma.reshape(1, -1), beta.reshape(1, -1))


# ----------------------------------------------------------------------------
# Pure-JAX reference mirroring the PyTorch module (eval mode).
# ----------------------------------------------------------------------------
def bert_attention_reference(x, mask, params, num_heads, ln_eps=1e-12):
    wqkv, bqkv, wo_t, bo, gamma, beta = params
    B, S, H = x.shape
    hd = H // num_heads

    qkv = x @ wqkv + bqkv
    q, k, v = jnp.split(qkv, 3, axis=-1)

    def heads(t):
        return t.reshape(B, S, num_heads, hd).transpose(0, 2, 1, 3)

    q, k, v = heads(q), heads(k), heads(v)
    scores = jnp.einsum('bhqd,bhkd->bhqk', q, k) / math.sqrt(hd)
    scores = scores + mask[:, :, None, :]              # (B,1,1,S) additive
    probs = jax.nn.softmax(scores, axis=-1)
    ctx = jnp.einsum('bhqk,bhkd->bhqd', probs, v)
    ctx = ctx.transpose(0, 2, 1, 3).reshape(B, S, H)

    y = ctx @ wo_t + bo + x
    mean = jnp.mean(y, axis=-1, keepdims=True)
    var = jnp.mean((y - mean) ** 2, axis=-1, keepdims=True)
    return (y - mean) * lax.rsqrt(var + ln_eps) * gamma + beta


if __name__ == "__main__":
    B, S, HIDDEN, NUM_HEADS = 2, 128, 128, 4          # lane-dense small config

    key = jax.random.PRNGKey(0)
    kx, km, kp = jax.random.split(key, 3)

    hidden_states = jax.random.normal(kx, (B, S, HIDDEN), jnp.float32)
    # BERT-style extended additive attention mask: 0 for valid keys, -10000 for padding.
    key_valid = jax.random.uniform(km, (B, 1, S)) > 0.1
    attention_mask = jnp.where(key_valid, 0.0, -10000.0).astype(jnp.float32)

    params = init_params(kp, HIDDEN)

    out = bert_attention_forward(hidden_states, attention_mask, params,
                                 num_heads=NUM_HEADS)
    jax.block_until_ready(out)

    ref = bert_attention_reference(hidden_states, attention_mask, params, NUM_HEADS)
    assert out.shape == (B, S, HIDDEN)
    max_err = jnp.max(jnp.abs(out - ref))
    assert jnp.allclose(out, ref, atol=2e-3, rtol=2e-3), f"mismatch, max abs err={max_err}"

    print("KERNEL_OK")
</pallas_src>

<mosaic_0001>
module attributes {stable_mosaic.version = 11 : i64} {
  func.func @_bert_attention_kernel(%arg0: i32, %arg1: memref<1x128x128xf32, #tpu.memory_space<vmem>>, %arg2: memref<1x1x128xf32, #tpu.memory_space<vmem>>, %arg3: memref<128x384xf32, #tpu.memory_space<vmem>>, %arg4: memref<1x384xf32, #tpu.memory_space<vmem>>, %arg5: memref<128x128xf32, #tpu.memory_space<vmem>>, %arg6: memref<1x128xf32, #tpu.memory_space<vmem>>, %arg7: memref<1x128xf32, #tpu.memory_space<vmem>>, %arg8: memref<1x128xf32, #tpu.memory_space<vmem>>, %arg9: memref<1x128x128xf32, #tpu.memory_space<vmem>>) attributes {dimension_semantics = [#tpu.dimension_semantics<parallel>], iteration_bounds = array<i64: 2>, scalar_prefetch = 0 : i64, scratch_operands = 0 : i64, tpu.core_type = #tpu.core_type<tc>, window_params = [{transform_indices = @transform_0, window_bounds = array<i64: 1, 128, 128>}, {transform_indices = @transform_1, window_bounds = array<i64: 1, 1, 128>}, {pipeline_mode = #tpu.pipeline_mode<synchronous>, transform_indices = @transform_2, window_bounds = array<i64: 128, 384>}, {pipeline_mode = #tpu.pipeline_mode<synchronous>, transform_indices = @transform_3, window_bounds = array<i64: 1, 384>}, {pipeline_mode = #tpu.pipeline_mode<synchronous>, transform_indices = @transform_4, window_bounds = array<i64: 128, 128>}, {pipeline_mode = #tpu.pipeline_mode<synchronous>, transform_indices = @transform_5, window_bounds = array<i64: 1, 128>}, {pipeline_mode = #tpu.pipeline_mode<synchronous>, transform_indices = @transform_6, window_bounds = array<i64: 1, 128>}, {pipeline_mode = #tpu.pipeline_mode<synchronous>, transform_indices = @transform_7, window_bounds = array<i64: 1, 128>}, {transform_indices = @transform_8, window_bounds = array<i64: 1, 128, 128>}]} {
    %c0 = arith.constant 0 : index
    %c0_0 = arith.constant 0 : index
    %c0_1 = arith.constant 0 : index
    %0 = vector.load %arg1[%c0, %c0_0, %c0_1] : memref<1x128x128xf32, #tpu.memory_space<vmem>>, vector<1x128x128xf32>
    %1 = vector.shape_cast %0 : vector<1x128x128xf32> to vector<128x128xf32>
    %c0_2 = arith.constant 0 : index
    %c0_3 = arith.constant 0 : index
    %c0_4 = arith.constant 0 : index
    %2 = vector.load %arg2[%c0_2, %c0_3, %c0_4] : memref<1x1x128xf32, #tpu.memory_space<vmem>>, vector<1x1x128xf32>
    %3 = vector.shape_cast %2 : vector<1x1x128xf32> to vector<1x128xf32>
    %c0_5 = arith.constant 0 : index
    %c0_6 = arith.constant 0 : index
    %4 = vector.load %arg3[%c0_5, %c0_6] : memref<128x384xf32, #tpu.memory_space<vmem>>, vector<128x384xf32>
    %cst = arith.constant dense<0.000000e+00> : vector<128x384xf32>
    %5 = tpu.matmul %1, %4, %cst {dimension_numbers = #tpu.dot_dimension_numbers<[1], [0], [0], [1], [0, 0, 1, 1], [], []>} : vector<128x128xf32>, vector<128x384xf32>, vector<128x384xf32> -> vector<128x384xf32>
    %c0_7 = arith.constant 0 : index
    %c0_8 = arith.constant 0 : index
    %6 = vector.load %arg4[%c0_7, %c0_8] : memref<1x384xf32, #tpu.memory_space<vmem>>, vector<1x384xf32>
    %7 = vector.broadcast %6 : vector<1x384xf32> to vector<128x384xf32>
    %8 = arith.addf %5, %7 : vector<128x384xf32>
    %9 = vector.extract_strided_slice %8 {offsets = [0, 0], sizes = [128, 32], strides = [1, 1]} : vector<128x384xf32> to vector<128x32xf32>
    %10 = vector.extract_strided_slice %8 {offsets = [0, 128], sizes = [128, 32], strides = [1, 1]} : vector<128x384xf32> to vector<128x32xf32>
    %11 = vector.extract_strided_slice %8 {offsets = [0, 256], sizes = [128, 32], strides = [1, 1]} : vector<128x384xf32> to vector<128x32xf32>
    %12 = tpu.transpose %10, [1, 0] : vector<128x32xf32> -> vector<32x128xf32>
    %cst_9 = arith.constant dense<0.000000e+00> : vector<128x128xf32>
    %13 = tpu.matmul %9, %12, %cst_9 {dimension_numbers = #tpu.dot_dimension_numbers<[1], [0], [0], [1], [0, 0, 1, 1], [], []>} : vector<128x32xf32>, vector<32x128xf32>, vector<128x128xf32> -> vector<128x128xf32>
    %cst_10 = arith.constant 0.176776692 : f32
    %14 = vector.broadcast %cst_10 : f32 to vector<128x128xf32>
    %15 = arith.mulf %13, %14 : vector<128x128xf32>
    %16 = vector.broadcast %3 : vector<1x128xf32> to vector<128x128xf32>
    %17 = arith.addf %15, %16 : vector<128x128xf32>
    %cst_11 = arith.constant dense<0xFF800000> : vector<128xf32>
    %18 = vector.multi_reduction <maximumf>, %17, %cst_11 [1] : vector<128x128xf32> to vector<128xf32>
    %19 = vector.shape_cast %18 : vector<128xf32> to vector<128x1xf32>
    %20 = vector.broadcast %19 : vector<128x1xf32> to vector<128x128xf32>
    %21 = arith.subf %17, %20 : vector<128x128xf32>
    %22 = math.exp %21 : vector<128x128xf32>
    %cst_12 = arith.constant dense<0.000000e+00> : vector<128xf32>
    %23 = vector.multi_reduction <add>, %22, %cst_12 [1] : vector<128x128xf32> to vector<128xf32>
    %24 = vector.shape_cast %23 : vector<128xf32> to vector<128x1xf32>
    %25 = vector.broadcast %24 : vector<128x1xf32> to vector<128x128xf32>
    %26 = arith.divf %22, %25 : vector<128x128xf32>
    %cst_13 = arith.constant dense<0.000000e+00> : vector<128x32xf32>
    %27 = tpu.matmul %26, %11, %cst_13 {dimension_numbers = #tpu.dot_dimension_numbers<[1], [0], [0], [1], [0, 0, 1, 1], [], []>} : vector<128x128xf32>, vector<128x32xf32>, vector<128x32xf32> -> vector<128x32xf32>
    %28 = vector.extract_strided_slice %8 {offsets = [0, 32], sizes = [128, 32], strides = [1, 1]} : vector<128x384xf32> to vector<128x32xf32>
    %29 = vector.extract_strided_slice %8 {offsets = [0, 160], sizes = [128, 32], strides = [1, 1]} : vector<128x384xf32> to vector<128x32xf32>
    %30 = vector.extract_strided_slice %8 {offsets = [0, 288], sizes = [128, 32], strides = [1, 1]} : vector<128x384xf32> to vector<128x32xf32>
    %31 = tpu.transpose %29, [1, 0] : vector<128x32xf32> -> vector<32x128xf32>
    %cst_14 = arith.constant dense<0.000000e+00> : vector<128x128xf32>
    %32 = tpu.matmul %28, %31, %cst_14 {dimension_numbers = #tpu.dot_dimension_numbers<[1], [0], [0], [1], [0, 0, 1, 1], [], []>} : vector<128x32xf32>, vector<32x128xf32>, vector<128x128xf32> -> vector<128x128xf32>
    %cst_15 = arith.constant 0.176776692 : f32
    %33 = vector.broadcast %cst_15 : f32 to vector<128x128xf32>
    %34 = arith.mulf %32, %33 : vector<128x128xf32>
    %35 = vector.broadcast %3 : vector<1x128xf32> to vector<128x128xf32>
    %36 = arith.addf %34, %35 : vector<128x128xf32>
    %cst_16 = arith.constant dense<0xFF800000> : vector<128xf32>
    %37 = vector.multi_reduction <maximumf>, %36, %cst_16 [1] : vector<128x128xf32> to vector<128xf32>
    %38 = vector.shape_cast %37 : vector<128xf32> to vector<128x1xf32>
    %39 = vector.broadcast %38 : vector<128x1xf32> to vector<128x128xf32>
    %40 = arith.subf %36, %39 : vector<128x128xf32>
    %41 = math.exp %40 : vector<128x128xf32>
    %cst_17 = arith.constant dense<0.000000e+00> : vector<128xf32>
    %42 = vector.multi_reduction <add>, %41, %cst_17 [1] : vector<128x128xf32> to vector<128xf32>
    %43 = vector.shape_cast %42 : vector<128xf32> to vector<128x1xf32>
    %44 = vector.broadcast %43 : vector<128x1xf32> to vector<128x128xf32>
    %45 = arith.divf %41, %44 : vector<128x128xf32>
    %cst_18 = arith.constant dense<0.000000e+00> : vector<128x32xf32>
    %46 = tpu.matmul %45, %30, %cst_18 {dimension_numbers = #tpu.dot_dimension_numbers<[1], [0], [0], [1], [0, 0, 1, 1], [], []>} : vector<128x128xf32>, vector<128x32xf32>, vector<128x32xf32> -> vector<128x32xf32>
    %47 = vector.extract_strided_slice %8 {offsets = [0, 64], sizes = [128, 32], strides = [1, 1]} : vector<128x384xf32> to vector<128x32xf32>
    %48 = vector.extract_strided_slice %8 {offsets = [0, 192], sizes = [128, 32], strides = [1, 1]} : vector<128x384xf32> to vector<128x32xf32>
    %49 = vector.extract_strided_slice %8 {offsets = [0, 320], sizes = [128, 32], strides = [1, 1]} : vector<128x384xf32> to vector<128x32xf32>
    %50 = tpu.transpose %48, [1, 0] : vector<128x32xf32> -> vector<32x128xf32>
    %cst_19 = arith.constant dense<0.000000e+00> : vector<128x128xf32>
    %51 = tpu.matmul %47, %50, %cst_19 {dimension_numbers = #tpu.dot_dimension_numbers<[1], [0], [0], [1], [0, 0, 1, 1], [], []>} : vector<128x32xf32>, vector<32x128xf32>, vector<128x128xf32> -> vector<128x128xf32>
    %cst_20 = arith.constant 0.176776692 : f32
    %52 = vector.broadcast %cst_20 : f32 to vector<128x128xf32>
    %53 = arith.mulf %51, %52 : vector<128x128xf32>
    %54 = vector.broadcast %3 : vector<1x128xf32> to vector<128x128xf32>
    %55 = arith.addf %53, %54 : vector<128x128xf32>
    %cst_21 = arith.constant dense<0xFF800000> : vector<128xf32>
    %56 = vector.multi_reduction <maximumf>, %55, %cst_21 [1] : vector<128x128xf32> to vector<128xf32>
    %57 = vector.shape_cast %56 : vector<128xf32> to vector<128x1xf32>
    %58 = vector.broadcast %57 : vector<128x1xf32> to vector<128x128xf32>
    %59 = arith.subf %55, %58 : vector<128x128xf32>
    %60 = math.exp %59 : vector<128x128xf32>
    %cst_22 = arith.constant dense<0.000000e+00> : vector<128xf32>
    %61 = vector.multi_reduction <add>, %60, %cst_22 [1] : vector<128x128xf32> to vector<128xf32>
    %62 = vector.shape_cast %61 : vector<128xf32> to vector<128x1xf32>
    %63 = vector.broadcast %62 : vector<128x1xf32> to vector<128x128xf32>
    %64 = arith.divf %60, %63 : vector<128x128xf32>
    %cst_23 = arith.constant dense<0.000000e+00> : vector<128x32xf32>
    %65 = tpu.matmul %64, %49, %cst_23 {dimension_numbers = #tpu.dot_dimension_numbers<[1], [0], [0], [1], [0, 0, 1, 1], [], []>} : vector<128x128xf32>, vector<128x32xf32>, vector<128x32xf32> -> vector<128x32xf32>
    %66 = vector.extract_strided_slice %8 {offsets = [0, 96], sizes = [128, 32], strides = [1, 1]} : vector<128x384xf32> to vector<128x32xf32>
    %67 = vector.extract_strided_slice %8 {offsets = [0, 224], sizes = [128, 32], strides = [1, 1]} : vector<128x384xf32> to vector<128x32xf32>
    %68 = vector.extract_strided_slice %8 {offsets = [0, 352], sizes = [128, 32], strides = [1, 1]} : vector<128x384xf32> to vector<128x32xf32>
    %69 = tpu.transpose %67, [1, 0] : vector<128x32xf32> -> vector<32x128xf32>
    %cst_24 = arith.constant dense<0.000000e+00> : vector<128x128xf32>
    %70 = tpu.matmul %66, %69, %cst_24 {dimension_numbers = #tpu.dot_dimension_numbers<[1], [0], [0], [1], [0, 0, 1, 1], [], []>} : vector<128x32xf32>, vector<32x128xf32>, vector<128x128xf32> -> vector<128x128xf32>
    %cst_25 = arith.constant 0.176776692 : f32
    %71 = vector.broadcast %cst_25 : f32 to vector<128x128xf32>
    %72 = arith.mulf %70, %71 : vector<128x128xf32>
    %73 = vector.broadcast %3 : vector<1x128xf32> to vector<128x128xf32>
    %74 = arith.addf %72, %73 : vector<128x128xf32>
    %cst_26 = arith.constant dense<0xFF800000> : vector<128xf32>
    %75 = vector.multi_reduction <maximumf>, %74, %cst_26 [1] : vector<128x128xf32> to vector<128xf32>
    %76 = vector.shape_cast %75 : vector<128xf32> to vector<128x1xf32>
    %77 = vector.broadcast %76 : vector<128x1xf32> to vector<128x128xf32>
    %78 = arith.subf %74, %77 : vector<128x128xf32>
    %79 = math.exp %78 : vector<128x128xf32>
    %cst_27 = arith.constant dense<0.000000e+00> : vector<128xf32>
    %80 = vector.multi_reduction <add>, %79, %cst_27 [1] : vector<128x128xf32> to vector<128xf32>
    %81 = vector.shape_cast %80 : vector<128xf32> to vector<128x1xf32>
    %82 = vector.broadcast %81 : vector<128x1xf32> to vector<128x128xf32>
    %83 = arith.divf %79, %82 : vector<128x128xf32>
    %cst_28 = arith.constant dense<0.000000e+00> : vector<128x32xf32>
    %84 = tpu.matmul %83, %68, %cst_28 {dimension_numbers = #tpu.dot_dimension_numbers<[1], [0], [0], [1], [0, 0, 1, 1], [], []>} : vector<128x128xf32>, vector<128x32xf32>, vector<128x32xf32> -> vector<128x32xf32>
    %85 = tpu.concatenate %27, %46, %65, %84 in 1 : vector<128x32xf32>, vector<128x32xf32>, vector<128x32xf32>, vector<128x32xf32> -> vector<128x128xf32>
    %c0_29 = arith.constant 0 : index
    %c0_30 = arith.constant 0 : index
    %86 = vector.load %arg5[%c0_29, %c0_30] : memref<128x128xf32, #tpu.memory_space<vmem>>, vector<128x128xf32>
    %cst_31 = arith.constant dense<0.000000e+00> : vector<128x128xf32>
    %87 = tpu.matmul %85, %86, %cst_31 {dimension_numbers = #tpu.dot_dimension_numbers<[1], [0], [0], [1], [0, 0, 1, 1], [], []>} : vector<128x128xf32>, vector<128x128xf32>, vector<128x128xf32> -> vector<128x128xf32>
    %c0_32 = arith.constant 0 : index
    %c0_33 = arith.constant 0 : index
    %88 = vector.load %arg6[%c0_32, %c0_33] : memref<1x128xf32, #tpu.memory_space<vmem>>, vector<1x128xf32>
    %89 = vector.broadcast %88 : vector<1x128xf32> to vector<128x128xf32>
    %90 = arith.addf %87, %89 : vector<128x128xf32>
    %91 = arith.addf %90, %1 : vector<128x128xf32>
    %cst_34 = arith.constant dense<0.000000e+00> : vector<128xf32>
    %92 = vector.multi_reduction <add>, %91, %cst_34 [1] : vector<128x128xf32> to vector<128xf32>
    %93 = vector.shape_cast %92 : vector<128xf32> to vector<128x1xf32>
    %cst_35 = arith.constant 1.280000e+02 : f32
    %94 = vector.broadcast %cst_35 : f32 to vector<128x1xf32>
    %95 = arith.divf %93, %94 : vector<128x1xf32>
    %96 = vector.broadcast %95 : vector<128x1xf32> to vector<128x128xf32>
    %97 = arith.subf %91, %96 : vector<128x128xf32>
    %98 = arith.mulf %97, %97 : vector<128x128xf32>
    %cst_36 = arith.constant dense<0.000000e+00> : vector<128xf32>
    %99 = vector.multi_reduction <add>, %98, %cst_36 [1] : vector<128x128xf32> to vector<128xf32>
    %100 = vector.shape_cast %99 : vector<128xf32> to vector<128x1xf32>
    %cst_37 = arith.constant 1.280000e+02 : f32
    %101 = vector.broadcast %cst_37 : f32 to vector<128x1xf32>
    %102 = arith.divf %100, %101 : vector<128x1xf32>
    %cst_38 = arith.constant 9.99999996E-13 : f32
    %103 = vector.broadcast %cst_38 : f32 to vector<128x1xf32>
    %104 = arith.addf %102, %103 : vector<128x1xf32>
    %105 = math.rsqrt %104 : vector<128x1xf32>
    %106 = vector.broadcast %105 : vector<128x1xf32> to vector<128x128xf32>
    %107 = arith.mulf %97, %106 : vector<128x128xf32>
    %c0_39 = arith.constant 0 : index
    %c0_40 = arith.constant 0 : index
    %108 = vector.load %arg7[%c0_39, %c0_40] : memref<1x128xf32, #tpu.memory_space<vmem>>, vector<1x128xf32>
    %109 = vector.broadcast %108 : vector<1x128xf32> to vector<128x128xf32>
    %110 = arith.mulf %107, %109 : vector<128x128xf32>
    %c0_41 = arith.constant 0 : index
    %c0_42 = arith.constant 0 : index
    %111 = vector.load %arg8[%c0_41, %c0_42] : memref<1x128xf32, #tpu.memory_space<vmem>>, vector<1x128xf32>
    %112 = vector.broadcast %111 : vector<1x128xf32> to vector<128x128xf32>
    %113 = arith.addf %110, %112 : vector<128x128xf32>
    %c0_43 = arith.constant 0 : index
    %c0_44 = arith.constant 0 : index
    %c0_45 = arith.constant 0 : index
    %114 = vector.load %arg9[%c0_43, %c0_44, %c0_45] : memref<1x128x128xf32, #tpu.memory_space<vmem>>, vector<1x128x128xf32>
    %115 = vector.shape_cast %114 : vector<1x128x128xf32> to vector<128x128xf32>
    %116 = vector.shape_cast %113 : vector<128x128xf32> to vector<1x128x128xf32>
    tpu.vector_store %arg9[%c0_43, %c0_44, %c0_45], %116 {strides = array<i32>} : memref<1x128x128xf32, #tpu.memory_space<vmem>>, vector<1x128x128xf32>,
    return
  }
  func.func @transform_0(%arg0: i32) -> (i32, i32, i32) {
    %c0_i32 = arith.constant 0 : i32
    %c0_i32_0 = arith.constant 0 : i32
    %c0_i32_1 = arith.constant 0 : i32
    return %arg0, %c0_i32, %c0_i32_0 : i32, i32, i32
  }
  func.func @transform_1(%arg0: i32) -> (i32, i32, i32) {
    %c0_i32 = arith.constant 0 : i32
    %c0_i32_0 = arith.constant 0 : i32
    %c0_i32_1 = arith.constant 0 : i32
    return %arg0, %c0_i32, %c0_i32_0 : i32, i32, i32
  }
  func.func @transform_2(%arg0: i32) -> (i32, i32) {
    %c0_i32 = arith.constant 0 : i32
    %c0_i32_0 = arith.constant 0 : i32
    %c0_i32_1 = arith.constant 0 : i32
    return %c0_i32, %c0_i32_0 : i32, i32
  }
  func.func @transform_3(%arg0: i32) -> (i32, i32) {
    %c0_i32 = arith.constant 0 : i32
    %c0_i32_0 = arith.constant 0 : i32
    %c0_i32_1 = arith.constant 0 : i32
    return %c0_i32, %c0_i32_0 : i32, i32
  }
  func.func @transform_4(%arg0: i32) -> (i32, i32) {
    %c0_i32 = arith.constant 0 : i32
    %c0_i32_0 = arith.constant 0 : i32
    %c0_i32_1 = arith.constant 0 : i32
    return %c0_i32, %c0_i32_0 : i32, i32
  }
  func.func @transform_5(%arg0: i32) -> (i32, i32) {
    %c0_i32 = arith.constant 0 : i32
    %c0_i32_0 = arith.constant 0 : i32
    %c0_i32_1 = arith.constant 0 : i32
    return %c0_i32, %c0_i32_0 : i32, i32
  }
  func.func @transform_6(%arg0: i32) -> (i32, i32) {
    %c0_i32 = arith.constant 0 : i32
    %c0_i32_0 = arith.constant 0 : i32
    %c0_i32_1 = arith.constant 0 : i32
    return %c0_i32, %c0_i32_0 : i32, i32
  }
  func.func @transform_7(%arg0: i32) -> (i32, i32) {
    %c0_i32 = arith.constant 0 : i32
    %c0_i32_0 = arith.constant 0 : i32
    %c0_i32_1 = arith.constant 0 : i32
    return %c0_i32, %c0_i32_0 : i32, i32
  }
  func.func @transform_8(%arg0: i32) -> (i32, i32, i32) {
    %c0_i32 = arith.constant 0 : i32
    %c0_i32_0 = arith.constant 0 : i32
    %c0_i32_1 = arith.constant 0 : i32
    return %arg0, %c0_i32, %c0_i32_0 : i32, i32, i32
  }
}

</mosaic_0001>

<llo_original>
// kernel: tpu_custom_call.1
$region0: #{tpu_custom_call.1}
  #allocation0 [shape = 'u32[]', space=smem, size = 0x4, offset = 0x4, fixed_abs, tag = 'smem constant byte address 0x4 - core index']
  #allocation1 [shape = 'u32[144,128]{1,0:T(1,128)}', space=vmem, size = 0x12000, scoped, tag = 'internal scratch']
  %s0 = inlined_call_operand.hbm [shape: f32[2,128,128], index: 0, kind: input, shape index: {}]
  %s1 = inlined_call_operand.hbm [shape: f32[2,1,128], index: 1, kind: input, shape index: {}]
  %s2 = inlined_call_operand.hbm [shape: f32[128,384], index: 2, kind: input, shape index: {}]
  %s3 = inlined_call_operand.vmem [shape: f32[1,384], index: 3, kind: input, shape index: {}]
  %s4 = inlined_call_operand.hbm [shape: f32[128,128], index: 4, kind: input, shape index: {}]
  %s5 = inlined_call_operand.vmem [shape: f32[1,128], index: 5, kind: input, shape index: {}]
  %s6 = inlined_call_operand.vmem [shape: f32[1,128], index: 6, kind: input, shape index: {}]
  %s7 = inlined_call_operand.vmem [shape: f32[1,128], index: 7, kind: input, shape index: {}]
  %s8 = inlined_call_operand.hbm [shape: f32[2,128,128], index: 8, kind: output, shape index: {}]
  %s9 = sld [smem:[#allocation0]]
  $region81: #{tpu_custom_call.1} parent=0
    _
  %s11 = ssub.s32 1, %s9
  %s12 = scalar_select 0, %s11, %s9
  $region1: #{tpu_custom_call.1} parent=0
    #allocation2 [shape = 'u8[131072]{0}', space=vmem, size = 0x20000, scoped, tag = 'input window, operand 0']
    #allocation3 [shape = 's32[2]{0}', space=sflag, size = 0x8, scoped, tag = 'scoped memory for tpu_custom_call.1']
    #allocation4 [shape = 's32[2]{0}', space=sflag, size = 0x8, scoped, tag = 'scoped memory for tpu_custom_call.1']
    #allocation5 [shape = 'u8[1024]{0}', space=vmem, size = 0x400, scoped, tag = 'input window, operand 1']
    #allocation6 [shape = 's32[2]{0}', space=sflag, size = 0x8, scoped, tag = 'scoped memory for tpu_custom_call.1']
    #allocation7 [shape = 'u8[196608]{0}', space=vmem, size = 0x30000, scoped, tag = 'input window, operand 2, single buffered']
    #allocation8 [shape = 'u8[65536]{0}', space=vmem, size = 0x10000, scoped, tag = 'input window, operand 4, single buffered']
    #allocation9 [shape = 's32[1]{0}', space=sflag, size = 0x4, scoped, tag = 'scoped memory for tpu_custom_call.1']
    #allocation10 [shape = 'u8[131072]{0}', space=vmem, size = 0x20000, scoped, tag = 'output window, operand 0']
    %13 = vsyncpa [#allocation3], 0
    %s14 = scalar_lea.sflag [#allocation3], 1
    %15 = vsyncpa %s14, 0
    %16 = vsyncpa [#allocation6], 0
    %s17 = scalar_lea.sflag [#allocation6], 1
    %18 = vsyncpa %s17, 0
    %19 = vsyncpa [#allocation9], 0
    %20 = vsyncpa [#allocation4], 0
    %s21 = scalar_lea.sflag [#allocation4], 1
    %22 = vsyncpa %s21, 0
    loop: start=0, step=1, limit=4
    $region2: #{tpu_custom_call.1} parent=1 // loop_pre_header
      _
    $region3: #{tpu_custom_call.1} parent=1 // loop_header
      %s24 = sphi 0, %s28
      %p25 = scmp.ge.s32.totalorder %s24, 4
      %s34 = sphi 0, %s36
      %s37 = sphi 0, %s34
      %s38 = sphi 0, %s37
      %s54 = sphi 0, %s38
      %s60 = sphi 0, %s62
      %s63 = sphi 0, %s60
      %s64 = sphi 0, %s63
      %s80 = sphi 0, %s64
      %s84 = sphi 0, %s84
      %s86 = sphi 0, %s84
      %s87 = sphi 0, %s86
      %s101 = sphi 0, %s87
      %s105 = sphi 0, %s105
      %s107 = sphi 0, %s105
      %s108 = sphi 0, %s107
      %s122 = sphi 0, %s108
      %s126 = sphi 0, %s126
      %s128 = sphi 0, %s126
      %s129 = sphi 0, %s128
      %s143 = sphi 0, %s129
      %s147 = sphi 0, %s147
      %s149 = sphi 0, %s147
      %s150 = sphi 0, %s149
      %s164 = sphi 0, %s150
      %s168 = sphi 0, %s168
      %s170 = sphi 0, %s168
      %s171 = sphi 0, %s170
      %s185 = sphi 0, %s171
      %s189 = sphi 0, %s189
      %s191 = sphi 0, %s189
      %s192 = sphi 0, %s191
      %s206 = sphi 0, %s192
      %s212 = sphi 0, %s214
      %s215 = sphi 0, %s212
      %s216 = sphi 0, %s215
      %s232 = sphi 0, %s216
    $region4: #{tpu_custom_call.1} parent=1 // loop_header_branch
      %27 = sbr.rel (%p25) target = $region8
    $region5: #{tpu_custom_call.1} parent=1 // loop_body
      %s29 = ssub.s32 %s24, 1
      %s30 = ssub.s32 %s24, 2
      %s31 = sadd.s32 %s24, 1
      %s32 = ssub.s32 %s24, %s31
      %p33 = scmp.eq.s32.totalorder %s32, 0
      %s35 = sadd.s32 %s34, 1
      %s36 = scalar_select %p33, %s34, %s35
      %p39 = pneg %p33
      %p40 = scmp.eq.s32.totalorder %s24, 1
      %p41 = por %p39, %p40
      %p42 = scmp.ne.s32.totalorder %s34, %s37
      %p43 = scmp.eq.s32.totalorder %s24, 0
      %p44 = por %p42, %p43
      %p45 = scmp.ne.s32.totalorder %s34, %s37
      %p46 = scmp.eq.s32.totalorder %s29, 1
      %p47 = por %p45, %p46
      %p48 = scmp.ne.s32.totalorder %s37, %s38
      %p49 = scmp.eq.s32.totalorder %s29, 0
      %p50 = por %p48, %p49
      %p51 = scmp.ne.s32.totalorder %s37, %s38
      %p52 = scmp.eq.s32.totalorder %s30, 1
      %p53 = por %p51, %p52
      %p55 = scmp.ne.s32.totalorder %s38, %s54
      %p56 = scmp.eq.s32.totalorder %s30, 0
      %p57 = por %p55, %p56
      %s58 = ssub.s32 %s24, %s31
      %p59 = scmp.eq.s32.totalorder %s58, 0
      %s61 = sadd.s32 %s60, 1
      %s62 = scalar_select %p59, %s60, %s61
      %p65 = pneg %p59
      %p66 = scmp.eq.s32.totalorder %s24, 1
      %p67 = por %p65, %p66
      %p68 = scmp.ne.s32.totalorder %s60, %s63
      %p69 = scmp.eq.s32.totalorder %s24, 0
      %p70 = por %p68, %p69
      %p71 = scmp.ne.s32.totalorder %s60, %s63
      %p72 = scmp.eq.s32.totalorder %s29, 1
      %p73 = por %p71, %p72
      %p74 = scmp.ne.s32.totalorder %s63, %s64
      %p75 = scmp.eq.s32.totalorder %s29, 0
      %p76 = por %p74, %p75
      %p77 = scmp.ne.s32.totalorder %s63, %s64
      %p78 = scmp.eq.s32.totalorder %s30, 1
      %p79 = por %p77, %p78
      %p81 = scmp.ne.s32.totalorder %s64, %s80
      %p82 = scmp.eq.s32.totalorder %s30, 0
      %p83 = por %p81, %p82
      %s85 = sadd.s32 %s84, 1
      %p88 = scmp.eq.s32.totalorder %s24, 1
      %p89 = scmp.ne.s32.totalorder %s84, %s86
      %p90 = scmp.eq.s32.totalorder %s24, 0
      %p91 = por %p89, %p90
      %p92 = scmp.ne.s32.totalorder %s84, %s86
      %p93 = scmp.eq.s32.totalorder %s29, 1
      %p94 = por %p92, %p93
      %p95 = scmp.ne.s32.totalorder %s86, %s87
      %p96 = scmp.eq.s32.totalorder %s29, 0
      %p97 = por %p95, %p96
      %p98 = scmp.ne.s32.totalorder %s86, %s87
      %p99 = scmp.eq.s32.totalorder %s30, 1
      %p100 = por %p98, %p99
      %p102 = scmp.ne.s32.totalorder %s87, %s101
      %p103 = scmp.eq.s32.totalorder %s30, 0
      %p104 = por %p102, %p103
      %s106 = sadd.s32 %s105, 1
      %p109 = scmp.eq.s32.totalorder %s24, 1
      %p110 = scmp.ne.s32.totalorder %s105, %s107
      %p111 = scmp.eq.s32.totalorder %s24, 0
      %p112 = por %p110, %p111
      %p113 = scmp.ne.s32.totalorder %s105, %s107
      %p114 = scmp.eq.s32.totalorder %s29, 1
      %p115 = por %p113, %p114
      %p116 = scmp.ne.s32.totalorder %s107, %s108
      %p117 = scmp.eq.s32.totalorder %s29, 0
      %p118 = por %p116, %p117
      %p119 = scmp.ne.s32.totalorder %s107, %s108
      %p120 = scmp.eq.s32.totalorder %s30, 1
      %p121 = por %p119, %p120
      %p123 = scmp.ne.s32.totalorder %s108, %s122
      %p124 = scmp.eq.s32.totalorder %s30, 0
      %p125 = por %p123, %p124
      %s127 = sadd.s32 %s126, 1
      %p130 = scmp.eq.s32.totalorder %s24, 1
      %p131 = scmp.ne.s32.totalorder %s126, %s128
      %p132 = scmp.eq.s32.totalorder %s24, 0
      %p133 = por %p131, %p132
      %p134 = scmp.ne.s32.totalorder %s126, %s128
      %p135 = scmp.eq.s32.totalorder %s29, 1
      %p136 = por %p134, %p135
      %p137 = scmp.ne.s32.totalorder %s128, %s129
      %p138 = scmp.eq.s32.totalorder %s29, 0
      %p139 = por %p137, %p138
      %p140 = scmp.ne.s32.totalorder %s128, %s129
      %p141 = scmp.eq.s32.totalorder %s30, 1
      %p142 = por %p140, %p141
      %p144 = scmp.ne.s32.totalorder %s129, %s143
      %p145 = scmp.eq.s32.totalorder %s30, 0
      %p146 = por %p144, %p145
      %s148 = sadd.s32 %s147, 1
      %p151 = scmp.eq.s32.totalorder %s24, 1
      %p152 = scmp.ne.s32.totalorder %s147, %s149
      %p153 = scmp.eq.s32.totalorder %s24, 0
      %p154 = por %p152, %p153
      %p155 = scmp.ne.s32.totalorder %s147, %s149
      %p156 = scmp.eq.s32.totalorder %s29, 1
      %p157 = por %p155, %p156
      %p158 = scmp.ne.s32.totalorder %s149, %s150
      %p159 = scmp.eq.s32.totalorder %s29, 0
      %p160 = por %p158, %p159
      %p161 = scmp.ne.s32.totalorder %s149, %s150
      %p162 = scmp.eq.s32.totalorder %s30, 1
      %p163 = por %p161, %p162
      %p165 = scmp.ne.s32.totalorder %s150, %s164
      %p166 = scmp.eq.s32.totalorder %s30, 0
      %p167 = por %p165, %p166
      %s169 = sadd.s32 %s168, 1
      %p172 = scmp.eq.s32.totalorder %s24, 1
      %p173 = scmp.ne.s32.totalorder %s168, %s170
      %p174 = scmp.eq.s32.totalorder %s24, 0
      %p175 = por %p173, %p174
      %p176 = scmp.ne.s32.totalorder %s168, %s170
      %p177 = scmp.eq.s32.totalorder %s29, 1
      %p178 = por %p176, %p177
      %p179 = scmp.ne.s32.totalorder %s170, %s171
      %p180 = scmp.eq.s32.totalorder %s29, 0
      %p181 = por %p179, %p180
      %p182 = scmp.ne.s32.totalorder %s170, %s171
      %p183 = scmp.eq.s32.totalorder %s30, 1
      %p184 = por %p182, %p183
      %p186 = scmp.ne.s32.totalorder %s171, %s185
      %p187 = scmp.eq.s32.totalorder %s30, 0
      %p188 = por %p186, %p187
      %s190 = sadd.s32 %s189, 1
      %p193 = scmp.eq.s32.totalorder %s24, 1
      %p194 = scmp.ne.s32.totalorder %s189, %s191
      %p195 = scmp.eq.s32.totalorder %s24, 0
      %p196 = por %p194, %p195
      %p197 = scmp.ne.s32.totalorder %s189, %s191
      %p198 = scmp.eq.s32.totalorder %s29, 1
      %p199 = por %p197, %p198
      %p200 = scmp.ne.s32.totalorder %s191, %s192
      %p201 = scmp.eq.s32.totalorder %s29, 0
      %p202 = por %p200, %p201
      %p203 = scmp.ne.s32.totalorder %s191, %s192
      %p204 = scmp.eq.s32.totalorder %s30, 1
      %p205 = por %p203, %p204
      %p207 = scmp.ne.s32.totalorder %s192, %s206
      %p208 = scmp.eq.s32.totalorder %s30, 0
      %p209 = por %p207, %p208
      %s210 = ssub.s32 %s24, %s31
      %p211 = scmp.eq.s32.totalorder %s210, 0
      %s213 = sadd.s32 %s212, 1
      %s214 = scalar_select %p211, %s212, %s213
      %p217 = pneg %p211
      %p218 = scmp.eq.s32.totalorder %s24, 1
      %p219 = por %p217, %p218
      %p220 = scmp.ne.s32.totalorder %s212, %s215
      %p221 = scmp.eq.s32.totalorder %s24, 0
      %p222 = por %p220, %p221
      %p223 = scmp.ne.s32.totalorder %s212, %s215
      %p224 = scmp.eq.s32.totalorder %s29, 1
      %p225 = por %p223, %p224
      %p226 = scmp.ne.s32.totalorder %s215, %s216
      %p227 = scmp.eq.s32.totalorder %s29, 0
      %p228 = por %p226, %p227
      %p229 = scmp.ne.s32.totalorder %s215, %s216
      %p230 = scmp.eq.s32.totalorder %s30, 1
      %p231 = por %p229, %p230
      %p233 = scmp.ne.s32.totalorder %s216, %s232
      %p234 = scmp.eq.s32.totalorder %s30, 0
      %p235 = por %p233, %p234
      %p236 = scmp.le.s32.totalorder 1, %s24
      %p237 = scmp.lt.s32.totalorder %s24, 3
      %p238 = pnand %p236, %p237
      %p239 = pneg %p238
      // Predicated region
      $region9: #{tpu_custom_call.1} parent=5 // pred_check
        _
      $region10: #{tpu_custom_call.1} parent=5 // pred_check_branch
        %241 = sbr.rel (%p238) target = $region12
      $region11: #{tpu_custom_call.1} parent=5 // pred_region
        %s242 = ssub.s32 %s24, 1
        // Predicated region
        $region13: #{tpu_custom_call.1} parent=11 // pred_check
          %p243 = pneg %p97
        $region14: #{tpu_custom_call.1} parent=11 // pred_check_branch
          %245 = sbr.rel (%p243) target = $region16
        $region15: #{tpu_custom_call.1} parent=11 // pred_region
          %s247 = ssub.s32 6144, 6144
          %248 = vsyncadd [#allocation6], %s247
          %s249 = sshll.u32 [#allocation7], 4
          %s250 = int_to_ptr.vmem [resolvable:$true] %s249
          %255 = dma.hbm_to_vmem [thread:$0]  %s2, 6144, %s250, [#allocation6], 384, 384, 24
        $region16: #{tpu_custom_call.1} parent=11 // pred_fallthru
          _
        // Predicated region
        $region17: #{tpu_custom_call.1} parent=11 // pred_check
          %p256 = pneg %p118
        $region18: #{tpu_custom_call.1} parent=11 // pred_check_branch
          %258 = sbr.rel (%p256) target = $region20
        $region19: #{tpu_custom_call.1} parent=11 // pred_region
          _
        $region20: #{tpu_custom_call.1} parent=11 // pred_fallthru
          _
        // Predicated region
        $region21: #{tpu_custom_call.1} parent=11 // pred_check
          %p259 = pneg %p139
        $region22: #{tpu_custom_call.1} parent=11 // pred_check_branch
          %261 = sbr.rel (%p259) target = $region24
        $region23: #{tpu_custom_call.1} parent=11 // pred_region
          %s263 = ssub.s32 2048, 2048
          %264 = vsyncadd [#allocation9], %s263
          %s265 = sshll.u32 [#allocation8], 4
          %s266 = int_to_ptr.vmem [resolvable:$true] %s265
          %271 = dma.hbm_to_vmem [thread:$0]  %s4, 2048, %s266, [#allocation9], 128, 128, 8
        $region24: #{tpu_custom_call.1} parent=11 // pred_fallthru
          _
        // Predicated region
        $region25: #{tpu_custom_call.1} parent=11 // pred_check
          %p272 = pneg %p160
        $region26: #{tpu_custom_call.1} parent=11 // pred_check_branch
          %274 = sbr.rel (%p272) target = $region28
        $region27: #{tpu_custom_call.1} parent=11 // pred_region
          _
        $region28: #{tpu_custom_call.1} parent=11 // pred_fallthru
          _
        // Predicated region
        $region29: #{tpu_custom_call.1} parent=11 // pred_check
          %p275 = pneg %p181
        $region30: #{tpu_custom_call.1} parent=11 // pred_check_branch
          %277 = sbr.rel (%p275) target = $region32
        $region31: #{tpu_custom_call.1} parent=11 // pred_region
          _
        $region32: #{tpu_custom_call.1} parent=11 // pred_fallthru
          _
        // Predicated region
        $region33: #{tpu_custom_call.1} parent=11 // pred_check
          %p278 = pneg %p202
        $region34: #{tpu_custom_call.1} parent=11 // pred_check_branch
          %280 = sbr.rel (%p278) target = $region36
        $region35: #{tpu_custom_call.1} parent=11 // pred_region
          _
        $region36: #{tpu_custom_call.1} parent=11 // pred_fallthru
          _
      $region12: #{tpu_custom_call.1} parent=5 // pred_fallthru
        _
      %p281 = scmp.lt.s32.totalorder %s24, 2
      // Predicated region
      $region37: #{tpu_custom_call.1} parent=5 // pred_check
        %p282 = pneg %p281
      $region38: #{tpu_custom_call.1} parent=5 // pred_check_branch
        %284 = sbr.rel (%p282) target = $region40
      $region39: #{tpu_custom_call.1} parent=5 // pred_region
        // Predicated region
        $region41: #{tpu_custom_call.1} parent=39 // pred_check
          %p285 = pneg %p44
        $region42: #{tpu_custom_call.1} parent=39 // pred_check_branch
          %287 = sbr.rel (%p285) target = $region44
        $region43: #{tpu_custom_call.1} parent=39 // pred_region
          %s288 = sand.u32 %s34, 1
          %s289 = scalar_lea.sflag [#allocation3], %s288
          %s290 = sand.u32 %s34, 1
          %s291 = smul.addr %s290, 128
          %s292 = scalar_lea.vmem [#allocation2], %s291
          %s294 = ssub.s32 2048, 2048
          %295 = vsyncadd %s289, %s294
          %s296 = smul.addr %s24, 16
          %s297 = smul.addr %s296, 128
          %s298 = scalar_lea.hbm %s0, %s297
          %s299 = sshll.u32 %s292, 4
          %s300 = int_to_ptr.vmem [resolvable:$true] %s299
          %305 = dma.hbm_to_vmem [thread:$0]  %s298, 2048, %s300, %s289, 128, 128, 8
        $region44: #{tpu_custom_call.1} parent=39 // pred_fallthru
          _
        // Predicated region
        $region45: #{tpu_custom_call.1} parent=39 // pred_check
          %p306 = pneg %p70
        $region46: #{tpu_custom_call.1} parent=39 // pred_check_branch
          %308 = sbr.rel (%p306) target = $region48
        $region47: #{tpu_custom_call.1} parent=39 // pred_region
          %s309 = sand.u32 %s24, 1
          %s310 = scalar_lea.sflag [#allocation6], %s309
          %s311 = sand.u32 %s60, 1
          %s312 = scalar_lea.vmem [#allocation5], %s311
          %s314 = ssub.s32 16, 16
          %315 = vsyncadd %s310, %s314
          %s316 = smul.addr %s24, 16
          %s317 = scalar_lea.hbm %s1, %s316
          %s319 = sshll.u32 %s312, 4
          %s320 = int_to_ptr.vmem [resolvable:$true] %s319
          %322 = dma.hbm_to_vmem [thread:$0]  %s317, 16, %s320, %s310
        $region48: #{tpu_custom_call.1} parent=39 // pred_fallthru
          _
      $region40: #{tpu_custom_call.1} parent=5 // pred_fallthru
        _
      %p323 = scmp.le.s32.totalorder 1, %s24
      %p324 = scmp.lt.s32.totalorder %s24, 3
      %p325 = pnand %p323, %p324
      %p326 = pneg %p325
      // Predicated region
      $region49: #{tpu_custom_call.1} parent=5 // pred_check
        _
      $region50: #{tpu_custom_call.1} parent=5 // pred_check_branch
        %328 = sbr.rel (%p325) target = $region52
      $region51: #{tpu_custom_call.1} parent=5 // pred_region
        %s329 = ssub.s32 %s24, 1
        %s330 = sand.u32 %s37, 1
        %s331 = scalar_lea.sflag [#allocation3], %s330
        %s332 = sand.u32 %s37, 1
        %s333 = smul.addr %s332, 128
        %s334 = scalar_lea.vmem [#allocation2], %s333
        // Predicated region
        $region53: #{tpu_custom_call.1} parent=51 // pred_check
          %p335 = pneg %p50
        $region54: #{tpu_custom_call.1} parent=51 // pred_check_branch
          %337 = sbr.rel (%p335) target = $region56
        $region55: #{tpu_custom_call.1} parent=51 // pred_region
          %338 = dma.done %s331, 2048
        $region56: #{tpu_custom_call.1} parent=51 // pred_fallthru
          _
        %s339 = sand.u32 %s29, 1
        %s340 = scalar_lea.sflag [#allocation6], %s339
        %s341 = sand.u32 %s63, 1
        %s342 = scalar_lea.vmem [#allocation5], %s341
        // Predicated region
        $region57: #{tpu_custom_call.1} parent=51 // pred_check
          %p343 = pneg %p76
        $region58: #{tpu_custom_call.1} parent=51 // pred_check_branch
          %345 = sbr.rel (%p343) target = $region60
        $region59: #{tpu_custom_call.1} parent=51 // pred_region
          %346 = dma.done %s340, 16
        $region60: #{tpu_custom_call.1} parent=51 // pred_fallthru
          _
        // Predicated region
        $region61: #{tpu_custom_call.1} parent=51 // pred_check
          %p347 = pneg %p97
        $region62: #{tpu_custom_call.1} parent=51 // pred_check_branch
          %349 = sbr.rel (%p347) target = $region64
        $region63: #{tpu_custom_call.1} parent=51 // pred_region
          %350 = dma.done [#allocation6], 6144
        $region64: #{tpu_custom_call.1} parent=51 // pred_fallthru
          _
        // Predicated region
        $region65: #{tpu_custom_call.1} parent=51 // pred_check
          %p351 = pneg %p139
        $region66: #{tpu_custom_call.1} parent=51 // pred_check_branch
          %353 = sbr.rel (%p351) target = $region68
        $region67: #{tpu_custom_call.1} parent=51 // pred_region
          %354 = dma.done [#allocation9], 2048
        $region68: #{tpu_custom_call.1} parent=51 // pred_fallthru
          _
        %s355 = sand.u32 %s37, 1
        %s356 = scalar_lea.sflag [#allocation3], %s355
        %s357 = sand.u32 %s37, 1
        %s358 = smul.addr %s357, 128
        %s359 = scalar_lea.vmem [#allocation2], %s358
        %p360 = pneg %p50
        %p361 = pneg %p47
        %s362 = sand.u32 %s29, 1
        %s363 = scalar_lea.sflag [#allocation6], %s362
        %s364 = sand.u32 %s63, 1
        %s365 = scalar_lea.vmem [#allocation5], %s364
        %p366 = pneg %p76
        %p367 = pneg %p73
        %p368 = pneg %p97
        %p369 = pneg %p94
        %p370 = pneg %p118
        %p371 = pneg %p115
        %p372 = pneg %p139
        %p373 = pneg %p136
        %p374 = pneg %p160
        %p375 = pneg %p157
        %p376 = pneg %p181
        %p377 = pneg %p178
        %p378 = pneg %p202
        %p379 = pneg %p199
        %p380 = pneg %p228
        %p381 = pneg %p225
        %s382 = sand.u32 %s215, 1
        %s383 = scalar_lea.sflag [#allocation4], %s382
        %s384 = sand.u32 %s215, 1
        %s385 = smul.addr %s384, 128
        %s386 = scalar_lea.vmem [#allocation10], %s385
        %v387 = vld [vmem:[%s334] sm:$0xff]
        %v388 = vld [vmem:[%s334 + $0x8] sm:$0xff]
        %v389 = vld [vmem:[%s334 + $0x10] sm:$0xff]
        %v390 = vld [vmem:[%s334 + $0x18] sm:$0xff]
        %v391 = vld [vmem:[%s334 + $0x20] sm:$0xff]
        %v392 = vld [vmem:[%s334 + $0x28] sm:$0xff]
        %v393 = vld [vmem:[%s334 + $0x30] sm:$0xff]
        %v394 = vld [vmem:[%s334 + $0x38] sm:$0xff]
        %v395 = vld [vmem:[%s334 + $0x40] sm:$0xff]
        %v396 = vld [vmem:[%s334 + $0x48] sm:$0xff]
        %v397 = vld [vmem:[%s334 + $0x50] sm:$0xff]
        %v398 = vld [vmem:[%s334 + $0x58] sm:$0xff]
        %v399 = vld [vmem:[%s334 + $0x60] sm:$0xff]
        %v400 = vld [vmem:[%s334 + $0x68] sm:$0xff]
        %v401 = vld [vmem:[%s334 + $0x70] sm:$0xff]
        %v402 = vld [vmem:[%s334 + $0x78] sm:$0xff]
        %v403 = vld [vmem:[%s342] sm:$0x1]
        %v404 = vld [vmem:[#allocation7] sm:$0xff]
        %v405 = vld [vmem:[#allocation7 + $0x8] sm:$0xff]
        %v406 = vld [vmem:[#allocation7 + $0x10] sm:$0xff]
        %v407 = vld [vmem:[#allocation7 + $0x18] sm:$0xff]
        %v408 = vld [vmem:[#allocation7 + $0x20] sm:$0xff]
        %v409 = vld [vmem:[#allocation7 + $0x28] sm:$0xff]
        %v410 = vld [vmem:[#allocation7 + $0x30] sm:$0xff]
        %v411 = vld [vmem:[#allocation7 + $0x38] sm:$0xff]
        %v412 = vld [vmem:[#allocation7 + $0x40] sm:$0xff]
        %v413 = vld [vmem:[#allocation7 + $0x48] sm:$0xff]
        %v414 = vld [vmem:[#allocation7 + $0x50] sm:$0xff]
        %v415 = vld [vmem:[#allocation7 + $0x58] sm:$0xff]
        %v416 = vld [vmem:[#allocation7 + $0x60] sm:$0xff]
        %v417 = vld [vmem:[#allocation7 + $0x68] sm:$0xff]
        %v418 = vld [vmem:[#allocation7 + $0x70] sm:$0xff]
        %v419 = vld [vmem:[#allocation7 + $0x78] sm:$0xff]
        %v420 = vld [vmem:[#allocation7 + $0x80] sm:$0xff]
        %v421 = vld [vmem:[#allocation7 + $0x88] sm:$0xff]
        %v422 = vld [vmem:[#allocation7 + $0x90] sm:$0xff]
        %v423 = vld [vmem:[#allocation7 + $0x98] sm:$0xff]
        %v424 = vld [vmem:[#allocation7 + $0xa0] sm:$0xff]
        %v425 = vld [vmem:[#allocation7 + $0xa8] sm:$0xff]
        %v426 = vld [vmem:[#allocation7 + $0xb0] sm:$0xff]
        %v427 = vld [vmem:[#allocation7 + $0xb8] sm:$0xff]
        %v428 = vld [vmem:[#allocation7 + $0xc0] sm:$0xff]
        %v429 = vld [vmem:[#allocation7 + $0xc8] sm:$0xff]
        %v430 = vld [vmem:[#allocation7 + $0xd0] sm:$0xff]
        %v431 = vld [vmem:[#allocation7 + $0xd8] sm:$0xff]
        %v432 = vld [vmem:[#allocation7 + $0xe0] sm:$0xff]
        %v433 = vld [vmem:[#allocation7 + $0xe8] sm:$0xff]
        %v434 = vld [vmem:[#allocation7 + $0xf0] sm:$0xff]
        %v435 = vld [vmem:[#allocation7 + $0xf8] sm:$0xff]
        %v436 = vld [vmem:[#allocation7 + $0x100] sm:$0xff]
        %v437 = vld [vmem:[#allocation7 + $0x108] sm:$0xff]
        %v438 = vld [vmem:[#allocation7 + $0x110] sm:$0xff]
        %v439 = vld [vmem:[#allocation7 + $0x118] sm:$0xff]
        %v440 = vld [vmem:[#allocation7 + $0x120] sm:$0xff]
        %v441 = vld [vmem:[#allocation7 + $0x128] sm:$0xff]
        %v442 = vld [vmem:[#allocation7 + $0x130] sm:$0xff]
        %v443 = vld [vmem:[#allocation7 + $0x138] sm:$0xff]
        %v444 = vld [vmem:[#allocation7 + $0x140] sm:$0xff]
        %v445 = vld [vmem:[#allocation7 + $0x148] sm:$0xff]
        %v446 = vld [vmem:[#allocation7 + $0x150] sm:$0xff]
        %v447 = vld [vmem:[#allocation7 + $0x158] sm:$0xff]
        %v448 = vld [vmem:[#allocation7 + $0x160] sm:$0xff]
        %v449 = vld [vmem:[#allocation7 + $0x168] sm:$0xff]
        %v450 = vld [vmem:[#allocation7 + $0x170] sm:$0xff]
        %v451 = vld [vmem:[#allocation7 + $0x178] sm:$0xff]
        %v452 = vld [vmem:[%s3] sm:$0x7]
        %v454 = vlaneseq
        %v455 = vshrl.u32 %v454, 7
        %v456 = vsub.s32 0, %v455
        %v457 = vrot.slane %v452, %v456
        %v458 = vlaneseq
        %v459 = vshrl.u32 %v458, 7
        %v460 = vsub.s32 1, %v459
        %v461 = vrot.slane %v452, %v460
        %v462 = vlaneseq
        %v463 = vshrl.u32 %v462, 7
        %v464 = vsub.s32 2, %v463
        %v465 = vrot.slane %v452, %v464
        %469 = vmatprep.subr.mxu0 %v450
        %470 = vmatpush1.msra.mxu0 %v449
        %471 = vmatprep.subr.mxu0 %v447
        %472 = vmatpush1.msra.mxu0 %v446
        %473 = vmatprep.subr.mxu0 %v444
        %474 = vmatpush1.msra.mxu0 %v443
        %475 = vmatprep.subr.mxu0 %v441
        %476 = vmatpush1.msra.mxu0 %v440
        %477 = vmatprep.subr.mxu0 %v438
        %478 = vmatpush1.msra.mxu0 %v437
        %479 = vmatprep.subr.mxu0 %v435
        %480 = vmatpush1.msra.mxu0 %v434
        %481 = vmatprep.subr.mxu0 %v432
        %482 = vmatpush1.msra.mxu0 %v431
        %483 = vmatprep.subr.mxu0 %v429
        %484 = vmatpush1.msra.mxu0 %v428
        %485 = vmatprep.subr.mxu0 %v426
        %486 = vmatpush1.msra.mxu0 %v425
        %487 = vmatprep.subr.mxu0 %v423
        %488 = vmatpush1.msra.mxu0 %v422
        %489 = vmatprep.subr.mxu0 %v420
        %490 = vmatpush1.msra.mxu0 %v419
        %491 = vmatprep.subr.mxu0 %v417
        %492 = vmatpush1.msra.mxu0 %v416
        %493 = vmatprep.subr.mxu0 %v414
        %494 = vmatpush1.msra.mxu0 %v413
        %495 = vmatprep.subr.mxu0 %v411
        %496 = vmatpush1.msra.mxu0 %v410
        %497 = vmatprep.subr.mxu0 %v408
        %498 = vmatpush1.msra.mxu0 %v407
        %499 = vmatprep.subr.mxu0 %v405
        %500 = vmatpush1.msra.mxu0 %v404
        %501 = vmatprep.subr.mxu0 0.0
        %502 = vmatpush2.msra.mxu0 0.0
        %503 = vmatprep.subr.mxu0 0.0
        %504 = vmatpush2.msra.mxu0 0.0
        %505 = vmatprep.subr.mxu0 0.0
        %506 = vmatpush2.msra.mxu0 0.0
        %507 = vmatprep.subr.mxu0 0.0
        %508 = vmatpush2.msra.mxu0 0.0
        %509 = vmatprep.subr.mxu0 0.0
        %510 = vmatpush2.msra.mxu0 0.0
        %511 = vmatprep.subr.mxu0 0.0
        %512 = vmatpush2.msra.mxu0 0.0
        %513 = vmatprep.subr.mxu0 0.0
        %514 = vmatpush2.msra.mxu0 0.0
        %515 = vmatprep.subr.mxu0 0.0
        %516 = vmatpush2.msra.mxu0 0.0
        %517 = vmatprep.subr.mxu0 0.0
        %518 = vmatpush2.msra.mxu0 0.0
        %519 = vmatprep.subr.mxu0 0.0
        %520 = vmatpush2.msra.mxu0 0.0
        %521 = vmatprep.subr.mxu0 0.0
        %522 = vmatpush2.msra.mxu0 0.0
        %523 = vmatprep.subr.mxu0 0.0
        %524 = vmatpush2.msra.mxu0 0.0
        %525 = vmatprep.subr.mxu0 0.0
        %526 = vmatpush2.msra.mxu0 0.0
        %527 = vmatprep.subr.mxu0 0.0
        %528 = vmatpush2.msra.mxu0 0.0
        %529 = vmatprep.subr.mxu0 0.0
        %530 = vmatpush2.msra.mxu0 0.0
        %531 = vmatprep.subr.mxu0 0.0
        %532 = vmatpush2.msra.mxu0 0.0
        %533 = vmatprep.mubr.f32.mxu0 0.0
        %534 = vmatmul.mubr.f32.gmra.mxu0 %v387
        %v535 = vpop.f32.mrf.mxu0
        %v536 = vadd.f32 %v457, %v535
        %v537 = vpop.f32.mrf.mxu0
        %v538 = vadd.f32 %v461, %v537
        %539 = vmatprep.mubr.f32.mxu0 0.0
        %540 = vmatmul.mubr.f32.gmra.mxu0 %v388
        %v541 = vpop.f32.mrf.mxu0
        %v542 = vadd.f32 %v457, %v541
        %v543 = vpop.f32.mrf.mxu0
        %v544 = vadd.f32 %v461, %v543
        %545 = vmatprep.mubr.f32.mxu0 0.0
        %546 = vmatmul.mubr.f32.gmra.mxu0 %v389
        %v547 = vpop.f32.mrf.mxu0
        %v548 = vadd.f32 %v457, %v547
        %v549 = vpop.f32.mrf.mxu0
        %v550 = vadd.f32 %v461, %v549
        %551 = vmatprep.mubr.f32.mxu0 0.0
        %552 = vmatmul.mubr.f32.gmra.mxu0 %v390
        %v553 = vpop.f32.mrf.mxu0
        %v554 = vadd.f32 %v457, %v553
        %v555 = vpop.f32.mrf.mxu0
        %v556 = vadd.f32 %v461, %v555
        %557 = vmatprep.mubr.f32.mxu0 0.0
        %558 = vmatmul.mubr.f32.gmra.mxu0 %v391
        %v559 = vpop.f32.mrf.mxu0
        %v560 = vadd.f32 %v457, %v559
        %v561 = vpop.f32.mrf.mxu0
        %v562 = vadd.f32 %v461, %v561
        %563 = vmatprep.mubr.f32.mxu0 0.0
        %564 = vmatmul.mubr.f32.gmra.mxu0 %v392
        %v565 = vpop.f32.mrf.mxu0
        %v566 = vadd.f32 %v457, %v565
        %v567 = vpop.f32.mrf.mxu0
        %v568 = vadd.f32 %v461, %v567
        %569 = vmatprep.mubr.f32.mxu0 0.0
        %570 = vmatmul.mubr.f32.gmra.mxu0 %v393
        %v571 = vpop.f32.mrf.mxu0
        %v572 = vadd.f32 %v457, %v571
        %v573 = vpop.f32.mrf.mxu0
        %v574 = vadd.f32 %v461, %v573
        %575 = vmatprep.mubr.f32.mxu0 0.0
        %576 = vmatmul.mubr.f32.gmra.mxu0 %v394
        %v577 = vpop.f32.mrf.mxu0
        %v578 = vadd.f32 %v457, %v577
        %v579 = vpop.f32.mrf.mxu0
        %v580 = vadd.f32 %v461, %v579
        %581 = vmatprep.mubr.f32.mxu0 0.0
        %582 = vmatmul.mubr.f32.gmra.mxu0 %v395
        %v583 = vpop.f32.mrf.mxu0
        %v584 = vadd.f32 %v457, %v583
        %v585 = vpop.f32.mrf.mxu0
        %v586 = vadd.f32 %v461, %v585
        %587 = vmatprep.mubr.f32.mxu0 0.0
        %588 = vmatmul.mubr.f32.gmra.mxu0 %v396
        %v589 = vpop.f32.mrf.mxu0
        %v590 = vadd.f32 %v457, %v589
        %v591 = vpop.f32.mrf.mxu0
        %v592 = vadd.f32 %v461, %v591
        %593 = vmatprep.mubr.f32.mxu0 0.0
        %594 = vmatmul.mubr.f32.gmra.mxu0 %v397
        %v595 = vpop.f32.mrf.mxu0
        %v596 = vadd.f32 %v457, %v595
        %v597 = vpop.f32.mrf.mxu0
        %v598 = vadd.f32 %v461, %v597
        %599 = vmatprep.mubr.f32.mxu0 0.0
        %600 = vmatmul.mubr.f32.gmra.mxu0 %v398
        %v601 = vpop.f32.mrf.mxu0
        %v602 = vadd.f32 %v457, %v601
        %v603 = vpop.f32.mrf.mxu0
        %v604 = vadd.f32 %v461, %v603
        %605 = vmatprep.mubr.f32.mxu0 0.0
        %606 = vmatmul.mubr.f32.gmra.mxu0 %v399
        %v607 = vpop.f32.mrf.mxu0
        %v608 = vadd.f32 %v457, %v607
        %v609 = vpop.f32.mrf.mxu0
        %v610 = vadd.f32 %v461, %v609
        %611 = vmatprep.mubr.f32.mxu0 0.0
        %612 = vmatmul.mubr.f32.gmra.mxu0 %v400
        %v613 = vpop.f32.mrf.mxu0
        %v614 = vadd.f32 %v457, %v613
        %v615 = vpop.f32.mrf.mxu0
        %v616 = vadd.f32 %v461, %v615
        %617 = vmatprep.mubr.f32.mxu0 0.0
        %618 = vmatmul.mubr.f32.gmra.mxu0 %v401
        %v619 = vpop.f32.mrf.mxu0
        %v620 = vadd.f32 %v457, %v619
        %v621 = vpop.f32.mrf.mxu0
        %v622 = vadd.f32 %v461, %v621
        %623 = vmatprep.mubr.f32.mxu0 0.0
        %624 = vmatmul.mubr.f32.gmra.mxu0 %v402
        %v625 = vpop.f32.mrf.mxu0
        %v626 = vadd.f32 %v457, %v625
        %v627 = vpop.f32.mrf.mxu0
        %v628 = vadd.f32 %v461, %v627
        %629 = vdwg.mxu0
        %630 = vmatprep.subr.mxu0 0.0
        %631 = vmatpush1.msra.mxu0 %v451
        %632 = vmatprep.subr.mxu0 0.0
        %633 = vmatpush1.msra.mxu0 %v448
        %634 = vmatprep.subr.mxu0 0.0
        %635 = vmatpush1.msra.mxu0 %v445
        %636 = vmatprep.subr.mxu0 0.0
        %637 = vmatpush1.msra.mxu0 %v442
        %638 = vmatprep.subr.mxu0 0.0
        %639 = vmatpush1.msra.mxu0 %v439
        %640 = vmatprep.subr.mxu0 0.0
        %641 = vmatpush1.msra.mxu0 %v436
        %642 = vmatprep.subr.mxu0 0.0
        %643 = vmatpush1.msra.mxu0 %v433
        %644 = vmatprep.subr.mxu0 0.0
        %645 = vmatpush1.msra.mxu0 %v430
        %646 = vmatprep.subr.mxu0 0.0
        %647 = vmatpush1.msra.mxu0 %v427
        %648 = vmatprep.subr.mxu0 0.0
        %649 = vmatpush1.msra.mxu0 %v424
        %650 = vmatprep.subr.mxu0 0.0
        %651 = vmatpush1.msra.mxu0 %v421
        %652 = vmatprep.subr.mxu0 0.0
        %653 = vmatpush1.msra.mxu0 %v418
        %654 = vmatprep.subr.mxu0 0.0
        %655 = vmatpush1.msra.mxu0 %v415
        %656 = vmatprep.subr.mxu0 0.0
        %657 = vmatpush1.msra.mxu0 %v412
        %658 = vmatprep.subr.mxu0 0.0
        %659 = vmatpush1.msra.mxu0 %v409
        %660 = vmatprep.subr.mxu0 0.0
        %661 = vmatpush1.msra.mxu0 %v406
        %662 = vmatprep.subr.mxu0 0.0
        %663 = vmatpush2.msra.mxu0 0.0
        %664 = vmatprep.subr.mxu0 0.0
        %665 = vmatpush2.msra.mxu0 0.0
        %666 = vmatprep.subr.mxu0 0.0
        %667 = vmatpush2.msra.mxu0 0.0
        %668 = vmatprep.subr.mxu0 0.0
        %669 = vmatpush2.msra.mxu0 0.0
        %670 = vmatprep.subr.mxu0 0.0
        %671 = vmatpush2.msra.mxu0 0.0
        %672 = vmatprep.subr.mxu0 0.0
        %673 = vmatpush2.msra.mxu0 0.0
        %674 = vmatprep.subr.mxu0 0.0
        %675 = vmatpush2.msra.mxu0 0.0
        %676 = vmatprep.subr.mxu0 0.0
        %677 = vmatpush2.msra.mxu0 0.0
        %678 = vmatprep.subr.mxu0 0.0
        %679 = vmatpush2.msra.mxu0 0.0
        %680 = vmatprep.subr.mxu0 0.0
        %681 = vmatpush2.msra.mxu0 0.0
        %682 = vmatprep.subr.mxu0 0.0
        %683 = vmatpush2.msra.mxu0 0.0
        %684 = vmatprep.subr.mxu0 0.0
        %685 = vmatpush2.msra.mxu0 0.0
        %686 = vmatprep.subr.mxu0 0.0
        %687 = vmatpush2.msra.mxu0 0.0
        %688 = vmatprep.subr.mxu0 0.0
        %689 = vmatpush2.msra.mxu0 0.0
        %690 = vmatprep.subr.mxu0 0.0
        %691 = vmatpush2.msra.mxu0 0.0
        %692 = vmatprep.subr.mxu0 0.0
        %693 = vmatpush2.msra.mxu0 0.0
        %694 = vmatprep.mubr.f32.mxu0 0.0
        %695 = vmatmul.mubr.f32.gmra.mxu0 %v387
        %v696 = vpop.f32.mrf.mxu0
        %v697 = vadd.f32 %v465, %v696
        %v698 = vpop.f32.mrf.mxu0
        %699 = vmatprep.mubr.f32.mxu0 0.0
        %700 = vmatmul.mubr.f32.gmra.mxu0 %v388
        %v701 = vpop.f32.mrf.mxu0
        %v702 = vadd.f32 %v465, %v701
        %v703 = vpop.f32.mrf.mxu0
        %704 = vmatprep.mubr.f32.mxu0 0.0
        %705 = vmatmul.mubr.f32.gmra.mxu0 %v389
        %v706 = vpop.f32.mrf.mxu0
        %v707 = vadd.f32 %v465, %v706
        %v708 = vpop.f32.mrf.mxu0
        %709 = vmatprep.mubr.f32.mxu0 0.0
        %710 = vmatmul.mubr.f32.gmra.mxu0 %v390
        %v711 = vpop.f32.mrf.mxu0
        %v712 = vadd.f32 %v465, %v711
        %v713 = vpop.f32.mrf.mxu0
        %714 = vmatprep.mubr.f32.mxu0 0.0
        %715 = vmatmul.mubr.f32.gmra.mxu0 %v391
        %v716 = vpop.f32.mrf.mxu0
        %v717 = vadd.f32 %v465, %v716
        %v718 = vpop.f32.mrf.mxu0
        %719 = vmatprep.mubr.f32.mxu0 0.0
        %720 = vmatmul.mubr.f32.gmra.mxu0 %v392
        %v721 = vpop.f32.mrf.mxu0
        %v722 = vadd.f32 %v465, %v721
        %v723 = vpop.f32.mrf.mxu0
        %724 = vmatprep.mubr.f32.mxu0 0.0
        %725 = vmatmul.mubr.f32.gmra.mxu0 %v393
        %v726 = vpop.f32.mrf.mxu0
        %v727 = vadd.f32 %v465, %v726
        %v728 = vpop.f32.mrf.mxu0
        %729 = vmatprep.mubr.f32.mxu0 0.0
        %730 = vmatmul.mubr.f32.gmra.mxu0 %v394
        %v731 = vpop.f32.mrf.mxu0
        %v732 = vadd.f32 %v465, %v731
        %v733 = vpop.f32.mrf.mxu0
        %734 = vmatprep.mubr.f32.mxu0 0.0
        %735 = vmatmul.mubr.f32.gmra.mxu0 %v395
        %v736 = vpop.f32.mrf.mxu0
        %v737 = vadd.f32 %v465, %v736
        %v738 = vpop.f32.mrf.mxu0
        %739 = vmatprep.mubr.f32.mxu0 0.0
        %740 = vmatmul.mubr.f32.gmra.mxu0 %v396
        %v741 = vpop.f32.mrf.mxu0
        %v742 = vadd.f32 %v465, %v741
        %v743 = vpop.f32.mrf.mxu0
        %744 = vmatprep.mubr.f32.mxu0 0.0
        %745 = vmatmul.mubr.f32.gmra.mxu0 %v397
        %v746 = vpop.f32.mrf.mxu0
        %v747 = vadd.f32 %v465, %v746
        %v748 = vpop.f32.mrf.mxu0
        %749 = vmatprep.mubr.f32.mxu0 0.0
        %750 = vmatmul.mubr.f32.gmra.mxu0 %v398
        %v751 = vpop.f32.mrf.mxu0
        %v752 = vadd.f32 %v465, %v751
        %v753 = vpop.f32.mrf.mxu0
        %754 = vmatprep.mubr.f32.mxu0 0.0
        %755 = vmatmul.mubr.f32.gmra.mxu0 %v399
        %v756 = vpop.f32.mrf.mxu0
        %v757 = vadd.f32 %v465, %v756
        %v758 = vpop.f32.mrf.mxu0
        %759 = vmatprep.mubr.f32.mxu0 0.0
        %760 = vmatmul.mubr.f32.gmra.mxu0 %v400
        %v761 = vpop.f32.mrf.mxu0
        %v762 = vadd.f32 %v465, %v761
        %v763 = vpop.f32.mrf.mxu0
        %764 = vmatprep.mubr.f32.mxu0 0.0
        %765 = vmatmul.mubr.f32.gmra.mxu0 %v401
        %v766 = vpop.f32.mrf.mxu0
        %v767 = vadd.f32 %v465, %v766
        %v768 = vpop.f32.mrf.mxu0
        %769 = vmatprep.mubr.f32.mxu0 0.0
        %770 = vmatmul.mubr.f32.gmra.mxu0 %v402
        %v771 = vpop.f32.mrf.mxu0
        %v772 = vadd.f32 %v465, %v771
        %v773 = vpop.f32.mrf.mxu0
        %774 = vdwg.mxu0
        %vm775 = vcmask 261120
        %v777 = vsel %vm775, %v536, 0
        %v780 = vsel %vm775, %v542, 0
        %v783 = vsel %vm775, %v548, 0
        %v786 = vsel %vm775, %v554, 0
        %v789 = vsel %vm775, %v560, 0
        %v792 = vsel %vm775, %v566, 0
        %v795 = vsel %vm775, %v572, 0
        %v798 = vsel %vm775, %v578, 0
        %v801 = vsel %vm775, %v584, 0
        %v804 = vsel %vm775, %v590, 0
        %v807 = vsel %vm775, %v596, 0
        %v810 = vsel %vm775, %v602, 0
        %v813 = vsel %vm775, %v608, 0
        %v816 = vsel %vm775, %v614, 0
        %v819 = vsel %vm775, %v620, 0
        %v822 = vsel %vm775, %v626, 0
        %v825 = vsel %vm775, %v538, 0
        %v828 = vsel %vm775, %v544, 0
        %v831 = vsel %vm775, %v550, 0
        %v834 = vsel %vm775, %v556, 0
        %v837 = vsel %vm775, %v562, 0
        %v840 = vsel %vm775, %v568, 0
        %v843 = vsel %vm775, %v574, 0
        %v846 = vsel %vm775, %v580, 0
        %v849 = vsel %vm775, %v586, 0
        %v852 = vsel %vm775, %v592, 0
        %v855 = vsel %vm775, %v598, 0
        %v858 = vsel %vm775, %v604, 0
        %v861 = vsel %vm775, %v610, 0
        %v864 = vsel %vm775, %v616, 0
        %v867 = vsel %vm775, %v622, 0
        %v870 = vsel %vm775, %v628, 0
        %872 = vmatprep.subr.mxu0 0.0
        %873 = vmatpush1.xpose.msra.mxu0 %v870
        %874 = vmatprep.subr.mxu0 0.0
        %875 = vmatpush1.xpose.msra.mxu0 %v867
        %876 = vmatprep.subr.mxu0 0.0
        %877 = vmatpush1.xpose.msra.mxu0 %v864
        %878 = vmatprep.subr.mxu0 0.0
        %879 = vmatpush1.xpose.msra.mxu0 %v861
        %880 = vmatprep.subr.mxu0 0.0
        %881 = vmatpush1.xpose.msra.mxu0 %v858
        %882 = vmatprep.subr.mxu0 0.0
        %883 = vmatpush1.xpose.msra.mxu0 %v855
        %884 = vmatprep.subr.mxu0 0.0
        %885 = vmatpush1.xpose.msra.mxu0 %v852
        %886 = vmatprep.subr.mxu0 0.0
        %887 = vmatpush1.xpose.msra.mxu0 %v849
        %888 = vmatprep.subr.mxu0 0.0
        %889 = vmatpush1.xpose.msra.mxu0 %v846
        %890 = vmatprep.subr.mxu0 0.0
        %891 = vmatpush1.xpose.msra.mxu0 %v843
        %892 = vmatprep.subr.mxu0 0.0
        %893 = vmatpush1.xpose.msra.mxu0 %v840
        %894 = vmatprep.subr.mxu0 0.0
        %895 = vmatpush1.xpose.msra.mxu0 %v837
        %896 = vmatprep.subr.mxu0 0.0
        %897 = vmatpush1.xpose.msra.mxu0 %v834
        %898 = vmatprep.subr.mxu0 0.0
        %899 = vmatpush1.xpose.msra.mxu0 %v831
        %900 = vmatprep.subr.mxu0 0.0
        %901 = vmatpush1.xpose.msra.mxu0 %v828
        %902 = vmatprep.subr.mxu0 0.0
        %903 = vmatpush1.xpose.msra.mxu0 %v825
        %904 = vmatprep.subr.mxu0 0.0
        %905 = vmatpush2.xpose.msra.mxu0 0.0
        %906 = vmatprep.subr.mxu0 0.0
        %907 = vmatpush2.xpose.msra.mxu0 0.0
        %908 = vmatprep.subr.mxu0 0.0
        %909 = vmatpush2.xpose.msra.mxu0 0.0
        %910 = vmatprep.subr.mxu0 0.0
        %911 = vmatpush2.xpose.msra.mxu0 0.0
        %912 = vmatprep.subr.mxu0 0.0
        %913 = vmatpush2.xpose.msra.mxu0 0.0
        %914 = vmatprep.subr.mxu0 0.0
        %915 = vmatpush2.xpose.msra.mxu0 0.0
        %916 = vmatprep.subr.mxu0 0.0
        %917 = vmatpush2.xpose.msra.mxu0 0.0
        %918 = vmatprep.subr.mxu0 0.0
        %919 = vmatpush2.xpose.msra.mxu0 0.0
        %920 = vmatprep.subr.mxu0 0.0
        %921 = vmatpush2.xpose.msra.mxu0 0.0
        %922 = vmatprep.subr.mxu0 0.0
        %923 = vmatpush2.xpose.msra.mxu0 0.0
        %924 = vmatprep.subr.mxu0 0.0
        %925 = vmatpush2.xpose.msra.mxu0 0.0
        %926 = vmatprep.subr.mxu0 0.0
        %927 = vmatpush2.xpose.msra.mxu0 0.0
        %928 = vmatprep.subr.mxu0 0.0
        %929 = vmatpush2.xpose.msra.mxu0 0.0
        %930 = vmatprep.subr.mxu0 0.0
        %931 = vmatpush2.xpose.msra.mxu0 0.0
        %932 = vmatprep.subr.mxu0 0.0
        %933 = vmatpush2.xpose.msra.mxu0 0.0
        %934 = vmatprep.subr.mxu0 0.0
        %935 = vmatpush2.xpose.msra.mxu0 0.0
        %936 = vmatprep.mubr.f32.mxu0 0.0
        %937 = vmatmul.mubr.f32.gmra.mxu0 %v777
        %v938 = vpop.f32.mrf.mxu0
        %v939 = vadd.f32 0.0, %v938
        %v940 = vpop.f32.mrf.mxu0
        %941 = vmatprep.mubr.f32.mxu0 0.0
        %942 = vmatmul.mubr.f32.gmra.mxu0 %v780
        %v943 = vpop.f32.mrf.mxu0
        %v944 = vadd.f32 0.0, %v943
        %v945 = vpop.f32.mrf.mxu0
        %946 = vmatprep.mubr.f32.mxu0 0.0
        %947 = vmatmul.mubr.f32.gmra.mxu0 %v783
        %v948 = vpop.f32.mrf.mxu0
        %v949 = vadd.f32 0.0, %v948
        %v950 = vpop.f32.mrf.mxu0
        %951 = vmatprep.mubr.f32.mxu0 0.0
        %952 = vmatmul.mubr.f32.gmra.mxu0 %v786
        %v953 = vpop.f32.mrf.mxu0
        %v954 = vadd.f32 0.0, %v953
        %v955 = vpop.f32.mrf.mxu0
        %956 = vmatprep.mubr.f32.mxu0 0.0
        %957 = vmatmul.mubr.f32.gmra.mxu0 %v789
        %v958 = vpop.f32.mrf.mxu0
        %v959 = vadd.f32 0.0, %v958
        %v960 = vpop.f32.mrf.mxu0
        %961 = vmatprep.mubr.f32.mxu0 0.0
        %962 = vmatmul.mubr.f32.gmra.mxu0 %v792
        %v963 = vpop.f32.mrf.mxu0
        %v964 = vadd.f32 0.0, %v963
        %v965 = vpop.f32.mrf.mxu0
        %966 = vmatprep.mubr.f32.mxu0 0.0
        %967 = vmatmul.mubr.f32.gmra.mxu0 %v795
        %v968 = vpop.f32.mrf.mxu0
        %v969 = vadd.f32 0.0, %v968
        %v970 = vpop.f32.mrf.mxu0
        %971 = vmatprep.mubr.f32.mxu0 0.0
        %972 = vmatmul.mubr.f32.gmra.mxu0 %v798
        %v973 = vpop.f32.mrf.mxu0
        %v974 = vadd.f32 0.0, %v973
        %v975 = vpop.f32.mrf.mxu0
        %976 = vmatprep.mubr.f32.mxu0 0.0
        %977 = vmatmul.mubr.f32.gmra.mxu0 %v801
        %v978 = vpop.f32.mrf.mxu0
        %v979 = vadd.f32 0.0, %v978
        %v980 = vpop.f32.mrf.mxu0
        %981 = vmatprep.mubr.f32.mxu0 0.0
        %982 = vmatmul.mubr.f32.gmra.mxu0 %v804
        %v983 = vpop.f32.mrf.mxu0
        %v984 = vadd.f32 0.0, %v983
        %v985 = vpop.f32.mrf.mxu0
        %986 = vmatprep.mubr.f32.mxu0 0.0
        %987 = vmatmul.mubr.f32.gmra.mxu0 %v807
        %v988 = vpop.f32.mrf.mxu0
        %v989 = vadd.f32 0.0, %v988
        %v990 = vpop.f32.mrf.mxu0
        %991 = vmatprep.mubr.f32.mxu0 0.0
        %992 = vmatmul.mubr.f32.gmra.mxu0 %v810
        %v993 = vpop.f32.mrf.mxu0
        %v994 = vadd.f32 0.0, %v993
        %v995 = vpop.f32.mrf.mxu0
        %996 = vmatprep.mubr.f32.mxu0 0.0
        %997 = vmatmul.mubr.f32.gmra.mxu0 %v813
        %v998 = vpop.f32.mrf.mxu0
        %v999 = vadd.f32 0.0, %v998
        %v1000 = vpop.f32.mrf.mxu0
        %1001 = vmatprep.mubr.f32.mxu0 0.0
        %1002 = vmatmul.mubr.f32.gmra.mxu0 %v816
        %v1003 = vpop.f32.mrf.mxu0
        %v1004 = vadd.f32 0.0, %v1003
        %v1005 = vpop.f32.mrf.mxu0
        %1006 = vmatprep.mubr.f32.mxu0 0.0
        %1007 = vmatmul.mubr.f32.gmra.mxu0 %v819
        %v1008 = vpop.f32.mrf.mxu0
        %v1009 = vadd.f32 0.0, %v1008
        %v1010 = vpop.f32.mrf.mxu0
        %1011 = vmatprep.mubr.f32.mxu0 0.0
        %1012 = vmatmul.mubr.f32.gmra.mxu0 %v822
        %v1013 = vpop.f32.mrf.mxu0
        %v1014 = vadd.f32 0.0, %v1013
        %v1015 = vpop.f32.mrf.mxu0
        %1016 = vdwg.mxu0
        %v1017 = vmul.f32 %v939, 0.17677669
        %v1018 = vmul.f32 %v944, 0.17677669
        %v1019 = vmul.f32 %v949, 0.17677669
        %v1020 = vmul.f32 %v954, 0.17677669
        %v1021 = vmul.f32 %v959, 0.17677669
        %v1022 = vmul.f32 %v964, 0.17677669
        %v1023 = vmul.f32 %v969, 0.17677669
        %v1024 = vmul.f32 %v974, 0.17677669
        %v1025 = vmul.f32 %v979, 0.17677669
        %v1026 = vmul.f32 %v984, 0.17677669
        %v1027 = vmul.f32 %v989, 0.17677669
        %v1028 = vmul.f32 %v994, 0.17677669
        %v1029 = vmul.f32 %v999, 0.17677669
        %v1030 = vmul.f32 %v1004, 0.17677669
        %v1031 = vmul.f32 %v1009, 0.17677669
        %v1032 = vmul.f32 %v1014, 0.17677669
        %v1034 = vlaneseq
        %v1035 = vshrl.u32 %v1034, 7
        %v1036 = vsub.s32 0, %v1035
        %v1037 = vrot.slane %v403, %v1036
        %v1039 = vadd.f32 %v1017, %v1037
        %v1040 = vadd.f32 %v1018, %v1037
        %v1041 = vadd.f32 %v1019, %v1037
        %v1042 = vadd.f32 %v1020, %v1037
        %v1043 = vadd.f32 %v1021, %v1037
        %v1044 = vadd.f32 %v1022, %v1037
        %v1045 = vadd.f32 %v1023, %v1037
        %v1046 = vadd.f32 %v1024, %v1037
        %v1047 = vadd.f32 %v1025, %v1037
        %v1048 = vadd.f32 %v1026, %v1037
        %v1049 = vadd.f32 %v1027, %v1037
        %v1050 = vadd.f32 %v1028, %v1037
        %v1051 = vadd.f32 %v1029, %v1037
        %v1052 = vadd.f32 %v1030, %v1037
        %v1053 = vadd.f32 %v1031, %v1037
        %v1054 = vadd.f32 %v1032, %v1037
        %1055 = vmax.xlane.f32.xlu0 %v1039
        %v1056 = vpop.xlane.xlu0 %1055
        %1057 = vmax.xlane.f32.xlu0 %v1040
        %v1058 = vpop.xlane.xlu0 %1057
        %1059 = vmax.xlane.f32.xlu0 %v1041
        %v1060 = vpop.xlane.xlu0 %1059
        %1061 = vmax.xlane.f32.xlu0 %v1042
        %v1062 = vpop.xlane.xlu0 %1061
        %1063 = vmax.xlane.f32.xlu0 %v1043
        %v1064 = vpop.xlane.xlu0 %1063
        %1065 = vmax.xlane.f32.xlu0 %v1044
        %v1066 = vpop.xlane.xlu0 %1065
        %1067 = vmax.xlane.f32.xlu0 %v1045
        %v1068 = vpop.xlane.xlu0 %1067
        %1069 = vmax.xlane.f32.xlu0 %v1046
        %v1070 = vpop.xlane.xlu0 %1069
        %1071 = vmax.xlane.f32.xlu0 %v1047
        %v1072 = vpop.xlane.xlu0 %1071
        %1073 = vmax.xlane.f32.xlu0 %v1048
        %v1074 = vpop.xlane.xlu0 %1073
        %1075 = vmax.xlane.f32.xlu0 %v1049
        %v1076 = vpop.xlane.xlu0 %1075
        %1077 = vmax.xlane.f32.xlu0 %v1050
        %v1078 = vpop.xlane.xlu0 %1077
        %1079 = vmax.xlane.f32.xlu0 %v1051
        %v1080 = vpop.xlane.xlu0 %1079
        %1081 = vmax.xlane.f32.xlu0 %v1052
        %v1082 = vpop.xlane.xlu0 %1081
        %1083 = vmax.xlane.f32.xlu0 %v1053
        %v1084 = vpop.xlane.xlu0 %1083
        %1085 = vmax.xlane.f32.xlu0 %v1054
        %v1086 = vpop.xlane.xlu0 %1085
        %v1087 = vsub.f32 %v1039, %v1056
        %v1088 = vsub.f32 %v1040, %v1058
        %v1089 = vsub.f32 %v1041, %v1060
        %v1090 = vsub.f32 %v1042, %v1062
        %v1091 = vsub.f32 %v1043, %v1064
        %v1092 = vsub.f32 %v1044, %v1066
        %v1093 = vsub.f32 %v1045, %v1068
        %v1094 = vsub.f32 %v1046, %v1070
        %v1095 = vsub.f32 %v1047, %v1072
        %v1096 = vsub.f32 %v1048, %v1074
        %v1097 = vsub.f32 %v1049, %v1076
        %v1098 = vsub.f32 %v1050, %v1078
        %v1099 = vsub.f32 %v1051, %v1080
        %v1100 = vsub.f32 %v1052, %v1082
        %v1101 = vsub.f32 %v1053, %v1084
        %v1102 = vsub.f32 %v1054, %v1086
        %v1103 = vmul.f32 %v1087, 1.442695
        %v1104 = vpow.pop %v1103
        %v1105 = vmul.f32 %v1088, 1.442695
        %v1106 = vpow.pop %v1105
        %v1107 = vmul.f32 %v1089, 1.442695
        %v1108 = vpow.pop %v1107
        %v1109 = vmul.f32 %v1090, 1.442695
        %v1110 = vpow.pop %v1109
        %v1111 = vmul.f32 %v1091, 1.442695
        %v1112 = vpow.pop %v1111
        %v1113 = vmul.f32 %v1092, 1.442695
        %v1114 = vpow.pop %v1113
        %v1115 = vmul.f32 %v1093, 1.442695
        %v1116 = vpow.pop %v1115
        %v1117 = vmul.f32 %v1094, 1.442695
        %v1118 = vpow.pop %v1117
        %v1119 = vmul.f32 %v1095, 1.442695
        %v1120 = vpow.pop %v1119
        %v1121 = vmul.f32 %v1096, 1.442695
        %v1122 = vpow.pop %v1121
        %v1123 = vmul.f32 %v1097, 1.442695
        %v1124 = vpow.pop %v1123
        %v1125 = vmul.f32 %v1098, 1.442695
        %v1126 = vpow.pop %v1125
        %v1127 = vmul.f32 %v1099, 1.442695
        %v1128 = vpow.pop %v1127
        %v1129 = vmul.f32 %v1100, 1.442695
        %v1130 = vpow.pop %v1129
        %v1131 = vmul.f32 %v1101, 1.442695
        %v1132 = vpow.pop %v1131
        %v1133 = vmul.f32 %v1102, 1.442695
        %v1134 = vpow.pop %v1133
        %1135 = vadd.xlane.f32.xlu0 %v1104
        %v1136 = vpop.xlane.xlu0 %1135
        %1137 = vadd.xlane.f32.xlu0 %v1106
        %v1138 = vpop.xlane.xlu0 %1137
        %1139 = vadd.xlane.f32.xlu0 %v1108
        %v1140 = vpop.xlane.xlu0 %1139
        %1141 = vadd.xlane.f32.xlu0 %v1110
        %v1142 = vpop.xlane.xlu0 %1141
        %1143 = vadd.xlane.f32.xlu0 %v1112
        %v1144 = vpop.xlane.xlu0 %1143
        %1145 = vadd.xlane.f32.xlu0 %v1114
        %v1146 = vpop.xlane.xlu0 %1145
        %1147 = vadd.xlane.f32.xlu0 %v1116
        %v1148 = vpop.xlane.xlu0 %1147
        %1149 = vadd.xlane.f32.xlu0 %v1118
        %v1150 = vpop.xlane.xlu0 %1149
        %1151 = vadd.xlane.f32.xlu0 %v1120
        %v1152 = vpop.xlane.xlu0 %1151
        %1153 = vadd.xlane.f32.xlu0 %v1122
        %v1154 = vpop.xlane.xlu0 %1153
        %1155 = vadd.xlane.f32.xlu0 %v1124
        %v1156 = vpop.xlane.xlu0 %1155
        %1157 = vadd.xlane.f32.xlu0 %v1126
        %v1158 = vpop.xlane.xlu0 %1157
        %1159 = vadd.xlane.f32.xlu0 %v1128
        %v1160 = vpop.xlane.xlu0 %1159
        %1161 = vadd.xlane.f32.xlu0 %v1130
        %v1162 = vpop.xlane.xlu0 %1161
        %1163 = vadd.xlane.f32.xlu0 %v1132
        %v1164 = vpop.xlane.xlu0 %1163
        %1165 = vadd.xlane.f32.xlu0 %v1134
        %v1166 = vpop.xlane.xlu0 %1165
        %v1167 = vrcp.pop %v1136
        %v1168 = vmul.f32 %v1104, %v1167
        %v1169 = vrcp.pop %v1138
        %v1170 = vmul.f32 %v1106, %v1169
        %v1171 = vrcp.pop %v1140
        %v1172 = vmul.f32 %v1108, %v1171
        %v1173 = vrcp.pop %v1142
        %v1174 = vmul.f32 %v1110, %v1173
        %v1175 = vrcp.pop %v1144
        %v1176 = vmul.f32 %v1112, %v1175
        %v1177 = vrcp.pop %v1146
        %v1178 = vmul.f32 %v1114, %v1177
        %v1179 = vrcp.pop %v1148
        %v1180 = vmul.f32 %v1116, %v1179
        %v1181 = vrcp.pop %v1150
        %v1182 = vmul.f32 %v1118, %v1181
        %v1183 = vrcp.pop %v1152
        %v1184 = vmul.f32 %v1120, %v1183
        %v1185 = vrcp.pop %v1154
        %v1186 = vmul.f32 %v1122, %v1185
        %v1187 = vrcp.pop %v1156
        %v1188 = vmul.f32 %v1124, %v1187
        %v1189 = vrcp.pop %v1158
        %v1190 = vmul.f32 %v1126, %v1189
        %v1191 = vrcp.pop %v1160
        %v1192 = vmul.f32 %v1128, %v1191
        %v1193 = vrcp.pop %v1162
        %v1194 = vmul.f32 %v1130, %v1193
        %v1195 = vrcp.pop %v1164
        %v1196 = vmul.f32 %v1132, %v1195
        %v1197 = vrcp.pop %v1166
        %v1198 = vmul.f32 %v1134, %v1197
        %1199 = vmatprep.subr.mxu0 0.0
        %1200 = vmatpush1.msra.mxu0 %v772
        %1201 = vmatprep.subr.mxu0 0.0
        %1202 = vmatpush1.msra.mxu0 %v767
        %1203 = vmatprep.subr.mxu0 0.0
        %1204 = vmatpush1.msra.mxu0 %v762
        %1205 = vmatprep.subr.mxu0 0.0
        %1206 = vmatpush1.msra.mxu0 %v757
        %1207 = vmatprep.subr.mxu0 0.0
        %1208 = vmatpush1.msra.mxu0 %v752
        %1209 = vmatprep.subr.mxu0 0.0
        %1210 = vmatpush1.msra.mxu0 %v747
        %1211 = vmatprep.subr.mxu0 0.0
        %1212 = vmatpush1.msra.mxu0 %v742
        %1213 = vmatprep.subr.mxu0 0.0
        %1214 = vmatpush1.msra.mxu0 %v737
        %1215 = vmatprep.subr.mxu0 0.0
        %1216 = vmatpush1.msra.mxu0 %v732
        %1217 = vmatprep.subr.mxu0 0.0
        %1218 = vmatpush1.msra.mxu0 %v727
        %1219 = vmatprep.subr.mxu0 0.0
        %1220 = vmatpush1.msra.mxu0 %v722
        %1221 = vmatprep.subr.mxu0 0.0
        %1222 = vmatpush1.msra.mxu0 %v717
        %1223 = vmatprep.subr.mxu0 0.0
        %1224 = vmatpush1.msra.mxu0 %v712
        %1225 = vmatprep.subr.mxu0 0.0
        %1226 = vmatpush1.msra.mxu0 %v707
        %1227 = vmatprep.subr.mxu0 0.0
        %1228 = vmatpush1.msra.mxu0 %v702
        %1229 = vmatprep.subr.mxu0 0.0
        %1230 = vmatpush1.msra.mxu0 %v697
        %1231 = vmatprep.subr.mxu0 0.0
        %1232 = vmatpush2.msra.mxu0 0.0
        %1233 = vmatprep.subr.mxu0 0.0
        %1234 = vmatpush2.msra.mxu0 0.0
        %1235 = vmatprep.subr.mxu0 0.0
        %1236 = vmatpush2.msra.mxu0 0.0
        %1237 = vmatprep.subr.mxu0 0.0
        %1238 = vmatpush2.msra.mxu0 0.0
        %1239 = vmatprep.subr.mxu0 0.0
        %1240 = vmatpush2.msra.mxu0 0.0
        %1241 = vmatprep.subr.mxu0 0.0
        %1242 = vmatpush2.msra.mxu0 0.0
        %1243 = vmatprep.subr.mxu0 0.0
        %1244 = vmatpush2.msra.mxu0 0.0
        %1245 = vmatprep.subr.mxu0 0.0
        %1246 = vmatpush2.msra.mxu0 0.0
        %1247 = vmatprep.subr.mxu0 0.0
        %1248 = vmatpush2.msra.mxu0 0.0
        %1249 = vmatprep.subr.mxu0 0.0
        %1250 = vmatpush2.msra.mxu0 0.0
        %1251 = vmatprep.subr.mxu0 0.0
        %1252 = vmatpush2.msra.mxu0 0.0
        %1253 = vmatprep.subr.mxu0 0.0
        %1254 = vmatpush2.msra.mxu0 0.0
        %1255 = vmatprep.subr.mxu0 0.0
        %1256 = vmatpush2.msra.mxu0 0.0
        %1257 = vmatprep.subr.mxu0 0.0
        %1258 = vmatpush2.msra.mxu0 0.0
        %1259 = vmatprep.subr.mxu0 0.0
        %1260 = vmatpush2.msra.mxu0 0.0
        %1261 = vmatprep.subr.mxu0 0.0
        %1262 = vmatpush2.msra.mxu0 0.0
        %1263 = vmatprep.mubr.f32.mxu0 0.0
        %1264 = vmatmul.mubr.f32.gmra.mxu0 %v1168
        %v1265 = vpop.f32.mrf.mxu0
        %v1266 = vadd.f32 0.0, %v1265
        %v1267 = vpop.f32.mrf.mxu0
        %1268 = vmatprep.mubr.f32.mxu0 0.0
        %1269 = vmatmul.mubr.f32.gmra.mxu0 %v1170
        %v1270 = vpop.f32.mrf.mxu0
        %v1271 = vadd.f32 0.0, %v1270
        %v1272 = vpop.f32.mrf.mxu0
        %1273 = vmatprep.mubr.f32.mxu0 0.0
        %1274 = vmatmul.mubr.f32.gmra.mxu0 %v1172
        %v1275 = vpop.f32.mrf.mxu0
        %v1276 = vadd.f32 0.0, %v1275
        %v1277 = vpop.f32.mrf.mxu0
        %1278 = vmatprep.mubr.f32.mxu0 0.0
        %1279 = vmatmul.mubr.f32.gmra.mxu0 %v1174
        %v1280 = vpop.f32.mrf.mxu0
        %v1281 = vadd.f32 0.0, %v1280
        %v1282 = vpop.f32.mrf.mxu0
        %1283 = vmatprep.mubr.f32.mxu0 0.0
        %1284 = vmatmul.mubr.f32.gmra.mxu0 %v1176
        %v1285 = vpop.f32.mrf.mxu0
        %v1286 = vadd.f32 0.0, %v1285
        %v1287 = vpop.f32.mrf.mxu0
        %1288 = vmatprep.mubr.f32.mxu0 0.0
        %1289 = vmatmul.mubr.f32.gmra.mxu0 %v1178
        %v1290 = vpop.f32.mrf.mxu0
        %v1291 = vadd.f32 0.0, %v1290
        %v1292 = vpop.f32.mrf.mxu0
        %1293 = vmatprep.mubr.f32.mxu0 0.0
        %1294 = vmatmul.mubr.f32.gmra.mxu0 %v1180
        %v1295 = vpop.f32.mrf.mxu0
        %v1296 = vadd.f32 0.0, %v1295
        %v1297 = vpop.f32.mrf.mxu0
        %1298 = vmatprep.mubr.f32.mxu0 0.0
        %1299 = vmatmul.mubr.f32.gmra.mxu0 %v1182
        %v1300 = vpop.f32.mrf.mxu0
        %v1301 = vadd.f32 0.0, %v1300
        %v1302 = vpop.f32.mrf.mxu0
        %1303 = vmatprep.mubr.f32.mxu0 0.0
        %1304 = vmatmul.mubr.f32.gmra.mxu0 %v1184
        %v1305 = vpop.f32.mrf.mxu0
        %v1306 = vadd.f32 0.0, %v1305
        %v1307 = vpop.f32.mrf.mxu0
        %1308 = vmatprep.mubr.f32.mxu0 0.0
        %1309 = vmatmul.mubr.f32.gmra.mxu0 %v1186
        %v1310 = vpop.f32.mrf.mxu0
        %v1311 = vadd.f32 0.0, %v1310
        %v1312 = vpop.f32.mrf.mxu0
        %1313 = vmatprep.mubr.f32.mxu0 0.0
        %1314 = vmatmul.mubr.f32.gmra.mxu0 %v1188
        %v1315 = vpop.f32.mrf.mxu0
        %v1316 = vadd.f32 0.0, %v1315
        %v1317 = vpop.f32.mrf.mxu0
        %1318 = vmatprep.mubr.f32.mxu0 0.0
        %1319 = vmatmul.mubr.f32.gmra.mxu0 %v1190
        %v1320 = vpop.f32.mrf.mxu0
        %v1321 = vadd.f32 0.0, %v1320
        %v1322 = vpop.f32.mrf.mxu0
        %1323 = vmatprep.mubr.f32.mxu0 0.0
        %1324 = vmatmul.mubr.f32.gmra.mxu0 %v1192
        %v1325 = vpop.f32.mrf.mxu0
        %v1326 = vadd.f32 0.0, %v1325
        %v1327 = vpop.f32.mrf.mxu0
        %1328 = vmatprep.mubr.f32.mxu0 0.0
        %1329 = vmatmul.mubr.f32.gmra.mxu0 %v1194
        %v1330 = vpop.f32.mrf.mxu0
        %v1331 = vadd.f32 0.0, %v1330
        %v1332 = vpop.f32.mrf.mxu0
        %1333 = vmatprep.mubr.f32.mxu0 0.0
        %1334 = vmatmul.mubr.f32.gmra.mxu0 %v1196
        %v1335 = vpop.f32.mrf.mxu0
        %v1336 = vadd.f32 0.0, %v1335
        %v1337 = vpop.f32.mrf.mxu0
        %1338 = vmatprep.mubr.f32.mxu0 0.0
        %1339 = vmatmul.mubr.f32.gmra.mxu0 %v1198
        %v1340 = vpop.f32.mrf.mxu0
        %v1341 = vadd.f32 0.0, %v1340
        %v1342 = vpop.f32.mrf.mxu0
        %1343 = vdwg.mxu0
        %1344 = vrot.lane.b32.xlu0 %v536, 96
        %v1345 = vpop.permute.xlu0 %1344
        %1346 = vrot.lane.b32.xlu0 %v542, 96
        %v1347 = vpop.permute.xlu0 %1346
        %1348 = vrot.lane.b32.xlu0 %v548, 96
        %v1349 = vpop.permute.xlu0 %1348
        %1350 = vrot.lane.b32.xlu0 %v554, 96
        %v1351 = vpop.permute.xlu0 %1350
        %1352 = vrot.lane.b32.xlu0 %v560, 96
        %v1353 = vpop.permute.xlu0 %1352
        %1354 = vrot.lane.b32.xlu0 %v566, 96
        %v1355 = vpop.permute.xlu0 %1354
        %1356 = vrot.lane.b32.xlu0 %v572, 96
        %v1357 = vpop.permute.xlu0 %1356
        %1358 = vrot.lane.b32.xlu0 %v578, 96
        %v1359 = vpop.permute.xlu0 %1358
        %1360 = vrot.lane.b32.xlu0 %v584, 96
        %v1361 = vpop.permute.xlu0 %1360
        %1362 = vrot.lane.b32.xlu0 %v590, 96
        %v1363 = vpop.permute.xlu0 %1362
        %1364 = vrot.lane.b32.xlu0 %v596, 96
        %v1365 = vpop.permute.xlu0 %1364
        %1366 = vrot.lane.b32.xlu0 %v602, 96
        %v1367 = vpop.permute.xlu0 %1366
        %1368 = vrot.lane.b32.xlu0 %v608, 96
        %v1369 = vpop.permute.xlu0 %1368
        %1370 = vrot.lane.b32.xlu0 %v614, 96
        %v1371 = vpop.permute.xlu0 %1370
        %1372 = vrot.lane.b32.xlu0 %v620, 96
        %v1373 = vpop.permute.xlu0 %1372
        %1374 = vrot.lane.b32.xlu0 %v626, 96
        %v1375 = vpop.permute.xlu0 %1374
        %1376 = vrot.lane.b32.xlu0 %v538, 96
        %v1377 = vpop.permute.xlu0 %1376
        %1378 = vrot.lane.b32.xlu0 %v544, 96
        %v1379 = vpop.permute.xlu0 %1378
        %1380 = vrot.lane.b32.xlu0 %v550, 96
        %v1381 = vpop.permute.xlu0 %1380
        %1382 = vrot.lane.b32.xlu0 %v556, 96
        %v1383 = vpop.permute.xlu0 %1382
        %1384 = vrot.lane.b32.xlu0 %v562, 96
        %v1385 = vpop.permute.xlu0 %1384
        %1386 = vrot.lane.b32.xlu0 %v568, 96
        %v1387 = vpop.permute.xlu0 %1386
        %1388 = vrot.lane.b32.xlu0 %v574, 96
        %v1389 = vpop.permute.xlu0 %1388
        %1390 = vrot.lane.b32.xlu0 %v580, 96
        %v1391 = vpop.permute.xlu0 %1390
        %1392 = vrot.lane.b32.xlu0 %v586, 96
        %v1393 = vpop.permute.xlu0 %1392
        %1394 = vrot.lane.b32.xlu0 %v592, 96
        %v1395 = vpop.permute.xlu0 %1394
        %1396 = vrot.lane.b32.xlu0 %v598, 96
        %v1397 = vpop.permute.xlu0 %1396
        %1398 = vrot.lane.b32.xlu0 %v604, 96
        %v1399 = vpop.permute.xlu0 %1398
        %1400 = vrot.lane.b32.xlu0 %v610, 96
        %v1401 = vpop.permute.xlu0 %1400
        %1402 = vrot.lane.b32.xlu0 %v616, 96
        %v1403 = vpop.permute.xlu0 %1402
        %1404 = vrot.lane.b32.xlu0 %v622, 96
        %v1405 = vpop.permute.xlu0 %1404
        %1406 = vrot.lane.b32.xlu0 %v628, 96
        %v1407 = vpop.permute.xlu0 %1406
        %v1408 = vsel %vm775, %v1345, 0
        %v1410 = vsel %vm775, %v1347, 0
        %v1412 = vsel %vm775, %v1349, 0
        %v1414 = vsel %vm775, %v1351, 0
        %v1416 = vsel %vm775, %v1353, 0
        %v1418 = vsel %vm775, %v1355, 0
        %v1420 = vsel %vm775, %v1357, 0
        %v1422 = vsel %vm775, %v1359, 0
        %v1424 = vsel %vm775, %v1361, 0
        %v1426 = vsel %vm775, %v1363, 0
        %v1428 = vsel %vm775, %v1365, 0
        %v1430 = vsel %vm775, %v1367, 0
        %v1432 = vsel %vm775, %v1369, 0
        %v1434 = vsel %vm775, %v1371, 0
        %v1436 = vsel %vm775, %v1373, 0
        %v1438 = vsel %vm775, %v1375, 0
        %v1440 = vsel %vm775, %v1377, 0
        %v1442 = vsel %vm775, %v1379, 0
        %v1444 = vsel %vm775, %v1381, 0
        %v1446 = vsel %vm775, %v1383, 0
        %v1448 = vsel %vm775, %v1385, 0
        %v1450 = vsel %vm775, %v1387, 0
        %v1452 = vsel %vm775, %v1389, 0
        %v1454 = vsel %vm775, %v1391, 0
        %v1456 = vsel %vm775, %v1393, 0
        %v1458 = vsel %vm775, %v1395, 0
        %v1460 = vsel %vm775, %v1397, 0
        %v1462 = vsel %vm775, %v1399, 0
        %v1464 = vsel %vm775, %v1401, 0
        %v1466 = vsel %vm775, %v1403, 0
        %v1468 = vsel %vm775, %v1405, 0
        %v1470 = vsel %vm775, %v1407, 0
        %1472 = vmatprep.subr.mxu0 0.0
        %1473 = vmatpush1.xpose.msra.mxu0 %v1470
        %1474 = vmatprep.subr.mxu0 0.0
        %1475 = vmatpush1.xpose.msra.mxu0 %v1468
        %1476 = vmatprep.subr.mxu0 0.0
        %1477 = vmatpush1.xpose.msra.mxu0 %v1466
        %1478 = vmatprep.subr.mxu0 0.0
        %1479 = vmatpush1.xpose.msra.mxu0 %v1464
        %1480 = vmatprep.subr.mxu0 0.0
        %1481 = vmatpush1.xpose.msra.mxu0 %v1462
        %1482 = vmatprep.subr.mxu0 0.0
        %1483 = vmatpush1.xpose.msra.mxu0 %v1460
        %1484 = vmatprep.subr.mxu0 0.0
        %1485 = vmatpush1.xpose.msra.mxu0 %v1458
        %1486 = vmatprep.subr.mxu0 0.0
        %1487 = vmatpush1.xpose.msra.mxu0 %v1456
        %1488 = vmatprep.subr.mxu0 0.0
        %1489 = vmatpush1.xpose.msra.mxu0 %v1454
        %1490 = vmatprep.subr.mxu0 0.0
        %1491 = vmatpush1.xpose.msra.mxu0 %v1452
        %1492 = vmatprep.subr.mxu0 0.0
        %1493 = vmatpush1.xpose.msra.mxu0 %v1450
        %1494 = vmatprep.subr.mxu0 0.0
        %1495 = vmatpush1.xpose.msra.mxu0 %v1448
        %1496 = vmatprep.subr.mxu0 0.0
        %1497 = vmatpush1.xpose.msra.mxu0 %v1446
        %1498 = vmatprep.subr.mxu0 0.0
        %1499 = vmatpush1.xpose.msra.mxu0 %v1444
        %1500 = vmatprep.subr.mxu0 0.0
        %1501 = vmatpush1.xpose.msra.mxu0 %v1442
        %1502 = vmatprep.subr.mxu0 0.0
        %1503 = vmatpush1.xpose.msra.mxu0 %v1440
        %1504 = vmatprep.subr.mxu0 0.0
        %1505 = vmatpush2.xpose.msra.mxu0 0.0
        %1506 = vmatprep.subr.mxu0 0.0
        %1507 = vmatpush2.xpose.msra.mxu0 0.0
        %1508 = vmatprep.subr.mxu0 0.0
        %1509 = vmatpush2.xpose.msra.mxu0 0.0
        %1510 = vmatprep.subr.mxu0 0.0
        %1511 = vmatpush2.xpose.msra.mxu0 0.0
        %1512 = vmatprep.subr.mxu0 0.0
        %1513 = vmatpush2.xpose.msra.mxu0 0.0
        %1514 = vmatprep.subr.mxu0 0.0
        %1515 = vmatpush2.xpose.msra.mxu0 0.0
        %1516 = vmatprep.subr.mxu0 0.0
        %1517 = vmatpush2.xpose.msra.mxu0 0.0
        %1518 = vmatprep.subr.mxu0 0.0
        %1519 = vmatpush2.xpose.msra.mxu0 0.0
        %1520 = vmatprep.subr.mxu0 0.0
        %1521 = vmatpush2.xpose.msra.mxu0 0.0
        %1522 = vmatprep.subr.mxu0 0.0
        %1523 = vmatpush2.xpose.msra.mxu0 0.0
        %1524 = vmatprep.subr.mxu0 0.0
        %1525 = vmatpush2.xpose.msra.mxu0 0.0
        %1526 = vmatprep.subr.mxu0 0.0
        %1527 = vmatpush2.xpose.msra.mxu0 0.0
        %1528 = vmatprep.subr.mxu0 0.0
        %1529 = vmatpush2.xpose.msra.mxu0 0.0
        %1530 = vmatprep.subr.mxu0 0.0
        %1531 = vmatpush2.xpose.msra.mxu0 0.0
        %1532 = vmatprep.subr.mxu0 0.0
        %1533 = vmatpush2.xpose.msra.mxu0 0.0
        %1534 = vmatprep.subr.mxu0 0.0
        %1535 = vmatpush2.xpose.msra.mxu0 0.0
        %1536 = vmatprep.mubr.f32.mxu0 0.0
        %1537 = vmatmul.mubr.f32.gmra.mxu0 %v1408
        %v1538 = vpop.f32.mrf.mxu0
        %v1539 = vadd.f32 0.0, %v1538
        %v1540 = vpop.f32.mrf.mxu0
        %1541 = vmatprep.mubr.f32.mxu0 0.0
        %1542 = vmatmul.mubr.f32.gmra.mxu0 %v1410
        %v1543 = vpop.f32.mrf.mxu0
        %v1544 = vadd.f32 0.0, %v1543
        %v1545 = vpop.f32.mrf.mxu0
        %1546 = vmatprep.mubr.f32.mxu0 0.0
        %1547 = vmatmul.mubr.f32.gmra.mxu0 %v1412
        %v1548 = vpop.f32.mrf.mxu0
        %v1549 = vadd.f32 0.0, %v1548
        %v1550 = vpop.f32.mrf.mxu0
        %1551 = vmatprep.mubr.f32.mxu0 0.0
        %1552 = vmatmul.mubr.f32.gmra.mxu0 %v1414
        %v1553 = vpop.f32.mrf.mxu0
        %v1554 = vadd.f32 0.0, %v1553
        %v1555 = vpop.f32.mrf.mxu0
        %1556 = vmatprep.mubr.f32.mxu0 0.0
        %1557 = vmatmul.mubr.f32.gmra.mxu0 %v1416
        %v1558 = vpop.f32.mrf.mxu0
        %v1559 = vadd.f32 0.0, %v1558
        %v1560 = vpop.f32.mrf.mxu0
        %1561 = vmatprep.mubr.f32.mxu0 0.0
        %1562 = vmatmul.mubr.f32.gmra.mxu0 %v1418
        %v1563 = vpop.f32.mrf.mxu0
        %v1564 = vadd.f32 0.0, %v1563
        %v1565 = vpop.f32.mrf.mxu0
        %1566 = vmatprep.mubr.f32.mxu0 0.0
        %1567 = vmatmul.mubr.f32.gmra.mxu0 %v1420
        %v1568 = vpop.f32.mrf.mxu0
        %v1569 = vadd.f32 0.0, %v1568
        %v1570 = vpop.f32.mrf.mxu0
        %1571 = vmatprep.mubr.f32.mxu0 0.0
        %1572 = vmatmul.mubr.f32.gmra.mxu0 %v1422
        %v1573 = vpop.f32.mrf.mxu0
        %v1574 = vadd.f32 0.0, %v1573
        %v1575 = vpop.f32.mrf.mxu0
        %1576 = vmatprep.mubr.f32.mxu0 0.0
        %1577 = vmatmul.mubr.f32.gmra.mxu0 %v1424
        %v1578 = vpop.f32.mrf.mxu0
        %v1579 = vadd.f32 0.0, %v1578
        %v1580 = vpop.f32.mrf.mxu0
        %1581 = vmatprep.mubr.f32.mxu0 0.0
        %1582 = vmatmul.mubr.f32.gmra.mxu0 %v1426
        %v1583 = vpop.f32.mrf.mxu0
        %v1584 = vadd.f32 0.0, %v1583
        %v1585 = vpop.f32.mrf.mxu0
        %1586 = vmatprep.mubr.f32.mxu0 0.0
        %1587 = vmatmul.mubr.f32.gmra.mxu0 %v1428
        %v1588 = vpop.f32.mrf.mxu0
        %v1589 = vadd.f32 0.0, %v1588
        %v1590 = vpop.f32.mrf.mxu0
        %1591 = vmatprep.mubr.f32.mxu0 0.0
        %1592 = vmatmul.mubr.f32.gmra.mxu0 %v1430
        %v1593 = vpop.f32.mrf.mxu0
        %v1594 = vadd.f32 0.0, %v1593
        %v1595 = vpop.f32.mrf.mxu0
        %1596 = vmatprep.mubr.f32.mxu0 0.0
        %1597 = vmatmul.mubr.f32.gmra.mxu0 %v1432
        %v1598 = vpop.f32.mrf.mxu0
        %v1599 = vadd.f32 0.0, %v1598
        %v1600 = vpop.f32.mrf.mxu0
        %1601 = vmatprep.mubr.f32.mxu0 0.0
        %1602 = vmatmul.mubr.f32.gmra.mxu0 %v1434
        %v1603 = vpop.f32.mrf.mxu0
        %v1604 = vadd.f32 0.0, %v1603
        %v1605 = vpop.f32.mrf.mxu0
        %1606 = vmatprep.mubr.f32.mxu0 0.0
        %1607 = vmatmul.mubr.f32.gmra.mxu0 %v1436
        %v1608 = vpop.f32.mrf.mxu0
        %v1609 = vadd.f32 0.0, %v1608
        %v1610 = vpop.f32.mrf.mxu0
        %1611 = vmatprep.mubr.f32.mxu0 0.0
        %1612 = vmatmul.mubr.f32.gmra.mxu0 %v1438
        %v1613 = vpop.f32.mrf.mxu0
        %v1614 = vadd.f32 0.0, %v1613
        %v1615 = vpop.f32.mrf.mxu0
        %1616 = vdwg.mxu0
        %v1617 = vmul.f32 %v1539, 0.17677669
        %v1618 = vmul.f32 %v1544, 0.17677669
        %v1619 = vmul.f32 %v1549, 0.17677669
        %v1620 = vmul.f32 %v1554, 0.17677669
        %v1621 = vmul.f32 %v1559, 0.17677669
        %v1622 = vmul.f32 %v1564, 0.17677669
        %v1623 = vmul.f32 %v1569, 0.17677669
        %v1624 = vmul.f32 %v1574, 0.17677669
        %v1625 = vmul.f32 %v1579, 0.17677669
        %v1626 = vmul.f32 %v1584, 0.17677669
        %v1627 = vmul.f32 %v1589, 0.17677669
        %v1628 = vmul.f32 %v1594, 0.17677669
        %v1629 = vmul.f32 %v1599, 0.17677669
        %v1630 = vmul.f32 %v1604, 0.17677669
        %v1631 = vmul.f32 %v1609, 0.17677669
        %v1632 = vmul.f32 %v1614, 0.17677669
        %v1633 = vadd.f32 %v1617, %v1037
        %v1634 = vadd.f32 %v1618, %v1037
        %v1635 = vadd.f32 %v1619, %v1037
        %v1636 = vadd.f32 %v1620, %v1037
        %v1637 = vadd.f32 %v1621, %v1037
        %v1638 = vadd.f32 %v1622, %v1037
        %v1639 = vadd.f32 %v1623, %v1037
        %v1640 = vadd.f32 %v1624, %v1037
        %v1641 = vadd.f32 %v1625, %v1037
        %v1642 = vadd.f32 %v1626, %v1037
        %v1643 = vadd.f32 %v1627, %v1037
        %v1644 = vadd.f32 %v1628, %v1037
        %v1645 = vadd.f32 %v1629, %v1037
        %v1646 = vadd.f32 %v1630, %v1037
        %v1647 = vadd.f32 %v1631, %v1037
        %v1648 = vadd.f32 %v1632, %v1037
        %1649 = vmax.xlane.f32.xlu0 %v1633
        %v1650 = vpop.xlane.xlu0 %1649
        %1651 = vmax.xlane.f32.xlu0 %v1634
        %v1652 = vpop.xlane.xlu0 %1651
        %1653 = vmax.xlane.f32.xlu0 %v1635
        %v1654 = vpop.xlane.xlu0 %1653
        %1655 = vmax.xlane.f32.xlu0 %v1636
        %v1656 = vpop.xlane.xlu0 %1655
        %1657 = vmax.xlane.f32.xlu0 %v1637
        %v1658 = vpop.xlane.xlu0 %1657
        %1659 = vmax.xlane.f32.xlu0 %v1638
        %v1660 = vpop.xlane.xlu0 %1659
        %1661 = vmax.xlane.f32.xlu0 %v1639
        %v1662 = vpop.xlane.xlu0 %1661
        %1663 = vmax.xlane.f32.xlu0 %v1640
        %v1664 = vpop.xlane.xlu0 %1663
        %1665 = vmax.xlane.f32.xlu0 %v1641
        %v1666 = vpop.xlane.xlu0 %1665
        %1667 = vmax.xlane.f32.xlu0 %v1642
        %v1668 = vpop.xlane.xlu0 %1667
        %1669 = vmax.xlane.f32.xlu0 %v1643
        %v1670 = vpop.xlane.xlu0 %1669
        %1671 = vmax.xlane.f32.xlu0 %v1644
        %v1672 = vpop.xlane.xlu0 %1671
        %1673 = vmax.xlane.f32.xlu0 %v1645
        %v1674 = vpop.xlane.xlu0 %1673
        %1675 = vmax.xlane.f32.xlu0 %v1646
        %v1676 = vpop.xlane.xlu0 %1675
        %1677 = vmax.xlane.f32.xlu0 %v1647
        %v1678 = vpop.xlane.xlu0 %1677
        %1679 = vmax.xlane.f32.xlu0 %v1648
        %v1680 = vpop.xlane.xlu0 %1679
        %v1681 = vsub.f32 %v1633, %v1650
        %v1682 = vsub.f32 %v1634, %v1652
        %v1683 = vsub.f32 %v1635, %v1654
        %v1684 = vsub.f32 %v1636, %v1656
        %v1685 = vsub.f32 %v1637, %v1658
        %v1686 = vsub.f32 %v1638, %v1660
        %v1687 = vsub.f32 %v1639, %v1662
        %v1688 = vsub.f32 %v1640, %v1664
        %v1689 = vsub.f32 %v1641, %v1666
        %v1690 = vsub.f32 %v1642, %v1668
        %v1691 = vsub.f32 %v1643, %v1670
        %v1692 = vsub.f32 %v1644, %v1672
        %v1693 = vsub.f32 %v1645, %v1674
        %v1694 = vsub.f32 %v1646, %v1676
        %v1695 = vsub.f32 %v1647, %v1678
        %v1696 = vsub.f32 %v1648, %v1680
        %v1697 = vmul.f32 %v1681, 1.442695
        %v1698 = vpow.pop %v1697
        %v1699 = vmul.f32 %v1682, 1.442695
        %v1700 = vpow.pop %v1699
        %v1701 = vmul.f32 %v1683, 1.442695
        %v1702 = vpow.pop %v1701
        %v1703 = vmul.f32 %v1684, 1.442695
        %v1704 = vpow.pop %v1703
        %v1705 = vmul.f32 %v1685, 1.442695
        %v1706 = vpow.pop %v1705
        %v1707 = vmul.f32 %v1686, 1.442695
        %v1708 = vpow.pop %v1707
        %v1709 = vmul.f32 %v1687, 1.442695
        %v1710 = vpow.pop %v1709
        %v1711 = vmul.f32 %v1688, 1.442695
        %v1712 = vpow.pop %v1711
        %v1713 = vmul.f32 %v1689, 1.442695
        %v1714 = vpow.pop %v1713
        %v1715 = vmul.f32 %v1690, 1.442695
        %v1716 = vpow.pop %v1715
        %v1717 = vmul.f32 %v1691, 1.442695
        %v1718 = vpow.pop %v1717
        %v1719 = vmul.f32 %v1692, 1.442695
        %v1720 = vpow.pop %v1719
        %v1721 = vmul.f32 %v1693, 1.442695
        %v1722 = vpow.pop %v1721
        %v1723 = vmul.f32 %v1694, 1.442695
        %v1724 = vpow.pop %v1723
        %v1725 = vmul.f32 %v1695, 1.442695
        %v1726 = vpow.pop %v1725
        %v1727 = vmul.f32 %v1696, 1.442695
        %v1728 = vpow.pop %v1727
        %1729 = vadd.xlane.f32.xlu0 %v1698
        %v1730 = vpop.xlane.xlu0 %1729
        %1731 = vadd.xlane.f32.xlu0 %v1700
        %v1732 = vpop.xlane.xlu0 %1731
        %1733 = vadd.xlane.f32.xlu0 %v1702
        %v1734 = vpop.xlane.xlu0 %1733
        %1735 = vadd.xlane.f32.xlu0 %v1704
        %v1736 = vpop.xlane.xlu0 %1735
        %1737 = vadd.xlane.f32.xlu0 %v1706
        %v1738 = vpop.xlane.xlu0 %1737
        %1739 = vadd.xlane.f32.xlu0 %v1708
        %v1740 = vpop.xlane.xlu0 %1739
        %1741 = vadd.xlane.f32.xlu0 %v1710
        %v1742 = vpop.xlane.xlu0 %1741
        %1743 = vadd.xlane.f32.xlu0 %v1712
        %v1744 = vpop.xlane.xlu0 %1743
        %1745 = vadd.xlane.f32.xlu0 %v1714
        %v1746 = vpop.xlane.xlu0 %1745
        %1747 = vadd.xlane.f32.xlu0 %v1716
        %v1748 = vpop.xlane.xlu0 %1747
        %1749 = vadd.xlane.f32.xlu0 %v1718
        %v1750 = vpop.xlane.xlu0 %1749
        %1751 = vadd.xlane.f32.xlu0 %v1720
        %v1752 = vpop.xlane.xlu0 %1751
        %1753 = vadd.xlane.f32.xlu0 %v1722
        %v1754 = vpop.xlane.xlu0 %1753
        %1755 = vadd.xlane.f32.xlu0 %v1724
        %v1756 = vpop.xlane.xlu0 %1755
        %1757 = vadd.xlane.f32.xlu0 %v1726
        %v1758 = vpop.xlane.xlu0 %1757
        %1759 = vadd.xlane.f32.xlu0 %v1728
        %v1760 = vpop.xlane.xlu0 %1759
        %v1761 = vrcp.pop %v1730
        %v1762 = vmul.f32 %v1698, %v1761
        %v1763 = vrcp.pop %v1732
        %v1764 = vmul.f32 %v1700, %v1763
        %v1765 = vrcp.pop %v1734
        %v1766 = vmul.f32 %v1702, %v1765
        %v1767 = vrcp.pop %v1736
        %v1768 = vmul.f32 %v1704, %v1767
        %v1769 = vrcp.pop %v1738
        %v1770 = vmul.f32 %v1706, %v1769
        %v1771 = vrcp.pop %v1740
        %v1772 = vmul.f32 %v1708, %v1771
        %v1773 = vrcp.pop %v1742
        %v1774 = vmul.f32 %v1710, %v1773
        %v1775 = vrcp.pop %v1744
        %v1776 = vmul.f32 %v1712, %v1775
        %v1777 = vrcp.pop %v1746
        %v1778 = vmul.f32 %v1714, %v1777
        %v1779 = vrcp.pop %v1748
        %v1780 = vmul.f32 %v1716, %v1779
        %v1781 = vrcp.pop %v1750
        %v1782 = vmul.f32 %v1718, %v1781
        %v1783 = vrcp.pop %v1752
        %v1784 = vmul.f32 %v1720, %v1783
        %v1785 = vrcp.pop %v1754
        %v1786 = vmul.f32 %v1722, %v1785
        %v1787 = vrcp.pop %v1756
        %v1788 = vmul.f32 %v1724, %v1787
        %v1789 = vrcp.pop %v1758
        %v1790 = vmul.f32 %v1726, %v1789
        %v1791 = vrcp.pop %v1760
        %v1792 = vmul.f32 %v1728, %v1791
        %1809 = vrot.lane.b32.xlu0 %v697, 96
        %v1810 = vpop.permute.xlu0 %1809
        %1811 = vrot.lane.b32.xlu0 %v702, 96
        %v1812 = vpop.permute.xlu0 %1811
        %1813 = vrot.lane.b32.xlu0 %v707, 96
        %v1814 = vpop.permute.xlu0 %1813
        %1815 = vrot.lane.b32.xlu0 %v712, 96
        %v1816 = vpop.permute.xlu0 %1815
        %1817 = vrot.lane.b32.xlu0 %v717, 96
        %v1818 = vpop.permute.xlu0 %1817
        %1819 = vrot.lane.b32.xlu0 %v722, 96
        %v1820 = vpop.permute.xlu0 %1819
        %1821 = vrot.lane.b32.xlu0 %v727, 96
        %v1822 = vpop.permute.xlu0 %1821
        %1823 = vrot.lane.b32.xlu0 %v732, 96
        %v1824 = vpop.permute.xlu0 %1823
        %1825 = vrot.lane.b32.xlu0 %v737, 96
        %v1826 = vpop.permute.xlu0 %1825
        %1827 = vrot.lane.b32.xlu0 %v742, 96
        %v1828 = vpop.permute.xlu0 %1827
        %1829 = vrot.lane.b32.xlu0 %v747, 96
        %v1830 = vpop.permute.xlu0 %1829
        %1831 = vrot.lane.b32.xlu0 %v752, 96
        %v1832 = vpop.permute.xlu0 %1831
        %1833 = vrot.lane.b32.xlu0 %v757, 96
        %v1834 = vpop.permute.xlu0 %1833
        %1835 = vrot.lane.b32.xlu0 %v762, 96
        %v1836 = vpop.permute.xlu0 %1835
        %1837 = vrot.lane.b32.xlu0 %v767, 96
        %v1838 = vpop.permute.xlu0 %1837
        %1839 = vrot.lane.b32.xlu0 %v772, 96
        %v1840 = vpop.permute.xlu0 %1839
        %1857 = vmatprep.subr.mxu0 0.0
        %1858 = vmatpush1.msra.mxu0 %v1840
        %1859 = vmatprep.subr.mxu0 0.0
        %1860 = vmatpush1.msra.mxu0 %v1838
        %1861 = vmatprep.subr.mxu0 0.0
        %1862 = vmatpush1.msra.mxu0 %v1836
        %1863 = vmatprep.subr.mxu0 0.0
        %1864 = vmatpush1.msra.mxu0 %v1834
        %1865 = vmatprep.subr.mxu0 0.0
        %1866 = vmatpush1.msra.mxu0 %v1832
        %1867 = vmatprep.subr.mxu0 0.0
        %1868 = vmatpush1.msra.mxu0 %v1830
        %1869 = vmatprep.subr.mxu0 0.0
        %1870 = vmatpush1.msra.mxu0 %v1828
        %1871 = vmatprep.subr.mxu0 0.0
        %1872 = vmatpush1.msra.mxu0 %v1826
        %1873 = vmatprep.subr.mxu0 0.0
        %1874 = vmatpush1.msra.mxu0 %v1824
        %1875 = vmatprep.subr.mxu0 0.0
        %1876 = vmatpush1.msra.mxu0 %v1822
        %1877 = vmatprep.subr.mxu0 0.0
        %1878 = vmatpush1.msra.mxu0 %v1820
        %1879 = vmatprep.subr.mxu0 0.0
        %1880 = vmatpush1.msra.mxu0 %v1818
        %1881 = vmatprep.subr.mxu0 0.0
        %1882 = vmatpush1.msra.mxu0 %v1816
        %1883 = vmatprep.subr.mxu0 0.0
        %1884 = vmatpush1.msra.mxu0 %v1814
        %1885 = vmatprep.subr.mxu0 0.0
        %1886 = vmatpush1.msra.mxu0 %v1812
        %1887 = vmatprep.subr.mxu0 0.0
        %1888 = vmatpush1.msra.mxu0 %v1810
        %1889 = vmatprep.subr.mxu0 0.0
        %1890 = vmatpush2.msra.mxu0 0.0
        %1891 = vmatprep.subr.mxu0 0.0
        %1892 = vmatpush2.msra.mxu0 0.0
        %1893 = vmatprep.subr.mxu0 0.0
        %1894 = vmatpush2.msra.mxu0 0.0
        %1895 = vmatprep.subr.mxu0 0.0
        %1896 = vmatpush2.msra.mxu0 0.0
        %1897 = vmatprep.subr.mxu0 0.0
        %1898 = vmatpush2.msra.mxu0 0.0
        %1899 = vmatprep.subr.mxu0 0.0
        %1900 = vmatpush2.msra.mxu0 0.0
        %1901 = vmatprep.subr.mxu0 0.0
        %1902 = vmatpush2.msra.mxu0 0.0
        %1903 = vmatprep.subr.mxu0 0.0
        %1904 = vmatpush2.msra.mxu0 0.0
        %1905 = vmatprep.subr.mxu0 0.0
        %1906 = vmatpush2.msra.mxu0 0.0
        %1907 = vmatprep.subr.mxu0 0.0
        %1908 = vmatpush2.msra.mxu0 0.0
        %1909 = vmatprep.subr.mxu0 0.0
        %1910 = vmatpush2.msra.mxu0 0.0
        %1911 = vmatprep.subr.mxu0 0.0
        %1912 = vmatpush2.msra.mxu0 0.0
        %1913 = vmatprep.subr.mxu0 0.0
        %1914 = vmatpush2.msra.mxu0 0.0
        %1915 = vmatprep.subr.mxu0 0.0
        %1916 = vmatpush2.msra.mxu0 0.0
        %1917 = vmatprep.subr.mxu0 0.0
        %1918 = vmatpush2.msra.mxu0 0.0
        %1919 = vmatprep.subr.mxu0 0.0
        %1920 = vmatpush2.msra.mxu0 0.0
        %1921 = vmatprep.mubr.f32.mxu0 0.0
        %1922 = vmatmul.mubr.f32.gmra.mxu0 %v1762
        %v1923 = vpop.f32.mrf.mxu0
        %v1924 = vadd.f32 0.0, %v1923
        %v1925 = vpop.f32.mrf.mxu0
        %1926 = vmatprep.mubr.f32.mxu0 0.0
        %1927 = vmatmul.mubr.f32.gmra.mxu0 %v1764
        %v1928 = vpop.f32.mrf.mxu0
        %v1929 = vadd.f32 0.0, %v1928
        %v1930 = vpop.f32.mrf.mxu0
        %1931 = vmatprep.mubr.f32.mxu0 0.0
        %1932 = vmatmul.mubr.f32.gmra.mxu0 %v1766
        %v1933 = vpop.f32.mrf.mxu0
        %v1934 = vadd.f32 0.0, %v1933
        %v1935 = vpop.f32.mrf.mxu0
        %1936 = vmatprep.mubr.f32.mxu0 0.0
        %1937 = vmatmul.mubr.f32.gmra.mxu0 %v1768
        %v1938 = vpop.f32.mrf.mxu0
        %v1939 = vadd.f32 0.0, %v1938
        %v1940 = vpop.f32.mrf.mxu0
        %1941 = vmatprep.mubr.f32.mxu0 0.0
        %1942 = vmatmul.mubr.f32.gmra.mxu0 %v1770
        %v1943 = vpop.f32.mrf.mxu0
        %v1944 = vadd.f32 0.0, %v1943
        %v1945 = vpop.f32.mrf.mxu0
        %1946 = vmatprep.mubr.f32.mxu0 0.0
        %1947 = vmatmul.mubr.f32.gmra.mxu0 %v1772
        %v1948 = vpop.f32.mrf.mxu0
        %v1949 = vadd.f32 0.0, %v1948
        %v1950 = vpop.f32.mrf.mxu0
        %1951 = vmatprep.mubr.f32.mxu0 0.0
        %1952 = vmatmul.mubr.f32.gmra.mxu0 %v1774
        %v1953 = vpop.f32.mrf.mxu0
        %v1954 = vadd.f32 0.0, %v1953
        %v1955 = vpop.f32.mrf.mxu0
        %1956 = vmatprep.mubr.f32.mxu0 0.0
        %1957 = vmatmul.mubr.f32.gmra.mxu0 %v1776
        %v1958 = vpop.f32.mrf.mxu0
        %v1959 = vadd.f32 0.0, %v1958
        %v1960 = vpop.f32.mrf.mxu0
        %1961 = vmatprep.mubr.f32.mxu0 0.0
        %1962 = vmatmul.mubr.f32.gmra.mxu0 %v1778
        %v1963 = vpop.f32.mrf.mxu0
        %v1964 = vadd.f32 0.0, %v1963
        %v1965 = vpop.f32.mrf.mxu0
        %1966 = vmatprep.mubr.f32.mxu0 0.0
        %1967 = vmatmul.mubr.f32.gmra.mxu0 %v1780
        %v1968 = vpop.f32.mrf.mxu0
        %v1969 = vadd.f32 0.0, %v1968
        %v1970 = vpop.f32.mrf.mxu0
        %1971 = vmatprep.mubr.f32.mxu0 0.0
        %1972 = vmatmul.mubr.f32.gmra.mxu0 %v1782
        %v1973 = vpop.f32.mrf.mxu0
        %v1974 = vadd.f32 0.0, %v1973
        %v1975 = vpop.f32.mrf.mxu0
        %1976 = vmatprep.mubr.f32.mxu0 0.0
        %1977 = vmatmul.mubr.f32.gmra.mxu0 %v1784
        %v1978 = vpop.f32.mrf.mxu0
        %v1979 = vadd.f32 0.0, %v1978
        %v1980 = vpop.f32.mrf.mxu0
        %1981 = vmatprep.mubr.f32.mxu0 0.0
        %1982 = vmatmul.mubr.f32.gmra.mxu0 %v1786
        %v1983 = vpop.f32.mrf.mxu0
        %v1984 = vadd.f32 0.0, %v1983
        %v1985 = vpop.f32.mrf.mxu0
        %1986 = vmatprep.mubr.f32.mxu0 0.0
        %1987 = vmatmul.mubr.f32.gmra.mxu0 %v1788
        %v1988 = vpop.f32.mrf.mxu0
        %v1989 = vadd.f32 0.0, %v1988
        %v1990 = vpop.f32.mrf.mxu0
        %1991 = vmatprep.mubr.f32.mxu0 0.0
        %1992 = vmatmul.mubr.f32.gmra.mxu0 %v1790
        %v1993 = vpop.f32.mrf.mxu0
        %v1994 = vadd.f32 0.0, %v1993
        %v1995 = vpop.f32.mrf.mxu0
        %1996 = vmatprep.mubr.f32.mxu0 0.0
        %1997 = vmatmul.mubr.f32.gmra.mxu0 %v1792
        %v1998 = vpop.f32.mrf.mxu0
        %v1999 = vadd.f32 0.0, %v1998
        %v2000 = vpop.f32.mrf.mxu0
        %2001 = vdwg.mxu0
        %2002 = vrot.lane.b32.xlu0 %v536, 64
        %v2003 = vpop.permute.xlu0 %2002
        %2004 = vrot.lane.b32.xlu0 %v542, 64
        %v2005 = vpop.permute.xlu0 %2004
        %2006 = vrot.lane.b32.xlu0 %v548, 64
        %v2007 = vpop.permute.xlu0 %2006
        %2008 = vrot.lane.b32.xlu0 %v554, 64
        %v2009 = vpop.permute.xlu0 %2008
        %2010 = vrot.lane.b32.xlu0 %v560, 64
        %v2011 = vpop.permute.xlu0 %2010
        %2012 = vrot.lane.b32.xlu0 %v566, 64
        %v2013 = vpop.permute.xlu0 %2012
        %2014 = vrot.lane.b32.xlu0 %v572, 64
        %v2015 = vpop.permute.xlu0 %2014
        %2016 = vrot.lane.b32.xlu0 %v578, 64
        %v2017 = vpop.permute.xlu0 %2016
        %2018 = vrot.lane.b32.xlu0 %v584, 64
        %v2019 = vpop.permute.xlu0 %2018
        %2020 = vrot.lane.b32.xlu0 %v590, 64
        %v2021 = vpop.permute.xlu0 %2020
        %2022 = vrot.lane.b32.xlu0 %v596, 64
        %v2023 = vpop.permute.xlu0 %2022
        %2024 = vrot.lane.b32.xlu0 %v602, 64
        %v2025 = vpop.permute.xlu0 %2024
        %2026 = vrot.lane.b32.xlu0 %v608, 64
        %v2027 = vpop.permute.xlu0 %2026
        %2028 = vrot.lane.b32.xlu0 %v614, 64
        %v2029 = vpop.permute.xlu0 %2028
        %2030 = vrot.lane.b32.xlu0 %v620, 64
        %v2031 = vpop.permute.xlu0 %2030
        %2032 = vrot.lane.b32.xlu0 %v626, 64
        %v2033 = vpop.permute.xlu0 %2032
        %2034 = vrot.lane.b32.xlu0 %v538, 64
        %v2035 = vpop.permute.xlu0 %2034
        %2036 = vrot.lane.b32.xlu0 %v544, 64
        %v2037 = vpop.permute.xlu0 %2036
        %2038 = vrot.lane.b32.xlu0 %v550, 64
        %v2039 = vpop.permute.xlu0 %2038
        %2040 = vrot.lane.b32.xlu0 %v556, 64
        %v2041 = vpop.permute.xlu0 %2040
        %2042 = vrot.lane.b32.xlu0 %v562, 64
        %v2043 = vpop.permute.xlu0 %2042
        %2044 = vrot.lane.b32.xlu0 %v568, 64
        %v2045 = vpop.permute.xlu0 %2044
        %2046 = vrot.lane.b32.xlu0 %v574, 64
        %v2047 = vpop.permute.xlu0 %2046
        %2048 = vrot.lane.b32.xlu0 %v580, 64
        %v2049 = vpop.permute.xlu0 %2048
        %2050 = vrot.lane.b32.xlu0 %v586, 64
        %v2051 = vpop.permute.xlu0 %2050
        %2052 = vrot.lane.b32.xlu0 %v592, 64
        %v2053 = vpop.permute.xlu0 %2052
        %2054 = vrot.lane.b32.xlu0 %v598, 64
        %v2055 = vpop.permute.xlu0 %2054
        %2056 = vrot.lane.b32.xlu0 %v604, 64
        %v2057 = vpop.permute.xlu0 %2056
        %2058 = vrot.lane.b32.xlu0 %v610, 64
        %v2059 = vpop.permute.xlu0 %2058
        %2060 = vrot.lane.b32.xlu0 %v616, 64
        %v2061 = vpop.permute.xlu0 %2060
        %2062 = vrot.lane.b32.xlu0 %v622, 64
        %v2063 = vpop.permute.xlu0 %2062
        %2064 = vrot.lane.b32.xlu0 %v628, 64
        %v2065 = vpop.permute.xlu0 %2064
        %v2066 = vsel %vm775, %v2003, 0
        %v2068 = vsel %vm775, %v2005, 0
        %v2070 = vsel %vm775, %v2007, 0
        %v2072 = vsel %vm775, %v2009, 0
        %v2074 = vsel %vm775, %v2011, 0
        %v2076 = vsel %vm775, %v2013, 0
        %v2078 = vsel %vm775, %v2015, 0
        %v2080 = vsel %vm775, %v2017, 0
        %v2082 = vsel %vm775, %v2019, 0
        %v2084 = vsel %vm775, %v2021, 0
        %v2086 = vsel %vm775, %v2023, 0
        %v2088 = vsel %vm775, %v2025, 0
        %v2090 = vsel %vm775, %v2027, 0
        %v2092 = vsel %vm775, %v2029, 0
        %v2094 = vsel %vm775, %v2031, 0
        %v2096 = vsel %vm775, %v2033, 0
        %v2098 = vsel %vm775, %v2035, 0
        %v2100 = vsel %vm775, %v2037, 0
        %v2102 = vsel %vm775, %v2039, 0
        %v2104 = vsel %vm775, %v2041, 0
        %v2106 = vsel %vm775, %v2043, 0
        %v2108 = vsel %vm775, %v2045, 0
        %v2110 = vsel %vm775, %v2047, 0
        %v2112 = vsel %vm775, %v2049, 0
        %v2114 = vsel %vm775, %v2051, 0
        %v2116 = vsel %vm775, %v2053, 0
        %v2118 = vsel %vm775, %v2055, 0
        %v2120 = vsel %vm775, %v2057, 0
        %v2122 = vsel %vm775, %v2059, 0
        %v2124 = vsel %vm775, %v2061, 0
        %v2126 = vsel %vm775, %v2063, 0
        %v2128 = vsel %vm775, %v2065, 0
        %2130 = vmatprep.subr.mxu0 0.0
        %2131 = vmatpush1.xpose.msra.mxu0 %v2128
        %2132 = vmatprep.subr.mxu0 0.0
        %2133 = vmatpush1.xpose.msra.mxu0 %v2126
        %2134 = vmatprep.subr.mxu0 0.0
        %2135 = vmatpush1.xpose.msra.mxu0 %v2124
        %2136 = vmatprep.subr.mxu0 0.0
        %2137 = vmatpush1.xpose.msra.mxu0 %v2122
        %2138 = vmatprep.subr.mxu0 0.0
        %2139 = vmatpush1.xpose.msra.mxu0 %v2120
        %2140 = vmatprep.subr.mxu0 0.0
        %2141 = vmatpush1.xpose.msra.mxu0 %v2118
        %2142 = vmatprep.subr.mxu0 0.0
        %2143 = vmatpush1.xpose.msra.mxu0 %v2116
        %2144 = vmatprep.subr.mxu0 0.0
        %2145 = vmatpush1.xpose.msra.mxu0 %v2114
        %2146 = vmatprep.subr.mxu0 0.0
        %2147 = vmatpush1.xpose.msra.mxu0 %v2112
        %2148 = vmatprep.subr.mxu0 0.0
        %2149 = vmatpush1.xpose.msra.mxu0 %v2110
        %2150 = vmatprep.subr.mxu0 0.0
        %2151 = vmatpush1.xpose.msra.mxu0 %v2108
        %2152 = vmatprep.subr.mxu0 0.0
        %2153 = vmatpush1.xpose.msra.mxu0 %v2106
        %2154 = vmatprep.subr.mxu0 0.0
        %2155 = vmatpush1.xpose.msra.mxu0 %v2104
        %2156 = vmatprep.subr.mxu0 0.0
        %2157 = vmatpush1.xpose.msra.mxu0 %v2102
        %2158 = vmatprep.subr.mxu0 0.0
        %2159 = vmatpush1.xpose.msra.mxu0 %v2100
        %2160 = vmatprep.subr.mxu0 0.0
        %2161 = vmatpush1.xpose.msra.mxu0 %v2098
        %2162 = vmatprep.subr.mxu0 0.0
        %2163 = vmatpush2.xpose.msra.mxu0 0.0
        %2164 = vmatprep.subr.mxu0 0.0
        %2165 = vmatpush2.xpose.msra.mxu0 0.0
        %2166 = vmatprep.subr.mxu0 0.0
        %2167 = vmatpush2.xpose.msra.mxu0 0.0
        %2168 = vmatprep.subr.mxu0 0.0
        %2169 = vmatpush2.xpose.msra.mxu0 0.0
        %2170 = vmatprep.subr.mxu0 0.0
        %2171 = vmatpush2.xpose.msra.mxu0 0.0
        %2172 = vmatprep.subr.mxu0 0.0
        %2173 = vmatpush2.xpose.msra.mxu0 0.0
        %2174 = vmatprep.subr.mxu0 0.0
        %2175 = vmatpush2.xpose.msra.mxu0 0.0
        %2176 = vmatprep.subr.mxu0 0.0
        %2177 = vmatpush2.xpose.msra.mxu0 0.0
        %2178 = vmatprep.subr.mxu0 0.0
        %2179 = vmatpush2.xpose.msra.mxu0 0.0
        %2180 = vmatprep.subr.mxu0 0.0
        %2181 = vmatpush2.xpose.msra.mxu0 0.0
        %2182 = vmatprep.subr.mxu0 0.0
        %2183 = vmatpush2.xpose.msra.mxu0 0.0
        %2184 = vmatprep.subr.mxu0 0.0
        %2185 = vmatpush2.xpose.msra.mxu0 0.0
        %2186 = vmatprep.subr.mxu0 0.0
        %2187 = vmatpush2.xpose.msra.mxu0 0.0
        %2188 = vmatprep.subr.mxu0 0.0
        %2189 = vmatpush2.xpose.msra.mxu0 0.0
        %2190 = vmatprep.subr.mxu0 0.0
        %2191 = vmatpush2.xpose.msra.mxu0 0.0
        %2192 = vmatprep.subr.mxu0 0.0
        %2193 = vmatpush2.xpose.msra.mxu0 0.0
        %2194 = vmatprep.mubr.f32.mxu0 0.0
        %2195 = vmatmul.mubr.f32.gmra.mxu0 %v2066
        %v2196 = vpop.f32.mrf.mxu0
        %v2197 = vadd.f32 0.0, %v2196
        %v2198 = vpop.f32.mrf.mxu0
        %2199 = vmatprep.mubr.f32.mxu0 0.0
        %2200 = vmatmul.mubr.f32.gmra.mxu0 %v2068
        %v2201 = vpop.f32.mrf.mxu0
        %v2202 = vadd.f32 0.0, %v2201
        %v2203 = vpop.f32.mrf.mxu0
        %2204 = vmatprep.mubr.f32.mxu0 0.0
        %2205 = vmatmul.mubr.f32.gmra.mxu0 %v2070
        %v2206 = vpop.f32.mrf.mxu0
        %v2207 = vadd.f32 0.0, %v2206
        %v2208 = vpop.f32.mrf.mxu0
        %2209 = vmatprep.mubr.f32.mxu0 0.0
        %2210 = vmatmul.mubr.f32.gmra.mxu0 %v2072
        %v2211 = vpop.f32.mrf.mxu0
        %v2212 = vadd.f32 0.0, %v2211
        %v2213 = vpop.f32.mrf.mxu0
        %2214 = vmatprep.mubr.f32.mxu0 0.0
        %2215 = vmatmul.mubr.f32.gmra.mxu0 %v2074
        %v2216 = vpop.f32.mrf.mxu0
        %v2217 = vadd.f32 0.0, %v2216
        %v2218 = vpop.f32.mrf.mxu0
        %2219 = vmatprep.mubr.f32.mxu0 0.0
        %2220 = vmatmul.mubr.f32.gmra.mxu0 %v2076
        %v2221 = vpop.f32.mrf.mxu0
        %v2222 = vadd.f32 0.0, %v2221
        %v2223 = vpop.f32.mrf.mxu0
        %2224 = vmatprep.mubr.f32.mxu0 0.0
        %2225 = vmatmul.mubr.f32.gmra.mxu0 %v2078
        %v2226 = vpop.f32.mrf.mxu0
        %v2227 = vadd.f32 0.0, %v2226
        %v2228 = vpop.f32.mrf.mxu0
        %2229 = vmatprep.mubr.f32.mxu0 0.0
        %2230 = vmatmul.mubr.f32.gmra.mxu0 %v2080
        %v2231 = vpop.f32.mrf.mxu0
        %v2232 = vadd.f32 0.0, %v2231
        %v2233 = vpop.f32.mrf.mxu0
        %2234 = vmatprep.mubr.f32.mxu0 0.0
        %2235 = vmatmul.mubr.f32.gmra.mxu0 %v2082
        %v2236 = vpop.f32.mrf.mxu0
        %v2237 = vadd.f32 0.0, %v2236
        %v2238 = vpop.f32.mrf.mxu0
        %2239 = vmatprep.mubr.f32.mxu0 0.0
        %2240 = vmatmul.mubr.f32.gmra.mxu0 %v2084
        %v2241 = vpop.f32.mrf.mxu0
        %v2242 = vadd.f32 0.0, %v2241
        %v2243 = vpop.f32.mrf.mxu0
        %2244 = vmatprep.mubr.f32.mxu0 0.0
        %2245 = vmatmul.mubr.f32.gmra.mxu0 %v2086
        %v2246 = vpop.f32.mrf.mxu0
        %v2247 = vadd.f32 0.0, %v2246
        %v2248 = vpop.f32.mrf.mxu0
        %2249 = vmatprep.mubr.f32.mxu0 0.0
        %2250 = vmatmul.mubr.f32.gmra.mxu0 %v2088
        %v2251 = vpop.f32.mrf.mxu0
        %v2252 = vadd.f32 0.0, %v2251
        %v2253 = vpop.f32.mrf.mxu0
        %2254 = vmatprep.mubr.f32.mxu0 0.0
        %2255 = vmatmul.mubr.f32.gmra.mxu0 %v2090
        %v2256 = vpop.f32.mrf.mxu0
        %v2257 = vadd.f32 0.0, %v2256
        %v2258 = vpop.f32.mrf.mxu0
        %2259 = vmatprep.mubr.f32.mxu0 0.0
        %2260 = vmatmul.mubr.f32.gmra.mxu0 %v2092
        %v2261 = vpop.f32.mrf.mxu0
        %v2262 = vadd.f32 0.0, %v2261
        %v2263 = vpop.f32.mrf.mxu0
        %2264 = vmatprep.mubr.f32.mxu0 0.0
        %2265 = vmatmul.mubr.f32.gmra.mxu0 %v2094
        %v2266 = vpop.f32.mrf.mxu0
        %v2267 = vadd.f32 0.0, %v2266
        %v2268 = vpop.f32.mrf.mxu0
        %2269 = vmatprep.mubr.f32.mxu0 0.0
        %2270 = vmatmul.mubr.f32.gmra.mxu0 %v2096
        %v2271 = vpop.f32.mrf.mxu0
        %v2272 = vadd.f32 0.0, %v2271
        %v2273 = vpop.f32.mrf.mxu0
        %2274 = vdwg.mxu0
        %v2275 = vmul.f32 %v2197, 0.17677669
        %v2276 = vmul.f32 %v2202, 0.17677669
        %v2277 = vmul.f32 %v2207, 0.17677669
        %v2278 = vmul.f32 %v2212, 0.17677669
        %v2279 = vmul.f32 %v2217, 0.17677669
        %v2280 = vmul.f32 %v2222, 0.17677669
        %v2281 = vmul.f32 %v2227, 0.17677669
        %v2282 = vmul.f32 %v2232, 0.17677669
        %v2283 = vmul.f32 %v2237, 0.17677669
        %v2284 = vmul.f32 %v2242, 0.17677669
        %v2285 = vmul.f32 %v2247, 0.17677669
        %v2286 = vmul.f32 %v2252, 0.17677669
        %v2287 = vmul.f32 %v2257, 0.17677669
        %v2288 = vmul.f32 %v2262, 0.17677669
        %v2289 = vmul.f32 %v2267, 0.17677669
        %v2290 = vmul.f32 %v2272, 0.17677669
        %v2291 = vadd.f32 %v2275, %v1037
        %v2292 = vadd.f32 %v2276, %v1037
        %v2293 = vadd.f32 %v2277, %v1037
        %v2294 = vadd.f32 %v2278, %v1037
        %v2295 = vadd.f32 %v2279, %v1037
        %v2296 = vadd.f32 %v2280, %v1037
        %v2297 = vadd.f32 %v2281, %v1037
        %v2298 = vadd.f32 %v2282, %v1037
        %v2299 = vadd.f32 %v2283, %v1037
        %v2300 = vadd.f32 %v2284, %v1037
        %v2301 = vadd.f32 %v2285, %v1037
        %v2302 = vadd.f32 %v2286, %v1037
        %v2303 = vadd.f32 %v2287, %v1037
        %v2304 = vadd.f32 %v2288, %v1037
        %v2305 = vadd.f32 %v2289, %v1037
        %v2306 = vadd.f32 %v2290, %v1037
        %2307 = vmax.xlane.f32.xlu0 %v2291
        %v2308 = vpop.xlane.xlu0 %2307
        %2309 = vmax.xlane.f32.xlu0 %v2292
        %v2310 = vpop.xlane.xlu0 %2309
        %2311 = vmax.xlane.f32.xlu0 %v2293
        %v2312 = vpop.xlane.xlu0 %2311
        %2313 = vmax.xlane.f32.xlu0 %v2294
        %v2314 = vpop.xlane.xlu0 %2313
        %2315 = vmax.xlane.f32.xlu0 %v2295
        %v2316 = vpop.xlane.xlu0 %2315
        %2317 = vmax.xlane.f32.xlu0 %v2296
        %v2318 = vpop.xlane.xlu0 %2317
        %2319 = vmax.xlane.f32.xlu0 %v2297
        %v2320 = vpop.xlane.xlu0 %2319
        %2321 = vmax.xlane.f32.xlu0 %v2298
        %v2322 = vpop.xlane.xlu0 %2321
        %2323 = vmax.xlane.f32.xlu0 %v2299
        %v2324 = vpop.xlane.xlu0 %2323
        %2325 = vmax.xlane.f32.xlu0 %v2300
        %v2326 = vpop.xlane.xlu0 %2325
        %2327 = vmax.xlane.f32.xlu0 %v2301
        %v2328 = vpop.xlane.xlu0 %2327
        %2329 = vmax.xlane.f32.xlu0 %v2302
        %v2330 = vpop.xlane.xlu0 %2329
        %2331 = vmax.xlane.f32.xlu0 %v2303
        %v2332 = vpop.xlane.xlu0 %2331
        %2333 = vmax.xlane.f32.xlu0 %v2304
        %v2334 = vpop.xlane.xlu0 %2333
        %2335 = vmax.xlane.f32.xlu0 %v2305
        %v2336 = vpop.xlane.xlu0 %2335
        %2337 = vmax.xlane.f32.xlu0 %v2306
        %v2338 = vpop.xlane.xlu0 %2337
        %v2339 = vsub.f32 %v2291, %v2308
        %v2340 = vsub.f32 %v2292, %v2310
        %v2341 = vsub.f32 %v2293, %v2312
        %v2342 = vsub.f32 %v2294, %v2314
        %v2343 = vsub.f32 %v2295, %v2316
        %v2344 = vsub.f32 %v2296, %v2318
        %v2345 = vsub.f32 %v2297, %v2320
        %v2346 = vsub.f32 %v2298, %v2322
        %v2347 = vsub.f32 %v2299, %v2324
        %v2348 = vsub.f32 %v2300, %v2326
        %v2349 = vsub.f32 %v2301, %v2328
        %v2350 = vsub.f32 %v2302, %v2330
        %v2351 = vsub.f32 %v2303, %v2332
        %v2352 = vsub.f32 %v2304, %v2334
        %v2353 = vsub.f32 %v2305, %v2336
        %v2354 = vsub.f32 %v2306, %v2338
        %v2355 = vmul.f32 %v2339, 1.442695
        %v2356 = vpow.pop %v2355
        %v2357 = vmul.f32 %v2340, 1.442695
        %v2358 = vpow.pop %v2357
        %v2359 = vmul.f32 %v2341, 1.442695
        %v2360 = vpow.pop %v2359
        %v2361 = vmul.f32 %v2342, 1.442695
        %v2362 = vpow.pop %v2361
        %v2363 = vmul.f32 %v2343, 1.442695
        %v2364 = vpow.pop %v2363
        %v2365 = vmul.f32 %v2344, 1.442695
        %v2366 = vpow.pop %v2365
        %v2367 = vmul.f32 %v2345, 1.442695
        %v2368 = vpow.pop %v2367
        %v2369 = vmul.f32 %v2346, 1.442695
        %v2370 = vpow.pop %v2369
        %v2371 = vmul.f32 %v2347, 1.442695
        %v2372 = vpow.pop %v2371
        %v2373 = vmul.f32 %v2348, 1.442695
        %v2374 = vpow.pop %v2373
        %v2375 = vmul.f32 %v2349, 1.442695
        %v2376 = vpow.pop %v2375
        %v2377 = vmul.f32 %v2350, 1.442695
        %v2378 = vpow.pop %v2377
        %v2379 = vmul.f32 %v2351, 1.442695
        %v2380 = vpow.pop %v2379
        %v2381 = vmul.f32 %v2352, 1.442695
        %v2382 = vpow.pop %v2381
        %v2383 = vmul.f32 %v2353, 1.442695
        %v2384 = vpow.pop %v2383
        %v2385 = vmul.f32 %v2354, 1.442695
        %v2386 = vpow.pop %v2385
        %2387 = vadd.xlane.f32.xlu0 %v2356
        %v2388 = vpop.xlane.xlu0 %2387
        %2389 = vadd.xlane.f32.xlu0 %v2358
        %v2390 = vpop.xlane.xlu0 %2389
        %2391 = vadd.xlane.f32.xlu0 %v2360
        %v2392 = vpop.xlane.xlu0 %2391
        %2393 = vadd.xlane.f32.xlu0 %v2362
        %v2394 = vpop.xlane.xlu0 %2393
        %2395 = vadd.xlane.f32.xlu0 %v2364
        %v2396 = vpop.xlane.xlu0 %2395
        %2397 = vadd.xlane.f32.xlu0 %v2366
        %v2398 = vpop.xlane.xlu0 %2397
        %2399 = vadd.xlane.f32.xlu0 %v2368
        %v2400 = vpop.xlane.xlu0 %2399
        %2401 = vadd.xlane.f32.xlu0 %v2370
        %v2402 = vpop.xlane.xlu0 %2401
        %2403 = vadd.xlane.f32.xlu0 %v2372
        %v2404 = vpop.xlane.xlu0 %2403
        %2405 = vadd.xlane.f32.xlu0 %v2374
        %v2406 = vpop.xlane.xlu0 %2405
        %2407 = vadd.xlane.f32.xlu0 %v2376
        %v2408 = vpop.xlane.xlu0 %2407
        %2409 = vadd.xlane.f32.xlu0 %v2378
        %v2410 = vpop.xlane.xlu0 %2409
        %2411 = vadd.xlane.f32.xlu0 %v2380
        %v2412 = vpop.xlane.xlu0 %2411
        %2413 = vadd.xlane.f32.xlu0 %v2382
        %v2414 = vpop.xlane.xlu0 %2413
        %2415 = vadd.xlane.f32.xlu0 %v2384
        %v2416 = vpop.xlane.xlu0 %2415
        %2417 = vadd.xlane.f32.xlu0 %v2386
        %v2418 = vpop.xlane.xlu0 %2417
        %v2419 = vrcp.pop %v2388
        %v2420 = vmul.f32 %v2356, %v2419
        %v2421 = vrcp.pop %v2390
        %v2422 = vmul.f32 %v2358, %v2421
        %v2423 = vrcp.pop %v2392
        %v2424 = vmul.f32 %v2360, %v2423
        %v2425 = vrcp.pop %v2394
        %v2426 = vmul.f32 %v2362, %v2425
        %v2427 = vrcp.pop %v2396
        %v2428 = vmul.f32 %v2364, %v2427
        %v2429 = vrcp.pop %v2398
        %v2430 = vmul.f32 %v2366, %v2429
        %v2431 = vrcp.pop %v2400
        %v2432 = vmul.f32 %v2368, %v2431
        %v2433 = vrcp.pop %v2402
        %v2434 = vmul.f32 %v2370, %v2433
        %v2435 = vrcp.pop %v2404
        %v2436 = vmul.f32 %v2372, %v2435
        %v2437 = vrcp.pop %v2406
        %v2438 = vmul.f32 %v2374, %v2437
        %v2439 = vrcp.pop %v2408
        %v2440 = vmul.f32 %v2376, %v2439
        %v2441 = vrcp.pop %v2410
        %v2442 = vmul.f32 %v2378, %v2441
        %v2443 = vrcp.pop %v2412
        %v2444 = vmul.f32 %v2380, %v2443
        %v2445 = vrcp.pop %v2414
        %v2446 = vmul.f32 %v2382, %v2445
        %v2447 = vrcp.pop %v2416
        %v2448 = vmul.f32 %v2384, %v2447
        %v2449 = vrcp.pop %v2418
        %v2450 = vmul.f32 %v2386, %v2449
        %2451 = vrot.lane.b32.xlu0 %v697, 64
        %v2452 = vpop.permute.xlu0 %2451
        %2453 = vrot.lane.b32.xlu0 %v702, 64
        %v2454 = vpop.permute.xlu0 %2453
        %2455 = vrot.lane.b32.xlu0 %v707, 64
        %v2456 = vpop.permute.xlu0 %2455
        %2457 = vrot.lane.b32.xlu0 %v712, 64
        %v2458 = vpop.permute.xlu0 %2457
        %2459 = vrot.lane.b32.xlu0 %v717, 64
        %v2460 = vpop.permute.xlu0 %2459
        %2461 = vrot.lane.b32.xlu0 %v722, 64
        %v2462 = vpop.permute.xlu0 %2461
        %2463 = vrot.lane.b32.xlu0 %v727, 64
        %v2464 = vpop.permute.xlu0 %2463
        %2465 = vrot.lane.b32.xlu0 %v732, 64
        %v2466 = vpop.permute.xlu0 %2465
        %2467 = vrot.lane.b32.xlu0 %v737, 64
        %v2468 = vpop.permute.xlu0 %2467
        %2469 = vrot.lane.b32.xlu0 %v742, 64
        %v2470 = vpop.permute.xlu0 %2469
        %2471 = vrot.lane.b32.xlu0 %v747, 64
        %v2472 = vpop.permute.xlu0 %2471
        %2473 = vrot.lane.b32.xlu0 %v752, 64
        %v2474 = vpop.permute.xlu0 %2473
        %2475 = vrot.lane.b32.xlu0 %v757, 64
        %v2476 = vpop.permute.xlu0 %2475
        %2477 = vrot.lane.b32.xlu0 %v762, 64
        %v2478 = vpop.permute.xlu0 %2477
        %2479 = vrot.lane.b32.xlu0 %v767, 64
        %v2480 = vpop.permute.xlu0 %2479
        %2481 = vrot.lane.b32.xlu0 %v772, 64
        %v2482 = vpop.permute.xlu0 %2481
        %2499 = vmatprep.subr.mxu0 0.0
        %2500 = vmatpush1.msra.mxu0 %v2482
        %2501 = vmatprep.subr.mxu0 0.0
        %2502 = vmatpush1.msra.mxu0 %v2480
        %2503 = vmatprep.subr.mxu0 0.0
        %2504 = vmatpush1.msra.mxu0 %v2478
        %2505 = vmatprep.subr.mxu0 0.0
        %2506 = vmatpush1.msra.mxu0 %v2476
        %2507 = vmatprep.subr.mxu0 0.0
        %2508 = vmatpush1.msra.mxu0 %v2474
        %2509 = vmatprep.subr.mxu0 0.0
        %2510 = vmatpush1.msra.mxu0 %v2472
        %2511 = vmatprep.subr.mxu0 0.0
        %2512 = vmatpush1.msra.mxu0 %v2470
        %2513 = vmatprep.subr.mxu0 0.0
        %2514 = vmatpush1.msra.mxu0 %v2468
        %2515 = vmatprep.subr.mxu0 0.0
        %2516 = vmatpush1.msra.mxu0 %v2466
        %2517 = vmatprep.subr.mxu0 0.0
        %2518 = vmatpush1.msra.mxu0 %v2464
        %2519 = vmatprep.subr.mxu0 0.0
        %2520 = vmatpush1.msra.mxu0 %v2462
        %2521 = vmatprep.subr.mxu0 0.0
        %2522 = vmatpush1.msra.mxu0 %v2460
        %2523 = vmatprep.subr.mxu0 0.0
        %2524 = vmatpush1.msra.mxu0 %v2458
        %2525 = vmatprep.subr.mxu0 0.0
        %2526 = vmatpush1.msra.mxu0 %v2456
        %2527 = vmatprep.subr.mxu0 0.0
        %2528 = vmatpush1.msra.mxu0 %v2454
        %2529 = vmatprep.subr.mxu0 0.0
        %2530 = vmatpush1.msra.mxu0 %v2452
        %2531 = vmatprep.subr.mxu0 0.0
        %2532 = vmatpush2.msra.mxu0 0.0
        %2533 = vmatprep.subr.mxu0 0.0
        %2534 = vmatpush2.msra.mxu0 0.0
        %2535 = vmatprep.subr.mxu0 0.0
        %2536 = vmatpush2.msra.mxu0 0.0
        %2537 = vmatprep.subr.mxu0 0.0
        %2538 = vmatpush2.msra.mxu0 0.0
        %2539 = vmatprep.subr.mxu0 0.0
        %2540 = vmatpush2.msra.mxu0 0.0
        %2541 = vmatprep.subr.mxu0 0.0
        %2542 = vmatpush2.msra.mxu0 0.0
        %2543 = vmatprep.subr.mxu0 0.0
        %2544 = vmatpush2.msra.mxu0 0.0
        %2545 = vmatprep.subr.mxu0 0.0
        %2546 = vmatpush2.msra.mxu0 0.0
        %2547 = vmatprep.subr.mxu0 0.0
        %2548 = vmatpush2.msra.mxu0 0.0
        %2549 = vmatprep.subr.mxu0 0.0
        %2550 = vmatpush2.msra.mxu0 0.0
        %2551 = vmatprep.subr.mxu0 0.0
        %2552 = vmatpush2.msra.mxu0 0.0
        %2553 = vmatprep.subr.mxu0 0.0
        %2554 = vmatpush2.msra.mxu0 0.0
        %2555 = vmatprep.subr.mxu0 0.0
        %2556 = vmatpush2.msra.mxu0 0.0
        %2557 = vmatprep.subr.mxu0 0.0
        %2558 = vmatpush2.msra.mxu0 0.0
        %2559 = vmatprep.subr.mxu0 0.0
        %2560 = vmatpush2.msra.mxu0 0.0
        %2561 = vmatprep.subr.mxu0 0.0
        %2562 = vmatpush2.msra.mxu0 0.0
        %2563 = vmatprep.mubr.f32.mxu0 0.0
        %2564 = vmatmul.mubr.f32.gmra.mxu0 %v2420
        %v2565 = vpop.f32.mrf.mxu0
        %v2566 = vadd.f32 0.0, %v2565
        %v2567 = vpop.f32.mrf.mxu0
        %2568 = vmatprep.mubr.f32.mxu0 0.0
        %2569 = vmatmul.mubr.f32.gmra.mxu0 %v2422
        %v2570 = vpop.f32.mrf.mxu0
        %v2571 = vadd.f32 0.0, %v2570
        %v2572 = vpop.f32.mrf.mxu0
        %2573 = vmatprep.mubr.f32.mxu0 0.0
        %2574 = vmatmul.mubr.f32.gmra.mxu0 %v2424
        %v2575 = vpop.f32.mrf.mxu0
        %v2576 = vadd.f32 0.0, %v2575
        %v2577 = vpop.f32.mrf.mxu0
        %2578 = vmatprep.mubr.f32.mxu0 0.0
        %2579 = vmatmul.mubr.f32.gmra.mxu0 %v2426
        %v2580 = vpop.f32.mrf.mxu0
        %v2581 = vadd.f32 0.0, %v2580
        %v2582 = vpop.f32.mrf.mxu0
        %2583 = vmatprep.mubr.f32.mxu0 0.0
        %2584 = vmatmul.mubr.f32.gmra.mxu0 %v2428
        %v2585 = vpop.f32.mrf.mxu0
        %v2586 = vadd.f32 0.0, %v2585
        %v2587 = vpop.f32.mrf.mxu0
        %2588 = vmatprep.mubr.f32.mxu0 0.0
        %2589 = vmatmul.mubr.f32.gmra.mxu0 %v2430
        %v2590 = vpop.f32.mrf.mxu0
        %v2591 = vadd.f32 0.0, %v2590
        %v2592 = vpop.f32.mrf.mxu0
        %2593 = vmatprep.mubr.f32.mxu0 0.0
        %2594 = vmatmul.mubr.f32.gmra.mxu0 %v2432
        %v2595 = vpop.f32.mrf.mxu0
        %v2596 = vadd.f32 0.0, %v2595
        %v2597 = vpop.f32.mrf.mxu0
        %2598 = vmatprep.mubr.f32.mxu0 0.0
        %2599 = vmatmul.mubr.f32.gmra.mxu0 %v2434
        %v2600 = vpop.f32.mrf.mxu0
        %v2601 = vadd.f32 0.0, %v2600
        %v2602 = vpop.f32.mrf.mxu0
        %2603 = vmatprep.mubr.f32.mxu0 0.0
        %2604 = vmatmul.mubr.f32.gmra.mxu0 %v2436
        %v2605 = vpop.f32.mrf.mxu0
        %v2606 = vadd.f32 0.0, %v2605
        %v2607 = vpop.f32.mrf.mxu0
        %2608 = vmatprep.mubr.f32.mxu0 0.0
        %2609 = vmatmul.mubr.f32.gmra.mxu0 %v2438
        %v2610 = vpop.f32.mrf.mxu0
        %v2611 = vadd.f32 0.0, %v2610
        %v2612 = vpop.f32.mrf.mxu0
        %2613 = vmatprep.mubr.f32.mxu0 0.0
        %2614 = vmatmul.mubr.f32.gmra.mxu0 %v2440
        %v2615 = vpop.f32.mrf.mxu0
        %v2616 = vadd.f32 0.0, %v2615
        %v2617 = vpop.f32.mrf.mxu0
        %2618 = vmatprep.mubr.f32.mxu0 0.0
        %2619 = vmatmul.mubr.f32.gmra.mxu0 %v2442
        %v2620 = vpop.f32.mrf.mxu0
        %v2621 = vadd.f32 0.0, %v2620
        %v2622 = vpop.f32.mrf.mxu0
        %2623 = vmatprep.mubr.f32.mxu0 0.0
        %2624 = vmatmul.mubr.f32.gmra.mxu0 %v2444
        %v2625 = vpop.f32.mrf.mxu0
        %v2626 = vadd.f32 0.0, %v2625
        %v2627 = vpop.f32.mrf.mxu0
        %2628 = vmatprep.mubr.f32.mxu0 0.0
        %2629 = vmatmul.mubr.f32.gmra.mxu0 %v2446
        %v2630 = vpop.f32.mrf.mxu0
        %v2631 = vadd.f32 0.0, %v2630
        %v2632 = vpop.f32.mrf.mxu0
        %2633 = vmatprep.mubr.f32.mxu0 0.0
        %2634 = vmatmul.mubr.f32.gmra.mxu0 %v2448
        %v2635 = vpop.f32.mrf.mxu0
        %v2636 = vadd.f32 0.0, %v2635
        %v2637 = vpop.f32.mrf.mxu0
        %2638 = vmatprep.mubr.f32.mxu0 0.0
        %2639 = vmatmul.mubr.f32.gmra.mxu0 %v2450
        %v2640 = vpop.f32.mrf.mxu0
        %v2641 = vadd.f32 0.0, %v2640
        %v2642 = vpop.f32.mrf.mxu0
        %2643 = vdwg.mxu0
        %2644 = vrot.lane.b32.xlu0 %v536, 32
        %v2645 = vpop.permute.xlu0 %2644
        %2646 = vrot.lane.b32.xlu0 %v542, 32
        %v2647 = vpop.permute.xlu0 %2646
        %2648 = vrot.lane.b32.xlu0 %v548, 32
        %v2649 = vpop.permute.xlu0 %2648
        %2650 = vrot.lane.b32.xlu0 %v554, 32
        %v2651 = vpop.permute.xlu0 %2650
        %2652 = vrot.lane.b32.xlu0 %v560, 32
        %v2653 = vpop.permute.xlu0 %2652
        %2654 = vrot.lane.b32.xlu0 %v566, 32
        %v2655 = vpop.permute.xlu0 %2654
        %2656 = vrot.lane.b32.xlu0 %v572, 32
        %v2657 = vpop.permute.xlu0 %2656
        %2658 = vrot.lane.b32.xlu0 %v578, 32
        %v2659 = vpop.permute.xlu0 %2658
        %2660 = vrot.lane.b32.xlu0 %v584, 32
        %v2661 = vpop.permute.xlu0 %2660
        %2662 = vrot.lane.b32.xlu0 %v590, 32
        %v2663 = vpop.permute.xlu0 %2662
        %2664 = vrot.lane.b32.xlu0 %v596, 32
        %v2665 = vpop.permute.xlu0 %2664
        %2666 = vrot.lane.b32.xlu0 %v602, 32
        %v2667 = vpop.permute.xlu0 %2666
        %2668 = vrot.lane.b32.xlu0 %v608, 32
        %v2669 = vpop.permute.xlu0 %2668
        %2670 = vrot.lane.b32.xlu0 %v614, 32
        %v2671 = vpop.permute.xlu0 %2670
        %2672 = vrot.lane.b32.xlu0 %v620, 32
        %v2673 = vpop.permute.xlu0 %2672
        %2674 = vrot.lane.b32.xlu0 %v626, 32
        %v2675 = vpop.permute.xlu0 %2674
        %2676 = vrot.lane.b32.xlu0 %v538, 32
        %v2677 = vpop.permute.xlu0 %2676
        %2678 = vrot.lane.b32.xlu0 %v544, 32
        %v2679 = vpop.permute.xlu0 %2678
        %2680 = vrot.lane.b32.xlu0 %v550, 32
        %v2681 = vpop.permute.xlu0 %2680
        %2682 = vrot.lane.b32.xlu0 %v556, 32
        %v2683 = vpop.permute.xlu0 %2682
        %2684 = vrot.lane.b32.xlu0 %v562, 32
        %v2685 = vpop.permute.xlu0 %2684
        %2686 = vrot.lane.b32.xlu0 %v568, 32
        %v2687 = vpop.permute.xlu0 %2686
        %2688 = vrot.lane.b32.xlu0 %v574, 32
        %v2689 = vpop.permute.xlu0 %2688
        %2690 = vrot.lane.b32.xlu0 %v580, 32
        %v2691 = vpop.permute.xlu0 %2690
        %2692 = vrot.lane.b32.xlu0 %v586, 32
        %v2693 = vpop.permute.xlu0 %2692
        %2694 = vrot.lane.b32.xlu0 %v592, 32
        %v2695 = vpop.permute.xlu0 %2694
        %2696 = vrot.lane.b32.xlu0 %v598, 32
        %v2697 = vpop.permute.xlu0 %2696
        %2698 = vrot.lane.b32.xlu0 %v604, 32
        %v2699 = vpop.permute.xlu0 %2698
        %2700 = vrot.lane.b32.xlu0 %v610, 32
        %v2701 = vpop.permute.xlu0 %2700
        %2702 = vrot.lane.b32.xlu0 %v616, 32
        %v2703 = vpop.permute.xlu0 %2702
        %2704 = vrot.lane.b32.xlu0 %v622, 32
        %v2705 = vpop.permute.xlu0 %2704
        %2706 = vrot.lane.b32.xlu0 %v628, 32
        %v2707 = vpop.permute.xlu0 %2706
        %v2708 = vsel %vm775, %v2645, 0
        %v2710 = vsel %vm775, %v2647, 0
        %v2712 = vsel %vm775, %v2649, 0
        %v2714 = vsel %vm775, %v2651, 0
        %v2716 = vsel %vm775, %v2653, 0
        %v2718 = vsel %vm775, %v2655, 0
        %v2720 = vsel %vm775, %v2657, 0
        %v2722 = vsel %vm775, %v2659, 0
        %v2724 = vsel %vm775, %v2661, 0
        %v2726 = vsel %vm775, %v2663, 0
        %v2728 = vsel %vm775, %v2665, 0
        %v2730 = vsel %vm775, %v2667, 0
        %v2732 = vsel %vm775, %v2669, 0
        %v2734 = vsel %vm775, %v2671, 0
        %v2736 = vsel %vm775, %v2673, 0
        %v2738 = vsel %vm775, %v2675, 0
        %v2740 = vsel %vm775, %v2677, 0
        %v2742 = vsel %vm775, %v2679, 0
        %v2744 = vsel %vm775, %v2681, 0
        %v2746 = vsel %vm775, %v2683, 0
        %v2748 = vsel %vm775, %v2685, 0
        %v2750 = vsel %vm775, %v2687, 0
        %v2752 = vsel %vm775, %v2689, 0
        %v2754 = vsel %vm775, %v2691, 0
        %v2756 = vsel %vm775, %v2693, 0
        %v2758 = vsel %vm775, %v2695, 0
        %v2760 = vsel %vm775, %v2697, 0
        %v2762 = vsel %vm775, %v2699, 0
        %v2764 = vsel %vm775, %v2701, 0
        %v2766 = vsel %vm775, %v2703, 0
        %v2768 = vsel %vm775, %v2705, 0
        %v2770 = vsel %vm775, %v2707, 0
        %2772 = vmatprep.subr.mxu0 0.0
        %2773 = vmatpush1.xpose.msra.mxu0 %v2770
        %2774 = vmatprep.subr.mxu0 0.0
        %2775 = vmatpush1.xpose.msra.mxu0 %v2768
        %2776 = vmatprep.subr.mxu0 0.0
        %2777 = vmatpush1.xpose.msra.mxu0 %v2766
        %2778 = vmatprep.subr.mxu0 0.0
        %2779 = vmatpush1.xpose.msra.mxu0 %v2764
        %2780 = vmatprep.subr.mxu0 0.0
        %2781 = vmatpush1.xpose.msra.mxu0 %v2762
        %2782 = vmatprep.subr.mxu0 0.0
        %2783 = vmatpush1.xpose.msra.mxu0 %v2760
        %2784 = vmatprep.subr.mxu0 0.0
        %2785 = vmatpush1.xpose.msra.mxu0 %v2758
        %2786 = vmatprep.subr.mxu0 0.0
        %2787 = vmatpush1.xpose.msra.mxu0 %v2756
        %2788 = vmatprep.subr.mxu0 0.0
        %2789 = vmatpush1.xpose.msra.mxu0 %v2754
        %2790 = vmatprep.subr.mxu0 0.0
        %2791 = vmatpush1.xpose.msra.mxu0 %v2752
        %2792 = vmatprep.subr.mxu0 0.0
        %2793 = vmatpush1.xpose.msra.mxu0 %v2750
        %2794 = vmatprep.subr.mxu0 0.0
        %2795 = vmatpush1.xpose.msra.mxu0 %v2748
        %2796 = vmatprep.subr.mxu0 0.0
        %2797 = vmatpush1.xpose.msra.mxu0 %v2746
        %2798 = vmatprep.subr.mxu0 0.0
        %2799 = vmatpush1.xpose.msra.mxu0 %v2744
        %2800 = vmatprep.subr.mxu0 0.0
        %2801 = vmatpush1.xpose.msra.mxu0 %v2742
        %2802 = vmatprep.subr.mxu0 0.0
        %2803 = vmatpush1.xpose.msra.mxu0 %v2740
        %2804 = vmatprep.subr.mxu0 0.0
        %2805 = vmatpush2.xpose.msra.mxu0 0.0
        %2806 = vmatprep.subr.mxu0 0.0
        %2807 = vmatpush2.xpose.msra.mxu0 0.0
        %2808 = vmatprep.subr.mxu0 0.0
        %2809 = vmatpush2.xpose.msra.mxu0 0.0
        %2810 = vmatprep.subr.mxu0 0.0
        %2811 = vmatpush2.xpose.msra.mxu0 0.0
        %2812 = vmatprep.subr.mxu0 0.0
        %2813 = vmatpush2.xpose.msra.mxu0 0.0
        %2814 = vmatprep.subr.mxu0 0.0
        %2815 = vmatpush2.xpose.msra.mxu0 0.0
        %2816 = vmatprep.subr.mxu0 0.0
        %2817 = vmatpush2.xpose.msra.mxu0 0.0
        %2818 = vmatprep.subr.mxu0 0.0
        %2819 = vmatpush2.xpose.msra.mxu0 0.0
        %2820 = vmatprep.subr.mxu0 0.0
        %2821 = vmatpush2.xpose.msra.mxu0 0.0
        %2822 = vmatprep.subr.mxu0 0.0
        %2823 = vmatpush2.xpose.msra.mxu0 0.0
        %2824 = vmatprep.subr.mxu0 0.0
        %2825 = vmatpush2.xpose.msra.mxu0 0.0
        %2826 = vmatprep.subr.mxu0 0.0
        %2827 = vmatpush2.xpose.msra.mxu0 0.0
        %2828 = vmatprep.subr.mxu0 0.0
        %2829 = vmatpush2.xpose.msra.mxu0 0.0
        %2830 = vmatprep.subr.mxu0 0.0
        %2831 = vmatpush2.xpose.msra.mxu0 0.0
        %2832 = vmatprep.subr.mxu0 0.0
        %2833 = vmatpush2.xpose.msra.mxu0 0.0
        %2834 = vmatprep.subr.mxu0 0.0
        %2835 = vmatpush2.xpose.msra.mxu0 0.0
        %2836 = vmatprep.mubr.f32.mxu0 0.0
        %2837 = vmatmul.mubr.f32.gmra.mxu0 %v2708
        %v2838 = vpop.f32.mrf.mxu0
        %v2839 = vadd.f32 0.0, %v2838
        %v2840 = vpop.f32.mrf.mxu0
        %2841 = vmatprep.mubr.f32.mxu0 0.0
        %2842 = vmatmul.mubr.f32.gmra.mxu0 %v2710
        %v2843 = vpop.f32.mrf.mxu0
        %v2844 = vadd.f32 0.0, %v2843
        %v2845 = vpop.f32.mrf.mxu0
        %2846 = vmatprep.mubr.f32.mxu0 0.0
        %2847 = vmatmul.mubr.f32.gmra.mxu0 %v2712
        %v2848 = vpop.f32.mrf.mxu0
        %v2849 = vadd.f32 0.0, %v2848
        %v2850 = vpop.f32.mrf.mxu0
        %2851 = vmatprep.mubr.f32.mxu0 0.0
        %2852 = vmatmul.mubr.f32.gmra.mxu0 %v2714
        %v2853 = vpop.f32.mrf.mxu0
        %v2854 = vadd.f32 0.0, %v2853
        %v2855 = vpop.f32.mrf.mxu0
        %2856 = vmatprep.mubr.f32.mxu0 0.0
        %2857 = vmatmul.mubr.f32.gmra.mxu0 %v2716
        %v2858 = vpop.f32.mrf.mxu0
        %v2859 = vadd.f32 0.0, %v2858
        %v2860 = vpop.f32.mrf.mxu0
        %2861 = vmatprep.mubr.f32.mxu0 0.0
        %2862 = vmatmul.mubr.f32.gmra.mxu0 %v2718
        %v2863 = vpop.f32.mrf.mxu0
        %v2864 = vadd.f32 0.0, %v2863
        %v2865 = vpop.f32.mrf.mxu0
        %2866 = vmatprep.mubr.f32.mxu0 0.0
        %2867 = vmatmul.mubr.f32.gmra.mxu0 %v2720
        %v2868 = vpop.f32.mrf.mxu0
        %v2869 = vadd.f32 0.0, %v2868
        %v2870 = vpop.f32.mrf.mxu0
        %2871 = vmatprep.mubr.f32.mxu0 0.0
        %2872 = vmatmul.mubr.f32.gmra.mxu0 %v2722
        %v2873 = vpop.f32.mrf.mxu0
        %v2874 = vadd.f32 0.0, %v2873
        %v2875 = vpop.f32.mrf.mxu0
        %2876 = vmatprep.mubr.f32.mxu0 0.0
        %2877 = vmatmul.mubr.f32.gmra.mxu0 %v2724
        %v2878 = vpop.f32.mrf.mxu0
        %v2879 = vadd.f32 0.0, %v2878
        %v2880 = vpop.f32.mrf.mxu0
        %2881 = vmatprep.mubr.f32.mxu0 0.0
        %2882 = vmatmul.mubr.f32.gmra.mxu0 %v2726
        %v2883 = vpop.f32.mrf.mxu0
        %v2884 = vadd.f32 0.0, %v2883
        %v2885 = vpop.f32.mrf.mxu0
        %2886 = vmatprep.mubr.f32.mxu0 0.0
        %2887 = vmatmul.mubr.f32.gmra.mxu0 %v2728
        %v2888 = vpop.f32.mrf.mxu0
        %v2889 = vadd.f32 0.0, %v2888
        %v2890 = vpop.f32.mrf.mxu0
        %2891 = vmatprep.mubr.f32.mxu0 0.0
        %2892 = vmatmul.mubr.f32.gmra.mxu0 %v2730
        %v2893 = vpop.f32.mrf.mxu0
        %v2894 = vadd.f32 0.0, %v2893
        %v2895 = vpop.f32.mrf.mxu0
        %2896 = vmatprep.mubr.f32.mxu0 0.0
        %2897 = vmatmul.mubr.f32.gmra.mxu0 %v2732
        %v2898 = vpop.f32.mrf.mxu0
        %v2899 = vadd.f32 0.0, %v2898
        %v2900 = vpop.f32.mrf.mxu0
        %2901 = vmatprep.mubr.f32.mxu0 0.0
        %2902 = vmatmul.mubr.f32.gmra.mxu0 %v2734
        %v2903 = vpop.f32.mrf.mxu0
        %v2904 = vadd.f32 0.0, %v2903
        %v2905 = vpop.f32.mrf.mxu0
        %2906 = vmatprep.mubr.f32.mxu0 0.0
        %2907 = vmatmul.mubr.f32.gmra.mxu0 %v2736
        %v2908 = vpop.f32.mrf.mxu0
        %v2909 = vadd.f32 0.0, %v2908
        %v2910 = vpop.f32.mrf.mxu0
        %2911 = vmatprep.mubr.f32.mxu0 0.0
        %2912 = vmatmul.mubr.f32.gmra.mxu0 %v2738
        %v2913 = vpop.f32.mrf.mxu0
        %v2914 = vadd.f32 0.0, %v2913
        %v2915 = vpop.f32.mrf.mxu0
        %2916 = vdwg.mxu0
        %v2917 = vmul.f32 %v2839, 0.17677669
        %v2918 = vmul.f32 %v2844, 0.17677669
        %v2919 = vmul.f32 %v2849, 0.17677669
        %v2920 = vmul.f32 %v2854, 0.17677669
        %v2921 = vmul.f32 %v2859, 0.17677669
        %v2922 = vmul.f32 %v2864, 0.17677669
        %v2923 = vmul.f32 %v2869, 0.17677669
        %v2924 = vmul.f32 %v2874, 0.17677669
        %v2925 = vmul.f32 %v2879, 0.17677669
        %v2926 = vmul.f32 %v2884, 0.17677669
        %v2927 = vmul.f32 %v2889, 0.17677669
        %v2928 = vmul.f32 %v2894, 0.17677669
        %v2929 = vmul.f32 %v2899, 0.17677669
        %v2930 = vmul.f32 %v2904, 0.17677669
        %v2931 = vmul.f32 %v2909, 0.17677669
        %v2932 = vmul.f32 %v2914, 0.17677669
        %v2933 = vadd.f32 %v2917, %v1037
        %v2934 = vadd.f32 %v2918, %v1037
        %v2935 = vadd.f32 %v2919, %v1037
        %v2936 = vadd.f32 %v2920, %v1037
        %v2937 = vadd.f32 %v2921, %v1037
        %v2938 = vadd.f32 %v2922, %v1037
        %v2939 = vadd.f32 %v2923, %v1037
        %v2940 = vadd.f32 %v2924, %v1037
        %v2941 = vadd.f32 %v2925, %v1037
        %v2942 = vadd.f32 %v2926, %v1037
        %v2943 = vadd.f32 %v2927, %v1037
        %v2944 = vadd.f32 %v2928, %v1037
        %v2945 = vadd.f32 %v2929, %v1037
        %v2946 = vadd.f32 %v2930, %v1037
        %v2947 = vadd.f32 %v2931, %v1037
        %v2948 = vadd.f32 %v2932, %v1037
        %2949 = vmax.xlane.f32.xlu0 %v2933
        %v2950 = vpop.xlane.xlu0 %2949
        %2951 = vmax.xlane.f32.xlu0 %v2934
        %v2952 = vpop.xlane.xlu0 %2951
        %2953 = vmax.xlane.f32.xlu0 %v2935
        %v2954 = vpop.xlane.xlu0 %2953
        %2955 = vmax.xlane.f32.xlu0 %v2936
        %v2956 = vpop.xlane.xlu0 %2955
        %2957 = vmax.xlane.f32.xlu0 %v2937
        %v2958 = vpop.xlane.xlu0 %2957
        %2959 = vmax.xlane.f32.xlu0 %v2938
        %v2960 = vpop.xlane.xlu0 %2959
        %2961 = vmax.xlane.f32.xlu0 %v2939
        %v2962 = vpop.xlane.xlu0 %2961
        %2963 = vmax.xlane.f32.xlu0 %v2940
        %v2964 = vpop.xlane.xlu0 %2963
        %2965 = vmax.xlane.f32.xlu0 %v2941
        %v2966 = vpop.xlane.xlu0 %2965
        %2967 = vmax.xlane.f32.xlu0 %v2942
        %v2968 = vpop.xlane.xlu0 %2967
        %2969 = vmax.xlane.f32.xlu0 %v2943
        %v2970 = vpop.xlane.xlu0 %2969
        %2971 = vmax.xlane.f32.xlu0 %v2944
        %v2972 = vpop.xlane.xlu0 %2971
        %2973 = vmax.xlane.f32.xlu0 %v2945
        %v2974 = vpop.xlane.xlu0 %2973
        %2975 = vmax.xlane.f32.xlu0 %v2946
        %v2976 = vpop.xlane.xlu0 %2975
        %2977 = vmax.xlane.f32.xlu0 %v2947
        %v2978 = vpop.xlane.xlu0 %2977
        %2979 = vmax.xlane.f32.xlu0 %v2948
        %v2980 = vpop.xlane.xlu0 %2979
        %v2981 = vsub.f32 %v2933, %v2950
        %v2982 = vsub.f32 %v2934, %v2952
        %v2983 = vsub.f32 %v2935, %v2954
        %v2984 = vsub.f32 %v2936, %v2956
        %v2985 = vsub.f32 %v2937, %v2958
        %v2986 = vsub.f32 %v2938, %v2960
        %v2987 = vsub.f32 %v2939, %v2962
        %v2988 = vsub.f32 %v2940, %v2964
        %v2989 = vsub.f32 %v2941, %v2966
        %v2990 = vsub.f32 %v2942, %v2968
        %v2991 = vsub.f32 %v2943, %v2970
        %v2992 = vsub.f32 %v2944, %v2972
        %v2993 = vsub.f32 %v2945, %v2974
        %v2994 = vsub.f32 %v2946, %v2976
        %v2995 = vsub.f32 %v2947, %v2978
        %v2996 = vsub.f32 %v2948, %v2980
        %v2997 = vmul.f32 %v2981, 1.442695
        %v2998 = vpow.pop %v2997
        %v2999 = vmul.f32 %v2982, 1.442695
        %v3000 = vpow.pop %v2999
        %v3001 = vmul.f32 %v2983, 1.442695
        %v3002 = vpow.pop %v3001
        %v3003 = vmul.f32 %v2984, 1.442695
        %v3004 = vpow.pop %v3003
        %v3005 = vmul.f32 %v2985, 1.442695
        %v3006 = vpow.pop %v3005
        %v3007 = vmul.f32 %v2986, 1.442695
        %v3008 = vpow.pop %v3007
        %v3009 = vmul.f32 %v2987, 1.442695
        %v3010 = vpow.pop %v3009
        %v3011 = vmul.f32 %v2988, 1.442695
        %v3012 = vpow.pop %v3011
        %v3013 = vmul.f32 %v2989, 1.442695
        %v3014 = vpow.pop %v3013
        %v3015 = vmul.f32 %v2990, 1.442695
        %v3016 = vpow.pop %v3015
        %v3017 = vmul.f32 %v2991, 1.442695
        %v3018 = vpow.pop %v3017
        %v3019 = vmul.f32 %v2992, 1.442695
        %v3020 = vpow.pop %v3019
        %v3021 = vmul.f32 %v2993, 1.442695
        %v3022 = vpow.pop %v3021
        %v3023 = vmul.f32 %v2994, 1.442695
        %v3024 = vpow.pop %v3023
        %v3025 = vmul.f32 %v2995, 1.442695
        %v3026 = vpow.pop %v3025
        %v3027 = vmul.f32 %v2996, 1.442695
        %v3028 = vpow.pop %v3027
        %3029 = vadd.xlane.f32.xlu0 %v2998
        %v3030 = vpop.xlane.xlu0 %3029
        %3031 = vadd.xlane.f32.xlu0 %v3000
        %v3032 = vpop.xlane.xlu0 %3031
        %3033 = vadd.xlane.f32.xlu0 %v3002
        %v3034 = vpop.xlane.xlu0 %3033
        %3035 = vadd.xlane.f32.xlu0 %v3004
        %v3036 = vpop.xlane.xlu0 %3035
        %3037 = vadd.xlane.f32.xlu0 %v3006
        %v3038 = vpop.xlane.xlu0 %3037
        %3039 = vadd.xlane.f32.xlu0 %v3008
        %v3040 = vpop.xlane.xlu0 %3039
        %3041 = vadd.xlane.f32.xlu0 %v3010
        %v3042 = vpop.xlane.xlu0 %3041
        %3043 = vadd.xlane.f32.xlu0 %v3012
        %v3044 = vpop.xlane.xlu0 %3043
        %3045 = vadd.xlane.f32.xlu0 %v3014
        %v3046 = vpop.xlane.xlu0 %3045
        %3047 = vadd.xlane.f32.xlu0 %v3016
        %v3048 = vpop.xlane.xlu0 %3047
        %3049 = vadd.xlane.f32.xlu0 %v3018
        %v3050 = vpop.xlane.xlu0 %3049
        %3051 = vadd.xlane.f32.xlu0 %v3020
        %v3052 = vpop.xlane.xlu0 %3051
        %3053 = vadd.xlane.f32.xlu0 %v3022
        %v3054 = vpop.xlane.xlu0 %3053
        %3055 = vadd.xlane.f32.xlu0 %v3024
        %v3056 = vpop.xlane.xlu0 %3055
        %3057 = vadd.xlane.f32.xlu0 %v3026
        %v3058 = vpop.xlane.xlu0 %3057
        %3059 = vadd.xlane.f32.xlu0 %v3028
        %v3060 = vpop.xlane.xlu0 %3059
        %v3061 = vrcp.pop %v3030
        %v3062 = vmul.f32 %v2998, %v3061
        %v3063 = vrcp.pop %v3032
        %v3064 = vmul.f32 %v3000, %v3063
        %v3065 = vrcp.pop %v3034
        %v3066 = vmul.f32 %v3002, %v3065
        %v3067 = vrcp.pop %v3036
        %v3068 = vmul.f32 %v3004, %v3067
        %v3069 = vrcp.pop %v3038
        %v3070 = vmul.f32 %v3006, %v3069
        %v3071 = vrcp.pop %v3040
        %v3072 = vmul.f32 %v3008, %v3071
        %v3073 = vrcp.pop %v3042
        %v3074 = vmul.f32 %v3010, %v3073
        %v3075 = vrcp.pop %v3044
        %v3076 = vmul.f32 %v3012, %v3075
        %v3077 = vrcp.pop %v3046
        %v3078 = vmul.f32 %v3014, %v3077
        %v3079 = vrcp.pop %v3048
        %v3080 = vmul.f32 %v3016, %v3079
        %v3081 = vrcp.pop %v3050
        %v3082 = vmul.f32 %v3018, %v3081
        %v3083 = vrcp.pop %v3052
        %v3084 = vmul.f32 %v3020, %v3083
        %v3085 = vrcp.pop %v3054
        %v3086 = vmul.f32 %v3022, %v3085
        %v3087 = vrcp.pop %v3056
        %v3088 = vmul.f32 %v3024, %v3087
        %v3089 = vrcp.pop %v3058
        %v3090 = vmul.f32 %v3026, %v3089
        %v3091 = vrcp.pop %v3060
        %v3092 = vmul.f32 %v3028, %v3091
        %3093 = vrot.lane.b32.xlu0 %v697, 32
        %v3094 = vpop.permute.xlu0 %3093
        %3095 = vrot.lane.b32.xlu0 %v702, 32
        %v3096 = vpop.permute.xlu0 %3095
        %3097 = vrot.lane.b32.xlu0 %v707, 32
        %v3098 = vpop.permute.xlu0 %3097
        %3099 = vrot.lane.b32.xlu0 %v712, 32
        %v3100 = vpop.permute.xlu0 %3099
        %3101 = vrot.lane.b32.xlu0 %v717, 32
        %v3102 = vpop.permute.xlu0 %3101
        %3103 = vrot.lane.b32.xlu0 %v722, 32
        %v3104 = vpop.permute.xlu0 %3103
        %3105 = vrot.lane.b32.xlu0 %v727, 32
        %v3106 = vpop.permute.xlu0 %3105
        %3107 = vrot.lane.b32.xlu0 %v732, 32
        %v3108 = vpop.permute.xlu0 %3107
        %3109 = vrot.lane.b32.xlu0 %v737, 32
        %v3110 = vpop.permute.xlu0 %3109
        %3111 = vrot.lane.b32.xlu0 %v742, 32
        %v3112 = vpop.permute.xlu0 %3111
        %3113 = vrot.lane.b32.xlu0 %v747, 32
        %v3114 = vpop.permute.xlu0 %3113
        %3115 = vrot.lane.b32.xlu0 %v752, 32
        %v3116 = vpop.permute.xlu0 %3115
        %3117 = vrot.lane.b32.xlu0 %v757, 32
        %v3118 = vpop.permute.xlu0 %3117
        %3119 = vrot.lane.b32.xlu0 %v762, 32
        %v3120 = vpop.permute.xlu0 %3119
        %3121 = vrot.lane.b32.xlu0 %v767, 32
        %v3122 = vpop.permute.xlu0 %3121
        %3123 = vrot.lane.b32.xlu0 %v772, 32
        %v3124 = vpop.permute.xlu0 %3123
        %3141 = vmatprep.subr.mxu0 0.0
        %3142 = vmatpush1.msra.mxu0 %v3124
        %3143 = vmatprep.subr.mxu0 0.0
        %3144 = vmatpush1.msra.mxu0 %v3122
        %3145 = vmatprep.subr.mxu0 0.0
        %3146 = vmatpush1.msra.mxu0 %v3120
        %3147 = vmatprep.subr.mxu0 0.0
        %3148 = vmatpush1.msra.mxu0 %v3118
        %3149 = vmatprep.subr.mxu0 0.0
        %3150 = vmatpush1.msra.mxu0 %v3116
        %3151 = vmatprep.subr.mxu0 0.0
        %3152 = vmatpush1.msra.mxu0 %v3114
        %3153 = vmatprep.subr.mxu0 0.0
        %3154 = vmatpush1.msra.mxu0 %v3112
        %3155 = vmatprep.subr.mxu0 0.0
        %3156 = vmatpush1.msra.mxu0 %v3110
        %3157 = vmatprep.subr.mxu0 0.0
        %3158 = vmatpush1.msra.mxu0 %v3108
        %3159 = vmatprep.subr.mxu0 0.0
        %3160 = vmatpush1.msra.mxu0 %v3106
        %3161 = vmatprep.subr.mxu0 0.0
        %3162 = vmatpush1.msra.mxu0 %v3104
        %3163 = vmatprep.subr.mxu0 0.0
        %3164 = vmatpush1.msra.mxu0 %v3102
        %3165 = vmatprep.subr.mxu0 0.0
        %3166 = vmatpush1.msra.mxu0 %v3100
        %3167 = vmatprep.subr.mxu0 0.0
        %3168 = vmatpush1.msra.mxu0 %v3098
        %3169 = vmatprep.subr.mxu0 0.0
        %3170 = vmatpush1.msra.mxu0 %v3096
        %3171 = vmatprep.subr.mxu0 0.0
        %3172 = vmatpush1.msra.mxu0 %v3094
        %3173 = vmatprep.subr.mxu0 0.0
        %3174 = vmatpush2.msra.mxu0 0.0
        %3175 = vmatprep.subr.mxu0 0.0
        %3176 = vmatpush2.msra.mxu0 0.0
        %3177 = vmatprep.subr.mxu0 0.0
        %3178 = vmatpush2.msra.mxu0 0.0
        %3179 = vmatprep.subr.mxu0 0.0
        %3180 = vmatpush2.msra.mxu0 0.0
        %3181 = vmatprep.subr.mxu0 0.0
        %3182 = vmatpush2.msra.mxu0 0.0
        %3183 = vmatprep.subr.mxu0 0.0
        %3184 = vmatpush2.msra.mxu0 0.0
        %3185 = vmatprep.subr.mxu0 0.0
        %3186 = vmatpush2.msra.mxu0 0.0
        %3187 = vmatprep.subr.mxu0 0.0
        %3188 = vmatpush2.msra.mxu0 0.0
        %3189 = vmatprep.subr.mxu0 0.0
        %3190 = vmatpush2.msra.mxu0 0.0
        %3191 = vmatprep.subr.mxu0 0.0
        %3192 = vmatpush2.msra.mxu0 0.0
        %3193 = vmatprep.subr.mxu0 0.0
        %3194 = vmatpush2.msra.mxu0 0.0
        %3195 = vmatprep.subr.mxu0 0.0
        %3196 = vmatpush2.msra.mxu0 0.0
        %3197 = vmatprep.subr.mxu0 0.0
        %3198 = vmatpush2.msra.mxu0 0.0
        %3199 = vmatprep.subr.mxu0 0.0
        %3200 = vmatpush2.msra.mxu0 0.0
        %3201 = vmatprep.subr.mxu0 0.0
        %3202 = vmatpush2.msra.mxu0 0.0
        %3203 = vmatprep.subr.mxu0 0.0
        %3204 = vmatpush2.msra.mxu0 0.0
        %3205 = vmatprep.mubr.f32.mxu0 0.0
        %3206 = vmatmul.mubr.f32.gmra.mxu0 %v3062
        %v3207 = vpop.f32.mrf.mxu0
        %v3208 = vadd.f32 0.0, %v3207
        %v3209 = vpop.f32.mrf.mxu0
        %3210 = vmatprep.mubr.f32.mxu0 0.0
        %3211 = vmatmul.mubr.f32.gmra.mxu0 %v3064
        %v3212 = vpop.f32.mrf.mxu0
        %v3213 = vadd.f32 0.0, %v3212
        %v3214 = vpop.f32.mrf.mxu0
        %3215 = vmatprep.mubr.f32.mxu0 0.0
        %3216 = vmatmul.mubr.f32.gmra.mxu0 %v3066
        %v3217 = vpop.f32.mrf.mxu0
        %v3218 = vadd.f32 0.0, %v3217
        %v3219 = vpop.f32.mrf.mxu0
        %3220 = vmatprep.mubr.f32.mxu0 0.0
        %3221 = vmatmul.mubr.f32.gmra.mxu0 %v3068
        %v3222 = vpop.f32.mrf.mxu0
        %v3223 = vadd.f32 0.0, %v3222
        %v3224 = vpop.f32.mrf.mxu0
        %3225 = vmatprep.mubr.f32.mxu0 0.0
        %3226 = vmatmul.mubr.f32.gmra.mxu0 %v3070
        %v3227 = vpop.f32.mrf.mxu0
        %v3228 = vadd.f32 0.0, %v3227
        %v3229 = vpop.f32.mrf.mxu0
        %3230 = vmatprep.mubr.f32.mxu0 0.0
        %3231 = vmatmul.mubr.f32.gmra.mxu0 %v3072
        %v3232 = vpop.f32.mrf.mxu0
        %v3233 = vadd.f32 0.0, %v3232
        %v3234 = vpop.f32.mrf.mxu0
        %3235 = vmatprep.mubr.f32.mxu0 0.0
        %3236 = vmatmul.mubr.f32.gmra.mxu0 %v3074
        %v3237 = vpop.f32.mrf.mxu0
        %v3238 = vadd.f32 0.0, %v3237
        %v3239 = vpop.f32.mrf.mxu0
        %3240 = vmatprep.mubr.f32.mxu0 0.0
        %3241 = vmatmul.mubr.f32.gmra.mxu0 %v3076
        %v3242 = vpop.f32.mrf.mxu0
        %v3243 = vadd.f32 0.0, %v3242
        %v3244 = vpop.f32.mrf.mxu0
        %3245 = vmatprep.mubr.f32.mxu0 0.0
        %3246 = vmatmul.mubr.f32.gmra.mxu0 %v3078
        %v3247 = vpop.f32.mrf.mxu0
        %v3248 = vadd.f32 0.0, %v3247
        %v3249 = vpop.f32.mrf.mxu0
        %3250 = vmatprep.mubr.f32.mxu0 0.0
        %3251 = vmatmul.mubr.f32.gmra.mxu0 %v3080
        %v3252 = vpop.f32.mrf.mxu0
        %v3253 = vadd.f32 0.0, %v3252
        %v3254 = vpop.f32.mrf.mxu0
        %3255 = vmatprep.mubr.f32.mxu0 0.0
        %3256 = vmatmul.mubr.f32.gmra.mxu0 %v3082
        %v3257 = vpop.f32.mrf.mxu0
        %v3258 = vadd.f32 0.0, %v3257
        %v3259 = vpop.f32.mrf.mxu0
        %3260 = vmatprep.mubr.f32.mxu0 0.0
        %3261 = vmatmul.mubr.f32.gmra.mxu0 %v3084
        %v3262 = vpop.f32.mrf.mxu0
        %v3263 = vadd.f32 0.0, %v3262
        %v3264 = vpop.f32.mrf.mxu0
        %3265 = vmatprep.mubr.f32.mxu0 0.0
        %3266 = vmatmul.mubr.f32.gmra.mxu0 %v3086
        %v3267 = vpop.f32.mrf.mxu0
        %v3268 = vadd.f32 0.0, %v3267
        %v3269 = vpop.f32.mrf.mxu0
        %3270 = vmatprep.mubr.f32.mxu0 0.0
        %3271 = vmatmul.mubr.f32.gmra.mxu0 %v3088
        %v3272 = vpop.f32.mrf.mxu0
        %v3273 = vadd.f32 0.0, %v3272
        %v3274 = vpop.f32.mrf.mxu0
        %3275 = vmatprep.mubr.f32.mxu0 0.0
        %3276 = vmatmul.mubr.f32.gmra.mxu0 %v3090
        %v3277 = vpop.f32.mrf.mxu0
        %v3278 = vadd.f32 0.0, %v3277
        %v3279 = vpop.f32.mrf.mxu0
        %3280 = vmatprep.mubr.f32.mxu0 0.0
        %3281 = vmatmul.mubr.f32.gmra.mxu0 %v3092
        %v3282 = vpop.f32.mrf.mxu0
        %v3283 = vadd.f32 0.0, %v3282
        %v3284 = vpop.f32.mrf.mxu0
        %3285 = vdwg.mxu0
        %3302 = vrot.lane.b32.xlu0 %v1924, 32
        %v3303 = vpop.permute.xlu0 %3302
        %3304 = vrot.lane.b32.xlu0 %v1929, 32
        %v3305 = vpop.permute.xlu0 %3304
        %3306 = vrot.lane.b32.xlu0 %v1934, 32
        %v3307 = vpop.permute.xlu0 %3306
        %3308 = vrot.lane.b32.xlu0 %v1939, 32
        %v3309 = vpop.permute.xlu0 %3308
        %3310 = vrot.lane.b32.xlu0 %v1944, 32
        %v3311 = vpop.permute.xlu0 %3310
        %3312 = vrot.lane.b32.xlu0 %v1949, 32
        %v3313 = vpop.permute.xlu0 %3312
        %3314 = vrot.lane.b32.xlu0 %v1954, 32
        %v3315 = vpop.permute.xlu0 %3314
        %3316 = vrot.lane.b32.xlu0 %v1959, 32
        %v3317 = vpop.permute.xlu0 %3316
        %3318 = vrot.lane.b32.xlu0 %v1964, 32
        %v3319 = vpop.permute.xlu0 %3318
        %3320 = vrot.lane.b32.xlu0 %v1969, 32
        %v3321 = vpop.permute.xlu0 %3320
        %3322 = vrot.lane.b32.xlu0 %v1974, 32
        %v3323 = vpop.permute.xlu0 %3322
        %3324 = vrot.lane.b32.xlu0 %v1979, 32
        %v3325 = vpop.permute.xlu0 %3324
        %3326 = vrot.lane.b32.xlu0 %v1984, 32
        %v3327 = vpop.permute.xlu0 %3326
        %3328 = vrot.lane.b32.xlu0 %v1989, 32
        %v3329 = vpop.permute.xlu0 %3328
        %3330 = vrot.lane.b32.xlu0 %v1994, 32
        %v3331 = vpop.permute.xlu0 %3330
        %3332 = vrot.lane.b32.xlu0 %v1999, 32
        %v3333 = vpop.permute.xlu0 %3332
        %3366 = vrot.lane.b32.xlu0 %v2566, 64
        %v3367 = vpop.permute.xlu0 %3366
        %3368 = vrot.lane.b32.xlu0 %v2571, 64
        %v3369 = vpop.permute.xlu0 %3368
        %3370 = vrot.lane.b32.xlu0 %v2576, 64
        %v3371 = vpop.permute.xlu0 %3370
        %3372 = vrot.lane.b32.xlu0 %v2581, 64
        %v3373 = vpop.permute.xlu0 %3372
        %3374 = vrot.lane.b32.xlu0 %v2586, 64
        %v3375 = vpop.permute.xlu0 %3374
        %3376 = vrot.lane.b32.xlu0 %v2591, 64
        %v3377 = vpop.permute.xlu0 %3376
        %3378 = vrot.lane.b32.xlu0 %v2596, 64
        %v3379 = vpop.permute.xlu0 %3378
        %3380 = vrot.lane.b32.xlu0 %v2601, 64
        %v3381 = vpop.permute.xlu0 %3380
        %3382 = vrot.lane.b32.xlu0 %v2606, 64
        %v3383 = vpop.permute.xlu0 %3382
        %3384 = vrot.lane.b32.xlu0 %v2611, 64
        %v3385 = vpop.permute.xlu0 %3384
        %3386 = vrot.lane.b32.xlu0 %v2616, 64
        %v3387 = vpop.permute.xlu0 %3386
        %3388 = vrot.lane.b32.xlu0 %v2621, 64
        %v3389 = vpop.permute.xlu0 %3388
        %3390 = vrot.lane.b32.xlu0 %v2626, 64
        %v3391 = vpop.permute.xlu0 %3390
        %3392 = vrot.lane.b32.xlu0 %v2631, 64
        %v3393 = vpop.permute.xlu0 %3392
        %3394 = vrot.lane.b32.xlu0 %v2636, 64
        %v3395 = vpop.permute.xlu0 %3394
        %3396 = vrot.lane.b32.xlu0 %v2641, 64
        %v3397 = vpop.permute.xlu0 %3396
        %3430 = vrot.lane.b32.xlu0 %v3208, 96
        %v3431 = vpop.permute.xlu0 %3430
        %3432 = vrot.lane.b32.xlu0 %v3213, 96
        %v3433 = vpop.permute.xlu0 %3432
        %3434 = vrot.lane.b32.xlu0 %v3218, 96
        %v3435 = vpop.permute.xlu0 %3434
        %3436 = vrot.lane.b32.xlu0 %v3223, 96
        %v3437 = vpop.permute.xlu0 %3436
        %3438 = vrot.lane.b32.xlu0 %v3228, 96
        %v3439 = vpop.permute.xlu0 %3438
        %3440 = vrot.lane.b32.xlu0 %v3233, 96
        %v3441 = vpop.permute.xlu0 %3440
        %3442 = vrot.lane.b32.xlu0 %v3238, 96
        %v3443 = vpop.permute.xlu0 %3442
        %3444 = vrot.lane.b32.xlu0 %v3243, 96
        %v3445 = vpop.permute.xlu0 %3444
        %3446 = vrot.lane.b32.xlu0 %v3248, 96
        %v3447 = vpop.permute.xlu0 %3446
        %3448 = vrot.lane.b32.xlu0 %v3253, 96
        %v3449 = vpop.permute.xlu0 %3448
        %3450 = vrot.lane.b32.xlu0 %v3258, 96
        %v3451 = vpop.permute.xlu0 %3450
        %3452 = vrot.lane.b32.xlu0 %v3263, 96
        %v3453 = vpop.permute.xlu0 %3452
        %3454 = vrot.lane.b32.xlu0 %v3268, 96
        %v3455 = vpop.permute.xlu0 %3454
        %3456 = vrot.lane.b32.xlu0 %v3273, 96
        %v3457 = vpop.permute.xlu0 %3456
        %3458 = vrot.lane.b32.xlu0 %v3278, 96
        %v3459 = vpop.permute.xlu0 %3458
        %3460 = vrot.lane.b32.xlu0 %v3283, 96
        %v3461 = vpop.permute.xlu0 %3460
        %v3478 = vsel %vm775, %v1266, %v3303
        %v3479 = vsel %vm775, %v1271, %v3305
        %v3480 = vsel %vm775, %v1276, %v3307
        %v3481 = vsel %vm775, %v1281, %v3309
        %v3482 = vsel %vm775, %v1286, %v3311
        %v3483 = vsel %vm775, %v1291, %v3313
        %v3484 = vsel %vm775, %v1296, %v3315
        %v3485 = vsel %vm775, %v1301, %v3317
        %v3486 = vsel %vm775, %v1306, %v3319
        %v3487 = vsel %vm775, %v1311, %v3321
        %v3488 = vsel %vm775, %v1316, %v3323
        %v3489 = vsel %vm775, %v1321, %v3325
        %v3490 = vsel %vm775, %v1326, %v3327
        %v3491 = vsel %vm775, %v1331, %v3329
        %v3492 = vsel %vm775, %v1336, %v3331
        %v3493 = vsel %vm775, %v1341, %v3333
        %vm3494 = vcmask 523264
        %v3495 = vsel %vm3494, %v3478, %v3367
        %v3496 = vsel %vm3494, %v3479, %v3369
        %v3497 = vsel %vm3494, %v3480, %v3371
        %v3498 = vsel %vm3494, %v3481, %v3373
        %v3499 = vsel %vm3494, %v3482, %v3375
        %v3500 = vsel %vm3494, %v3483, %v3377
        %v3501 = vsel %vm3494, %v3484, %v3379
        %v3502 = vsel %vm3494, %v3485, %v3381
        %v3503 = vsel %vm3494, %v3486, %v3383
        %v3504 = vsel %vm3494, %v3487, %v3385
        %v3505 = vsel %vm3494, %v3488, %v3387
        %v3506 = vsel %vm3494, %v3489, %v3389
        %v3507 = vsel %vm3494, %v3490, %v3391
        %v3508 = vsel %vm3494, %v3491, %v3393
        %v3509 = vsel %vm3494, %v3492, %v3395
        %v3510 = vsel %vm3494, %v3493, %v3397
        %vm3511 = vcmask 785408
        %v3512 = vsel %vm3511, %v3495, %v3431
        %v3513 = vsel %vm3511, %v3496, %v3433
        %v3514 = vsel %vm3511, %v3497, %v3435
        %v3515 = vsel %vm3511, %v3498, %v3437
        %v3516 = vsel %vm3511, %v3499, %v3439
        %v3517 = vsel %vm3511, %v3500, %v3441
        %v3518 = vsel %vm3511, %v3501, %v3443
        %v3519 = vsel %vm3511, %v3502, %v3445
        %v3520 = vsel %vm3511, %v3503, %v3447
        %v3521 = vsel %vm3511, %v3504, %v3449
        %v3522 = vsel %vm3511, %v3505, %v3451
        %v3523 = vsel %vm3511, %v3506, %v3453
        %v3524 = vsel %vm3511, %v3507, %v3455
        %v3525 = vsel %vm3511, %v3508, %v3457
        %v3526 = vsel %vm3511, %v3509, %v3459
        %v3527 = vsel %vm3511, %v3510, %v3461
        %v3528 = vld [vmem:[#allocation8] sm:$0xff]
        %v3529 = vld [vmem:[#allocation8 + $0x8] sm:$0xff]
        %v3530 = vld [vmem:[#allocation8 + $0x10] sm:$0xff]
        %v3531 = vld [vmem:[#allocation8 + $0x18] sm:$0xff]
        %v3532 = vld [vmem:[#allocation8 + $0x20] sm:$0xff]
        %v3533 = vld [vmem:[#allocation8 + $0x28] sm:$0xff]
        %v3534 = vld [vmem:[#allocation8 + $0x30] sm:$0xff]
        %v3535 = vld [vmem:[#allocation8 + $0x38] sm:$0xff]
        %v3536 = vld [vmem:[#allocation8 + $0x40] sm:$0xff]
        %v3537 = vld [vmem:[#allocation8 + $0x48] sm:$0xff]
        %v3538 = vld [vmem:[#allocation8 + $0x50] sm:$0xff]
        %v3539 = vld [vmem:[#allocation8 + $0x58] sm:$0xff]
        %v3540 = vld [vmem:[#allocation8 + $0x60] sm:$0xff]
        %v3541 = vld [vmem:[#allocation8 + $0x68] sm:$0xff]
        %v3542 = vld [vmem:[#allocation8 + $0x70] sm:$0xff]
        %v3543 = vld [vmem:[#allocation8 + $0x78] sm:$0xff]
        %v3544 = vld [vmem:[%s5] sm:$0x1]
        %v3546 = vlaneseq
        %v3547 = vshrl.u32 %v3546, 7
        %v3548 = vsub.s32 0, %v3547
        %v3549 = vrot.slane %v3544, %v3548
        %3551 = vmatprep.subr.mxu0 0.0
        %3552 = vmatpush1.msra.mxu0 %v3543
        %3553 = vmatprep.subr.mxu0 0.0
        %3554 = vmatpush1.msra.mxu0 %v3542
        %3555 = vmatprep.subr.mxu0 0.0
        %3556 = vmatpush1.msra.mxu0 %v3541
        %3557 = vmatprep.subr.mxu0 0.0
        %3558 = vmatpush1.msra.mxu0 %v3540
        %3559 = vmatprep.subr.mxu0 0.0
        %3560 = vmatpush1.msra.mxu0 %v3539
        %3561 = vmatprep.subr.mxu0 0.0
        %3562 = vmatpush1.msra.mxu0 %v3538
        %3563 = vmatprep.subr.mxu0 0.0
        %3564 = vmatpush1.msra.mxu0 %v3537
        %3565 = vmatprep.subr.mxu0 0.0
        %3566 = vmatpush1.msra.mxu0 %v3536
        %3567 = vmatprep.subr.mxu0 0.0
        %3568 = vmatpush1.msra.mxu0 %v3535
        %3569 = vmatprep.subr.mxu0 0.0
        %3570 = vmatpush1.msra.mxu0 %v3534
        %3571 = vmatprep.subr.mxu0 0.0
        %3572 = vmatpush1.msra.mxu0 %v3533
        %3573 = vmatprep.subr.mxu0 0.0
        %3574 = vmatpush1.msra.mxu0 %v3532
        %3575 = vmatprep.subr.mxu0 0.0
        %3576 = vmatpush1.msra.mxu0 %v3531
        %3577 = vmatprep.subr.mxu0 0.0
        %3578 = vmatpush1.msra.mxu0 %v3530
        %3579 = vmatprep.subr.mxu0 0.0
        %3580 = vmatpush1.msra.mxu0 %v3529
        %3581 = vmatprep.subr.mxu0 0.0
        %3582 = vmatpush1.msra.mxu0 %v3528
        %3583 = vmatprep.subr.mxu0 0.0
        %3584 = vmatpush2.msra.mxu0 0.0
        %3585 = vmatprep.subr.mxu0 0.0
        %3586 = vmatpush2.msra.mxu0 0.0
        %3587 = vmatprep.subr.mxu0 0.0
        %3588 = vmatpush2.msra.mxu0 0.0
        %3589 = vmatprep.subr.mxu0 0.0
        %3590 = vmatpush2.msra.mxu0 0.0
        %3591 = vmatprep.subr.mxu0 0.0
        %3592 = vmatpush2.msra.mxu0 0.0
        %3593 = vmatprep.subr.mxu0 0.0
        %3594 = vmatpush2.msra.mxu0 0.0
        %3595 = vmatprep.subr.mxu0 0.0
        %3596 = vmatpush2.msra.mxu0 0.0
        %3597 = vmatprep.subr.mxu0 0.0
        %3598 = vmatpush2.msra.mxu0 0.0
        %3599 = vmatprep.subr.mxu0 0.0
        %3600 = vmatpush2.msra.mxu0 0.0
        %3601 = vmatprep.subr.mxu0 0.0
        %3602 = vmatpush2.msra.mxu0 0.0
        %3603 = vmatprep.subr.mxu0 0.0
        %3604 = vmatpush2.msra.mxu0 0.0
        %3605 = vmatprep.subr.mxu0 0.0
        %3606 = vmatpush2.msra.mxu0 0.0
        %3607 = vmatprep.subr.mxu0 0.0
        %3608 = vmatpush2.msra.mxu0 0.0
        %3609 = vmatprep.subr.mxu0 0.0
        %3610 = vmatpush2.msra.mxu0 0.0
        %3611 = vmatprep.subr.mxu0 0.0
        %3612 = vmatpush2.msra.mxu0 0.0
        %3613 = vmatprep.subr.mxu0 0.0
        %3614 = vmatpush2.msra.mxu0 0.0
        %3615 = vmatprep.mubr.f32.mxu0 0.0
        %3616 = vmatmul.mubr.f32.gmra.mxu0 %v3512
        %v3617 = vpop.f32.mrf.mxu0
        %v3618 = vadd.f32 %v3549, %v3617
        %v3619 = vpop.f32.mrf.mxu0
        %3620 = vmatprep.mubr.f32.mxu0 0.0
        %3621 = vmatmul.mubr.f32.gmra.mxu0 %v3513
        %v3622 = vpop.f32.mrf.mxu0
        %v3623 = vadd.f32 %v3549, %v3622
        %v3624 = vpop.f32.mrf.mxu0
        %3625 = vmatprep.mubr.f32.mxu0 0.0
        %3626 = vmatmul.mubr.f32.gmra.mxu0 %v3514
        %v3627 = vpop.f32.mrf.mxu0
        %v3628 = vadd.f32 %v3549, %v3627
        %v3629 = vpop.f32.mrf.mxu0
        %3630 = vmatprep.mubr.f32.mxu0 0.0
        %3631 = vmatmul.mubr.f32.gmra.mxu0 %v3515
        %v3632 = vpop.f32.mrf.mxu0
        %v3633 = vadd.f32 %v3549, %v3632
        %v3634 = vpop.f32.mrf.mxu0
        %3635 = vmatprep.mubr.f32.mxu0 0.0
        %3636 = vmatmul.mubr.f32.gmra.mxu0 %v3516
        %v3637 = vpop.f32.mrf.mxu0
        %v3638 = vadd.f32 %v3549, %v3637
        %v3639 = vpop.f32.mrf.mxu0
        %3640 = vmatprep.mubr.f32.mxu0 0.0
        %3641 = vmatmul.mubr.f32.gmra.mxu0 %v3517
        %v3642 = vpop.f32.mrf.mxu0
        %v3643 = vadd.f32 %v3549, %v3642
        %v3644 = vpop.f32.mrf.mxu0
        %3645 = vmatprep.mubr.f32.mxu0 0.0
        %3646 = vmatmul.mubr.f32.gmra.mxu0 %v3518
        %v3647 = vpop.f32.mrf.mxu0
        %v3648 = vadd.f32 %v3549, %v3647
        %v3649 = vpop.f32.mrf.mxu0
        %3650 = vmatprep.mubr.f32.mxu0 0.0
        %3651 = vmatmul.mubr.f32.gmra.mxu0 %v3519
        %v3652 = vpop.f32.mrf.mxu0
        %v3653 = vadd.f32 %v3549, %v3652
        %v3654 = vpop.f32.mrf.mxu0
        %3655 = vmatprep.mubr.f32.mxu0 0.0
        %3656 = vmatmul.mubr.f32.gmra.mxu0 %v3520
        %v3657 = vpop.f32.mrf.mxu0
        %v3658 = vadd.f32 %v3549, %v3657
        %v3659 = vpop.f32.mrf.mxu0
        %3660 = vmatprep.mubr.f32.mxu0 0.0
        %3661 = vmatmul.mubr.f32.gmra.mxu0 %v3521
        %v3662 = vpop.f32.mrf.mxu0
        %v3663 = vadd.f32 %v3549, %v3662
        %v3664 = vpop.f32.mrf.mxu0
        %3665 = vmatprep.mubr.f32.mxu0 0.0
        %3666 = vmatmul.mubr.f32.gmra.mxu0 %v3522
        %v3667 = vpop.f32.mrf.mxu0
        %v3668 = vadd.f32 %v3549, %v3667
        %v3669 = vpop.f32.mrf.mxu0
        %3670 = vmatprep.mubr.f32.mxu0 0.0
        %3671 = vmatmul.mubr.f32.gmra.mxu0 %v3523
        %v3672 = vpop.f32.mrf.mxu0
        %v3673 = vadd.f32 %v3549, %v3672
        %v3674 = vpop.f32.mrf.mxu0
        %3675 = vmatprep.mubr.f32.mxu0 0.0
        %3676 = vmatmul.mubr.f32.gmra.mxu0 %v3524
        %v3677 = vpop.f32.mrf.mxu0
        %v3678 = vadd.f32 %v3549, %v3677
        %v3679 = vpop.f32.mrf.mxu0
        %3680 = vmatprep.mubr.f32.mxu0 0.0
        %3681 = vmatmul.mubr.f32.gmra.mxu0 %v3525
        %v3682 = vpop.f32.mrf.mxu0
        %v3683 = vadd.f32 %v3549, %v3682
        %v3684 = vpop.f32.mrf.mxu0
        %3685 = vmatprep.mubr.f32.mxu0 0.0
        %3686 = vmatmul.mubr.f32.gmra.mxu0 %v3526
        %v3687 = vpop.f32.mrf.mxu0
        %v3688 = vadd.f32 %v3549, %v3687
        %v3689 = vpop.f32.mrf.mxu0
        %3690 = vmatprep.mubr.f32.mxu0 0.0
        %3691 = vmatmul.mubr.f32.gmra.mxu0 %v3527
        %v3692 = vpop.f32.mrf.mxu0
        %v3693 = vadd.f32 %v3549, %v3692
        %v3694 = vpop.f32.mrf.mxu0
        %3695 = vdwg.mxu0
        %v3696 = vadd.f32 %v3618, %v387
        %v3697 = vadd.f32 %v3623, %v388
        %v3698 = vadd.f32 %v3628, %v389
        %v3699 = vadd.f32 %v3633, %v390
        %v3700 = vadd.f32 %v3638, %v391
        %v3701 = vadd.f32 %v3643, %v392
        %v3702 = vadd.f32 %v3648, %v393
        %v3703 = vadd.f32 %v3653, %v394
        %v3704 = vadd.f32 %v3658, %v395
        %v3705 = vadd.f32 %v3663, %v396
        %v3706 = vadd.f32 %v3668, %v397
        %v3707 = vadd.f32 %v3673, %v398
        %v3708 = vadd.f32 %v3678, %v399
        %v3709 = vadd.f32 %v3683, %v400
        %v3710 = vadd.f32 %v3688, %v401
        %v3711 = vadd.f32 %v3693, %v402
        %3712 = vadd.xlane.f32.xlu0 %v3696
        %v3713 = vpop.xlane.xlu0 %3712
        %3714 = vadd.xlane.f32.xlu0 %v3697
        %v3715 = vpop.xlane.xlu0 %3714
        %3716 = vadd.xlane.f32.xlu0 %v3698
        %v3717 = vpop.xlane.xlu0 %3716
        %3718 = vadd.xlane.f32.xlu0 %v3699
        %v3719 = vpop.xlane.xlu0 %3718
        %3720 = vadd.xlane.f32.xlu0 %v3700
        %v3721 = vpop.xlane.xlu0 %3720
        %3722 = vadd.xlane.f32.xlu0 %v3701
        %v3723 = vpop.xlane.xlu0 %3722
        %3724 = vadd.xlane.f32.xlu0 %v3702
        %v3725 = vpop.xlane.xlu0 %3724
        %3726 = vadd.xlane.f32.xlu0 %v3703
        %v3727 = vpop.xlane.xlu0 %3726
        %3728 = vadd.xlane.f32.xlu0 %v3704
        %v3729 = vpop.xlane.xlu0 %3728
        %3730 = vadd.xlane.f32.xlu0 %v3705
        %v3731 = vpop.xlane.xlu0 %3730
        %3732 = vadd.xlane.f32.xlu0 %v3706
        %v3733 = vpop.xlane.xlu0 %3732
        %3734 = vadd.xlane.f32.xlu0 %v3707
        %v3735 = vpop.xlane.xlu0 %3734
        %3736 = vadd.xlane.f32.xlu0 %v3708
        %v3737 = vpop.xlane.xlu0 %3736
        %3738 = vadd.xlane.f32.xlu0 %v3709
        %v3739 = vpop.xlane.xlu0 %3738
        %3740 = vadd.xlane.f32.xlu0 %v3710
        %v3741 = vpop.xlane.xlu0 %3740
        %3742 = vadd.xlane.f32.xlu0 %v3711
        %v3743 = vpop.xlane.xlu0 %3742
        %v3744 = vrcp.pop 128.0
        %v3745 = vmul.f32 %v3713, %v3744
        %v3746 = vmul.f32 %v3715, %v3744
        %v3747 = vmul.f32 %v3717, %v3744
        %v3748 = vmul.f32 %v3719, %v3744
        %v3749 = vmul.f32 %v3721, %v3744
        %v3750 = vmul.f32 %v3723, %v3744
        %v3751 = vmul.f32 %v3725, %v3744
        %v3752 = vmul.f32 %v3727, %v3744
        %v3753 = vmul.f32 %v3729, %v3744
        %v3754 = vmul.f32 %v3731, %v3744
        %v3755 = vmul.f32 %v3733, %v3744
        %v3756 = vmul.f32 %v3735, %v3744
        %v3757 = vmul.f32 %v3737, %v3744
        %v3758 = vmul.f32 %v3739, %v3744
        %v3759 = vmul.f32 %v3741, %v3744
        %v3760 = vmul.f32 %v3743, %v3744
        %v3761 = vsub.f32 %v3696, %v3745
        %v3762 = vsub.f32 %v3697, %v3746
        %v3763 = vsub.f32 %v3698, %v3747
        %v3764 = vsub.f32 %v3699, %v3748
        %v3765 = vsub.f32 %v3700, %v3749
        %v3766 = vsub.f32 %v3701, %v3750
        %v3767 = vsub.f32 %v3702, %v3751
        %v3768 = vsub.f32 %v3703, %v3752
        %v3769 = vsub.f32 %v3704, %v3753
        %v3770 = vsub.f32 %v3705, %v3754
        %v3771 = vsub.f32 %v3706, %v3755
        %v3772 = vsub.f32 %v3707, %v3756
        %v3773 = vsub.f32 %v3708, %v3757
        %v3774 = vsub.f32 %v3709, %v3758
        %v3775 = vsub.f32 %v3710, %v3759
        %v3776 = vsub.f32 %v3711, %v3760
        %v3777 = vmul.f32 %v3761, %v3761
        %v3778 = vmul.f32 %v3762, %v3762
        %v3779 = vmul.f32 %v3763, %v3763
        %v3780 = vmul.f32 %v3764, %v3764
        %v3781 = vmul.f32 %v3765, %v3765
        %v3782 = vmul.f32 %v3766, %v3766
        %v3783 = vmul.f32 %v3767, %v3767
        %v3784 = vmul.f32 %v3768, %v3768
        %v3785 = vmul.f32 %v3769, %v3769
        %v3786 = vmul.f32 %v3770, %v3770
        %v3787 = vmul.f32 %v3771, %v3771
        %v3788 = vmul.f32 %v3772, %v3772
        %v3789 = vmul.f32 %v3773, %v3773
        %v3790 = vmul.f32 %v3774, %v3774
        %v3791 = vmul.f32 %v3775, %v3775
        %v3792 = vmul.f32 %v3776, %v3776
        %3793 = vadd.xlane.f32.xlu0 %v3777
        %v3794 = vpop.xlane.xlu0 %3793
        %3795 = vadd.xlane.f32.xlu0 %v3778
        %v3796 = vpop.xlane.xlu0 %3795
        %3797 = vadd.xlane.f32.xlu0 %v3779
        %v3798 = vpop.xlane.xlu0 %3797
        %3799 = vadd.xlane.f32.xlu0 %v3780
        %v3800 = vpop.xlane.xlu0 %3799
        %3801 = vadd.xlane.f32.xlu0 %v3781
        %v3802 = vpop.xlane.xlu0 %3801
        %3803 = vadd.xlane.f32.xlu0 %v3782
        %v3804 = vpop.xlane.xlu0 %3803
        %3805 = vadd.xlane.f32.xlu0 %v3783
        %v3806 = vpop.xlane.xlu0 %3805
        %3807 = vadd.xlane.f32.xlu0 %v3784
        %v3808 = vpop.xlane.xlu0 %3807
        %3809 = vadd.xlane.f32.xlu0 %v3785
        %v3810 = vpop.xlane.xlu0 %3809
        %3811 = vadd.xlane.f32.xlu0 %v3786
        %v3812 = vpop.xlane.xlu0 %3811
        %3813 = vadd.xlane.f32.xlu0 %v3787
        %v3814 = vpop.xlane.xlu0 %3813
        %3815 = vadd.xlane.f32.xlu0 %v3788
        %v3816 = vpop.xlane.xlu0 %3815
        %3817 = vadd.xlane.f32.xlu0 %v3789
        %v3818 = vpop.xlane.xlu0 %3817
        %3819 = vadd.xlane.f32.xlu0 %v3790
        %v3820 = vpop.xlane.xlu0 %3819
        %3821 = vadd.xlane.f32.xlu0 %v3791
        %v3822 = vpop.xlane.xlu0 %3821
        %3823 = vadd.xlane.f32.xlu0 %v3792
        %v3824 = vpop.xlane.xlu0 %3823
        %v3825 = vmul.f32 %v3794, %v3744
        %v3826 = vmul.f32 %v3796, %v3744
        %v3827 = vmul.f32 %v3798, %v3744
        %v3828 = vmul.f32 %v3800, %v3744
        %v3829 = vmul.f32 %v3802, %v3744
        %v3830 = vmul.f32 %v3804, %v3744
        %v3831 = vmul.f32 %v3806, %v3744
        %v3832 = vmul.f32 %v3808, %v3744
        %v3833 = vmul.f32 %v3810, %v3744
        %v3834 = vmul.f32 %v3812, %v3744
        %v3835 = vmul.f32 %v3814, %v3744
        %v3836 = vmul.f32 %v3816, %v3744
        %v3837 = vmul.f32 %v3818, %v3744
        %v3838 = vmul.f32 %v3820, %v3744
        %v3839 = vmul.f32 %v3822, %v3744
        %v3840 = vmul.f32 %v3824, %v3744
        %v3841 = vadd.f32 %v3825, 1e-12
        %v3842 = vadd.f32 %v3826, 1e-12
        %v3843 = vadd.f32 %v3827, 1e-12
        %v3844 = vadd.f32 %v3828, 1e-12
        %v3845 = vadd.f32 %v3829, 1e-12
        %v3846 = vadd.f32 %v3830, 1e-12
        %v3847 = vadd.f32 %v3831, 1e-12
        %v3848 = vadd.f32 %v3832, 1e-12
        %v3849 = vadd.f32 %v3833, 1e-12
        %v3850 = vadd.f32 %v3834, 1e-12
        %v3851 = vadd.f32 %v3835, 1e-12
        %v3852 = vadd.f32 %v3836, 1e-12
        %v3853 = vadd.f32 %v3837, 1e-12
        %v3854 = vadd.f32 %v3838, 1e-12
        %v3855 = vadd.f32 %v3839, 1e-12
        %v3856 = vadd.f32 %v3840, 1e-12
        %v3857 = vrsqrt.pop %v3841
        %v3858 = vrsqrt.pop %v3842
        %v3859 = vrsqrt.pop %v3843
        %v3860 = vrsqrt.pop %v3844
        %v3861 = vrsqrt.pop %v3845
        %v3862 = vrsqrt.pop %v3846
        %v3863 = vrsqrt.pop %v3847
        %v3864 = vrsqrt.pop %v3848
        %v3865 = vrsqrt.pop %v3849
        %v3866 = vrsqrt.pop %v3850
        %v3867 = vrsqrt.pop %v3851
        %v3868 = vrsqrt.pop %v3852
        %v3869 = vrsqrt.pop %v3853
        %v3870 = vrsqrt.pop %v3854
        %v3871 = vrsqrt.pop %v3855
        %v3872 = vrsqrt.pop %v3856
        %v3873 = vmul.f32 %v3761, %v3857
        %v3874 = vmul.f32 %v3762, %v3858
        %v3875 = vmul.f32 %v3763, %v3859
        %v3876 = vmul.f32 %v3764, %v3860
        %v3877 = vmul.f32 %v3765, %v3861
        %v3878 = vmul.f32 %v3766, %v3862
        %v3879 = vmul.f32 %v3767, %v3863
        %v3880 = vmul.f32 %v3768, %v3864
        %v3881 = vmul.f32 %v3769, %v3865
        %v3882 = vmul.f32 %v3770, %v3866
        %v3883 = vmul.f32 %v3771, %v3867
        %v3884 = vmul.f32 %v3772, %v3868
        %v3885 = vmul.f32 %v3773, %v3869
        %v3886 = vmul.f32 %v3774, %v3870
        %v3887 = vmul.f32 %v3775, %v3871
        %v3888 = vmul.f32 %v3776, %v3872
        %v3889 = vld [vmem:[%s6] sm:$0x1]
        %v3891 = vlaneseq
        %v3892 = vshrl.u32 %v3891, 7
        %v3893 = vsub.s32 0, %v3892
        %v3894 = vrot.slane %v3889, %v3893
        %v3896 = vmul.f32 %v3873, %v3894
        %v3897 = vmul.f32 %v3874, %v3894
        %v3898 = vmul.f32 %v3875, %v3894
        %v3899 = vmul.f32 %v3876, %v3894
        %v3900 = vmul.f32 %v3877, %v3894
        %v3901 = vmul.f32 %v3878, %v3894
        %v3902 = vmul.f32 %v3879, %v3894
        %v3903 = vmul.f32 %v3880, %v3894
        %v3904 = vmul.f32 %v3881, %v3894
        %v3905 = vmul.f32 %v3882, %v3894
        %v3906 = vmul.f32 %v3883, %v3894
        %v3907 = vmul.f32 %v3884, %v3894
        %v3908 = vmul.f32 %v3885, %v3894
        %v3909 = vmul.f32 %v3886, %v3894
        %v3910 = vmul.f32 %v3887, %v3894
        %v3911 = vmul.f32 %v3888, %v3894
        %v3912 = vld [vmem:[%s7] sm:$0x1]
        %v3914 = vlaneseq
        %v3915 = vshrl.u32 %v3914, 7
        %v3916 = vsub.s32 0, %v3915
        %v3917 = vrot.slane %v3912, %v3916
        %v3919 = vadd.f32 %v3896, %v3917
        %v3920 = vadd.f32 %v3897, %v3917
        %v3921 = vadd.f32 %v3898, %v3917
        %v3922 = vadd.f32 %v3899, %v3917
        %v3923 = vadd.f32 %v3900, %v3917
        %v3924 = vadd.f32 %v3901, %v3917
        %v3925 = vadd.f32 %v3902, %v3917
        %v3926 = vadd.f32 %v3903, %v3917
        %v3927 = vadd.f32 %v3904, %v3917
        %v3928 = vadd.f32 %v3905, %v3917
        %v3929 = vadd.f32 %v3906, %v3917
        %v3930 = vadd.f32 %v3907, %v3917
        %v3931 = vadd.f32 %v3908, %v3917
        %v3932 = vadd.f32 %v3909, %v3917
        %v3933 = vadd.f32 %v3910, %v3917
        %v3934 = vadd.f32 %v3911, %v3917
        %3935 = vst [vmem:[%s386] sm:$0xff] %v3919
        %3936 = vst [vmem:[%s386 + $0x8] sm:$0xff] %v3920
        %3937 = vst [vmem:[%s386 + $0x10] sm:$0xff] %v3921
        %3938 = vst [vmem:[%s386 + $0x18] sm:$0xff] %v3922
        %3939 = vst [vmem:[%s386 + $0x20] sm:$0xff] %v3923
        %3940 = vst [vmem:[%s386 + $0x28] sm:$0xff] %v3924
        %3941 = vst [vmem:[%s386 + $0x30] sm:$0xff] %v3925
        %3942 = vst [vmem:[%s386 + $0x38] sm:$0xff] %v3926
        %3943 = vst [vmem:[%s386 + $0x40] sm:$0xff] %v3927
        %3944 = vst [vmem:[%s386 + $0x48] sm:$0xff] %v3928
        %3945 = vst [vmem:[%s386 + $0x50] sm:$0xff] %v3929
        %3946 = vst [vmem:[%s386 + $0x58] sm:$0xff] %v3930
        %3947 = vst [vmem:[%s386 + $0x60] sm:$0xff] %v3931
        %3948 = vst [vmem:[%s386 + $0x68] sm:$0xff] %v3932
        %3949 = vst [vmem:[%s386 + $0x70] sm:$0xff] %v3933
        %3950 = vst [vmem:[%s386 + $0x78] sm:$0xff] %v3934
        %s3951 = sand.u32 %s215, 1
        %s3952 = scalar_lea.sflag [#allocation4], %s3951
        %s3953 = sand.u32 %s215, 1
        %s3954 = smul.addr %s3953, 128
        %s3955 = scalar_lea.vmem [#allocation10], %s3954
        // Predicated region
        $region69: #{tpu_custom_call.1} parent=51 // pred_check
          %p3956 = pneg %p225
        $region70: #{tpu_custom_call.1} parent=51 // pred_check_branch
          %3958 = sbr.rel (%p3956) target = $region72
        $region71: #{tpu_custom_call.1} parent=51 // pred_region
          %s3960 = ssub.s32 2048, 2048
          %3961 = vsyncadd %s3952, %s3960
          %s3962 = smul.addr %s29, 16
          %s3963 = smul.addr %s3962, 128
          %s3964 = scalar_lea.hbm %s8, %s3963
          %s3965 = sshll.u32 %s3955, 4
          %s3966 = int_to_ptr.vmem [resolvable:$true] %s3965
          %3971 = dma.vmem_to_hbm [thread:$0]  %s3966, 2048, %s3964, %s3952, 128, 128, 8
        $region72: #{tpu_custom_call.1} parent=51 // pred_fallthru
          _
      $region52: #{tpu_custom_call.1} parent=5 // pred_fallthru
        _
      %p3972 = scmp.le.s32.totalorder 2, %s24
      // Predicated region
      $region73: #{tpu_custom_call.1} parent=5 // pred_check
        %p3973 = pneg %p3972
      $region74: #{tpu_custom_call.1} parent=5 // pred_check_branch
        %3975 = sbr.rel (%p3973) target = $region76
      $region75: #{tpu_custom_call.1} parent=5 // pred_region
        %s3976 = ssub.s32 %s24, 2
        // Predicated region
        $region77: #{tpu_custom_call.1} parent=75 // pred_check
          %p3977 = pneg %p231
        $region78: #{tpu_custom_call.1} parent=75 // pred_check_branch
          %3979 = sbr.rel (%p3977) target = $region80
        $region79: #{tpu_custom_call.1} parent=75 // pred_region
          %s3980 = sand.u32 %s216, 1
          %s3981 = scalar_lea.sflag [#allocation4], %s3980
          %s3982 = sand.u32 %s216, 1
          %s3983 = smul.addr %s3982, 128
          %s3984 = scalar_lea.vmem [#allocation10], %s3983
          %3985 = dma.done %s3981, 2048
        $region80: #{tpu_custom_call.1} parent=75 // pred_fallthru
          _
      $region76: #{tpu_custom_call.1} parent=5 // pred_fallthru
        _
    $region6: #{tpu_custom_call.1} parent=1 // loop_footer
      %s28 = sadd.s32 1, %s24
    $region7: #{tpu_custom_call.1} parent=1 // loop_footer_branch
      %23 = sbr.rel target = $region3
    $region8: #{tpu_custom_call.1} parent=1 // loop_exit
      _
    %3986 = vsyncpa [#allocation3], 1
    %s3987 = scalar_lea.sflag [#allocation3], 1
    %3988 = vsyncpa %s3987, 1
    %3989 = vsyncpa [#allocation6], 1
    %s3990 = scalar_lea.sflag [#allocation6], 1
    %3991 = vsyncpa %s3990, 1
    %3992 = vsyncpa [#allocation9], 1
    %3993 = vsyncpa [#allocation4], 1
    %s3994 = scalar_lea.sflag [#allocation4], 1
    %3995 = vsyncpa %s3994, 1

</llo_original>
